<compile_context>
chip_gen: v5e
topology: v5e:2x2
jax: 0.10.0
libtpu: 0.0.40
codegen_flags: <defaults>
</compile_context>

<pallas_src>
import functools

import jax
import jax.numpy as jnp
from jax.experimental import pallas as pl
from jax.experimental.pallas import tpu as pltpu

IN_FEATURES = 28 * 28          # 784
K_PAD = 896                    # 7 * 128, lane-aligned contraction dim for layer 1
H1, H2, H3 = 1024, 512, 256


def _leaky_relu(v, slope=0.2):
    return jnp.where(v > 0, v, slope * v)


def _round_up(n, m):
    return ((n + m - 1) // m) * m


def discriminator_kernel(x_ref,
                         w1_ref, b1_ref,
                         w2_ref, b2_ref,
                         w3_ref, b3_ref,
                         w4_ref, b4_ref,
                         out_ref):
    # x tile: (TB, 896) bf16. Matmuls run bf16 x bf16 -> f32 on the MXU; all
    # bias/activation math stays in f32 (v5e VPU/EUP have no native bf16 path).
    x = x_ref[...]

    h1 = jnp.dot(x, w1_ref[...], preferred_element_type=jnp.float32)      # (TB, 1024) f32
    h1 = _leaky_relu(h1 + b1_ref[...])

    h2 = jnp.dot(h1.astype(jnp.bfloat16), w2_ref[...],
                 preferred_element_type=jnp.float32)                       # (TB, 512) f32
    h2 = _leaky_relu(h2 + b2_ref[...])

    h3 = jnp.dot(h2.astype(jnp.bfloat16), w3_ref[...],
                 preferred_element_type=jnp.float32)                       # (TB, 256) f32
    h3 = _leaky_relu(h3 + b3_ref[...])

    # Final 256 -> 1 layer: N=1 matmul would waste the MXU and produce masked stores,
    # so do it as a VPU multiply + lane reduction (w4 is passed as a (1, 256) row).
    logits = jnp.sum(h3 * w4_ref[...], axis=-1, keepdims=True) + b4_ref[...]  # (TB, 1)

    out_ref[...] = jax.nn.sigmoid(logits)


def make_discriminator_params(key):
    """Deterministic parameter init mimicking PyTorch nn.Linear defaults:
    U(-1/sqrt(fan_in), 1/sqrt(fan_in)) for both W and b. Stored as (in, out) f32."""
    dims = [(IN_FEATURES, H1), (H1, H2), (H2, H3), (H3, 1)]
    params = []
    for (fan_in, fan_out) in dims:
        key, kw, kb = jax.random.split(key, 3)
        bound = 1.0 / jnp.sqrt(jnp.float32(fan_in))
        w = jax.random.uniform(kw, (fan_in, fan_out), jnp.float32, -bound, bound)
        b = jax.random.uniform(kb, (1, fan_out), jnp.float32, -bound, bound)
        params.append((w, b))
    return params


def discriminator_forward(x, params):
    """x: (B, 1, 28, 28) or (B, 784) float32. Returns (B, 1) float32 in (0, 1)."""
    x2d = x.reshape(-1, IN_FEATURES).astype(jnp.float32)
    B = x2d.shape[0]

    (w1, b1), (w2, b2), (w3, b3), (w4, b4) = params

    # --- trace-time parameter prep (done once per compile) -----------------
    # Pad the contraction dim of layer 1 to a multiple of 128 (zeros in x and in
    # the extra w1 rows -> numerically identical).
    x_p = jnp.pad(x2d, ((0, 0), (0, K_PAD - IN_FEATURES))).astype(jnp.bfloat16)
    w1p = jnp.pad(w1, ((0, K_PAD - IN_FEATURES), (0, 0))).astype(jnp.bfloat16)
    w2b = w2.astype(jnp.bfloat16)
    w3b = w3.astype(jnp.bfloat16)
    w4row = w4.reshape(1, H3).astype(jnp.float32)   # used on the VPU, keep f32
    b1f = b1.astype(jnp.float32)
    b2f = b2.astype(jnp.float32)
    b3f = b3.astype(jnp.float32)
    b4f = b4.reshape(1, 1).astype(jnp.float32)

    # --- batch tiling -------------------------------------------------------
    TB = min(256, _round_up(B, 8))          # batch tile (sublane-aligned)
    B_pad = _round_up(B, TB)
    if B_pad != B:
        x_p = jnp.pad(x_p, ((0, B_pad - B), (0, 0)))
    grid = (B_pad // TB,)

    # x / out tiles move with the batch grid index; weights & biases stay resident
    # (constant block index across the grid).
    x_spec = pl.BlockSpec((TB, K_PAD), lambda i: (i, 0))
    out_spec = pl.BlockSpec((TB, 1), lambda i: (i, 0))

    def const_spec(shape):
        return pl.BlockSpec(shape, lambda i: (0, 0))

    param_arrays = (w1p, b1f, w2b, b2f, w3b, b3f, w4row, b4f)
    in_specs = [x_spec] + [const_spec(a.shape) for a in param_arrays]

    # --- cost estimate (per-call) -------------------------------------------
    flops = 2 * B_pad * (K_PAD * H1 + H1 * H2 + H2 * H3 + H3)
    param_bytes = sum(int(a.size) * a.dtype.itemsize for a in param_arrays)
    bytes_accessed = int(x_p.size) * 2 + param_bytes + B_pad * 1 * 4
    cost = pl.CostEstimate(flops=flops, transcendentals=B_pad,
                           bytes_accessed=bytes_accessed)

    out = pl.pallas_call(
        discriminator_kernel,
        out_shape=jax.ShapeDtypeStruct((B_pad, 1), jnp.float32),
        grid=grid,
        in_specs=in_specs,
        out_specs=out_spec,
        compiler_params=pltpu.CompilerParams(
            dimension_semantics=("parallel",),      # batch tiles are independent
            vmem_limit_bytes=48 << 20,              # headroom under v7x's 64 MiB
        ),
        cost_estimate=cost,
    )(x_p, *param_arrays)

    return out[:B]


def _reference_forward(x, params):
    """Pure-JAX f32 reference for correctness checking."""
    x2d = x.reshape(-1, IN_FEATURES).astype(jnp.float32)
    (w1, b1), (w2, b2), (w3, b3), (w4, b4) = params
    h = _leaky_relu(x2d @ w1 + b1)
    h = _leaky_relu(h @ w2 + b2)
    h = _leaky_relu(h @ w3 + b3)
    return jax.nn.sigmoid(h @ w4 + b4)


if __name__ == "__main__":
    key = jax.random.PRNGKey(0)
    key_params, key_x = jax.random.split(key)

    params = make_discriminator_params(key_params)

    # Small batch of fake MNIST-shaped images, NCHW like the PyTorch module expects.
    B = 2
    x = jax.random.normal(key_x, (B, 1, 28, 28), jnp.float32)

    y = discriminator_forward(x, params)
    y = jax.block_until_ready(y)

    assert y.shape == (B, 1), y.shape
    assert jnp.all((y > 0.0) & (y < 1.0)), "sigmoid output out of range"

    # Loose tolerance: kernel matmuls run in bf16 (MXU-native) with f32 accumulation.
    y_ref = _reference_forward(x, params)
    assert jnp.allclose(y, y_ref, atol=5e-2), (y, y_ref)

    print("KERNEL_OK")
</pallas_src>

<mosaic_0001>
module attributes {stable_mosaic.version = 11 : i64} {
  func.func @discriminator_kernel(%arg0: i32, %arg1: memref<8x896xbf16, #tpu.memory_space<vmem>>, %arg2: memref<896x1024xbf16, #tpu.memory_space<vmem>>, %arg3: memref<1x1024xf32, #tpu.memory_space<vmem>>, %arg4: memref<1024x512xbf16, #tpu.memory_space<vmem>>, %arg5: memref<1x512xf32, #tpu.memory_space<vmem>>, %arg6: memref<512x256xbf16, #tpu.memory_space<vmem>>, %arg7: memref<1x256xf32, #tpu.memory_space<vmem>>, %arg8: memref<1x256xf32, #tpu.memory_space<vmem>>, %arg9: memref<1x1xf32, #tpu.memory_space<vmem>>, %arg10: memref<8x1xf32, #tpu.memory_space<vmem>>) attributes {dimension_semantics = [#tpu.dimension_semantics<parallel>], iteration_bounds = array<i64: 1>, scalar_prefetch = 0 : i64, scratch_operands = 0 : i64, tpu.core_type = #tpu.core_type<tc>, window_params = [{transform_indices = @transform_0, window_bounds = array<i64: 8, 896>}, {pipeline_mode = #tpu.pipeline_mode<synchronous>, transform_indices = @transform_1, window_bounds = array<i64: 896, 1024>}, {pipeline_mode = #tpu.pipeline_mode<synchronous>, transform_indices = @transform_2, window_bounds = array<i64: 1, 1024>}, {pipeline_mode = #tpu.pipeline_mode<synchronous>, transform_indices = @transform_3, window_bounds = array<i64: 1024, 512>}, {pipeline_mode = #tpu.pipeline_mode<synchronous>, transform_indices = @transform_4, window_bounds = array<i64: 1, 512>}, {pipeline_mode = #tpu.pipeline_mode<synchronous>, transform_indices = @transform_5, window_bounds = array<i64: 512, 256>}, {pipeline_mode = #tpu.pipeline_mode<synchronous>, transform_indices = @transform_6, window_bounds = array<i64: 1, 256>}, {pipeline_mode = #tpu.pipeline_mode<synchronous>, transform_indices = @transform_7, window_bounds = array<i64: 1, 256>}, {pipeline_mode = #tpu.pipeline_mode<synchronous>, transform_indices = @transform_8, window_bounds = array<i64: 1, 1>}, {transform_indices = @transform_9, window_bounds = array<i64: 8, 1>}]} {
    %c0 = arith.constant 0 : index
    %c0_0 = arith.constant 0 : index
    %0 = vector.load %arg1[%c0, %c0_0] : memref<8x896xbf16, #tpu.memory_space<vmem>>, vector<8x896xbf16>
    %c0_1 = arith.constant 0 : index
    %c0_2 = arith.constant 0 : index
    %1 = vector.load %arg2[%c0_1, %c0_2] : memref<896x1024xbf16, #tpu.memory_space<vmem>>, vector<896x1024xbf16>
    %cst = arith.constant dense<0.000000e+00> : vector<8x1024xf32>
    %2 = tpu.matmul %0, %1, %cst {dimension_numbers = #tpu.dot_dimension_numbers<[1], [0], [0], [1], [0, 0, 1, 1], [], []>} : vector<8x896xbf16>, vector<896x1024xbf16>, vector<8x1024xf32> -> vector<8x1024xf32>
    %c0_3 = arith.constant 0 : index
    %c0_4 = arith.constant 0 : index
    %3 = vector.load %arg3[%c0_3, %c0_4] : memref<1x1024xf32, #tpu.memory_space<vmem>>, vector<1x1024xf32>
    %4 = vector.broadcast %3 : vector<1x1024xf32> to vector<8x1024xf32>
    %5 = arith.addf %2, %4 : vector<8x1024xf32>
    %cst_5 = arith.constant 0.000000e+00 : f32
    %6 = vector.broadcast %cst_5 : f32 to vector<8x1024xf32>
    %7 = arith.cmpf ogt, %5, %6 : vector<8x1024xf32>
    %cst_6 = arith.constant 2.000000e-01 : f32
    %8 = vector.broadcast %cst_6 : f32 to vector<8x1024xf32>
    %9 = arith.mulf %8, %5 : vector<8x1024xf32>
    %10 = arith.select %7, %5, %9 : vector<8x1024xi1>, vector<8x1024xf32>
    %11 = arith.truncf %10 : vector<8x1024xf32> to vector<8x1024xbf16>
    %c0_7 = arith.constant 0 : index
    %c0_8 = arith.constant 0 : index
    %12 = vector.load %arg4[%c0_7, %c0_8] : memref<1024x512xbf16, #tpu.memory_space<vmem>>, vector<1024x512xbf16>
    %cst_9 = arith.constant dense<0.000000e+00> : vector<8x512xf32>
    %13 = tpu.matmul %11, %12, %cst_9 {dimension_numbers = #tpu.dot_dimension_numbers<[1], [0], [0], [1], [0, 0, 1, 1], [], []>} : vector<8x1024xbf16>, vector<1024x512xbf16>, vector<8x512xf32> -> vector<8x512xf32>
    %c0_10 = arith.constant 0 : index
    %c0_11 = arith.constant 0 : index
    %14 = vector.load %arg5[%c0_10, %c0_11] : memref<1x512xf32, #tpu.memory_space<vmem>>, vector<1x512xf32>
    %15 = vector.broadcast %14 : vector<1x512xf32> to vector<8x512xf32>
    %16 = arith.addf %13, %15 : vector<8x512xf32>
    %cst_12 = arith.constant 0.000000e+00 : f32
    %17 = vector.broadcast %cst_12 : f32 to vector<8x512xf32>
    %18 = arith.cmpf ogt, %16, %17 : vector<8x512xf32>
    %cst_13 = arith.constant 2.000000e-01 : f32
    %19 = vector.broadcast %cst_13 : f32 to vector<8x512xf32>
    %20 = arith.mulf %19, %16 : vector<8x512xf32>
    %21 = arith.select %18, %16, %20 : vector<8x512xi1>, vector<8x512xf32>
    %22 = arith.truncf %21 : vector<8x512xf32> to vector<8x512xbf16>
    %c0_14 = arith.constant 0 : index
    %c0_15 = arith.constant 0 : index
    %23 = vector.load %arg6[%c0_14, %c0_15] : memref<512x256xbf16, #tpu.memory_space<vmem>>, vector<512x256xbf16>
    %cst_16 = arith.constant dense<0.000000e+00> : vector<8x256xf32>
    %24 = tpu.matmul %22, %23, %cst_16 {dimension_numbers = #tpu.dot_dimension_numbers<[1], [0], [0], [1], [0, 0, 1, 1], [], []>} : vector<8x512xbf16>, vector<512x256xbf16>, vector<8x256xf32> -> vector<8x256xf32>
    %c0_17 = arith.constant 0 : index
    %c0_18 = arith.constant 0 : index
    %25 = vector.load %arg7[%c0_17, %c0_18] : memref<1x256xf32, #tpu.memory_space<vmem>>, vector<1x256xf32>
    %26 = vector.broadcast %25 : vector<1x256xf32> to vector<8x256xf32>
    %27 = arith.addf %24, %26 : vector<8x256xf32>
    %cst_19 = arith.constant 0.000000e+00 : f32
    %28 = vector.broadcast %cst_19 : f32 to vector<8x256xf32>
    %29 = arith.cmpf ogt, %27, %28 : vector<8x256xf32>
    %cst_20 = arith.constant 2.000000e-01 : f32
    %30 = vector.broadcast %cst_20 : f32 to vector<8x256xf32>
    %31 = arith.mulf %30, %27 : vector<8x256xf32>
    %32 = arith.select %29, %27, %31 : vector<8x256xi1>, vector<8x256xf32>
    %c0_21 = arith.constant 0 : index
    %c0_22 = arith.constant 0 : index
    %33 = vector.load %arg8[%c0_21, %c0_22] : memref<1x256xf32, #tpu.memory_space<vmem>>, vector<1x256xf32>
    %34 = vector.broadcast %33 : vector<1x256xf32> to vector<8x256xf32>
    %35 = arith.mulf %32, %34 : vector<8x256xf32>
    %cst_23 = arith.constant dense<0.000000e+00> : vector<8xf32>
    %36 = vector.multi_reduction <add>, %35, %cst_23 [1] : vector<8x256xf32> to vector<8xf32>
    %37 = vector.shape_cast %36 : vector<8xf32> to vector<8x1xf32>
    %c0_24 = arith.constant 0 : index
    %c0_25 = arith.constant 0 : index
    %38 = vector.load %arg9[%c0_24, %c0_25] : memref<1x1xf32, #tpu.memory_space<vmem>>, vector<1x1xf32>
    %39 = vector.broadcast %38 : vector<1x1xf32> to vector<8x1xf32>
    %40 = arith.addf %37, %39 : vector<8x1xf32>
    %41 = arith.negf %40 : vector<8x1xf32>
    %42 = math.exp %41 : vector<8x1xf32>
    %cst_26 = arith.constant 1.000000e+00 : f32
    %43 = vector.broadcast %cst_26 : f32 to vector<8x1xf32>
    %44 = arith.addf %43, %42 : vector<8x1xf32>
    %45 = arith.divf %43, %44 : vector<8x1xf32>
    %c0_27 = arith.constant 0 : index
    %c0_28 = arith.constant 0 : index
    %46 = vector.load %arg10[%c0_27, %c0_28] : memref<8x1xf32, #tpu.memory_space<vmem>>, vector<8x1xf32>
    tpu.vector_store %arg10[%c0_27, %c0_28], %45 {strides = array<i32>} : memref<8x1xf32, #tpu.memory_space<vmem>>, vector<8x1xf32>,
    return
  }
  func.func @transform_0(%arg0: i32) -> (i32, i32) {
    %c0_i32 = arith.constant 0 : i32
    %c0_i32_0 = arith.constant 0 : i32
    return %arg0, %c0_i32 : i32, i32
  }
  func.func @transform_1(%arg0: i32) -> (i32, i32) {
    %c0_i32 = arith.constant 0 : i32
    %c0_i32_0 = arith.constant 0 : i32
    %c0_i32_1 = arith.constant 0 : i32
    return %c0_i32, %c0_i32_0 : i32, i32
  }
  func.func @transform_2(%arg0: i32) -> (i32, i32) {
    %c0_i32 = arith.constant 0 : i32
    %c0_i32_0 = arith.constant 0 : i32
    %c0_i32_1 = arith.constant 0 : i32
    return %c0_i32, %c0_i32_0 : i32, i32
  }
  func.func @transform_3(%arg0: i32) -> (i32, i32) {
    %c0_i32 = arith.constant 0 : i32
    %c0_i32_0 = arith.constant 0 : i32
    %c0_i32_1 = arith.constant 0 : i32
    return %c0_i32, %c0_i32_0 : i32, i32
  }
  func.func @transform_4(%arg0: i32) -> (i32, i32) {
    %c0_i32 = arith.constant 0 : i32
    %c0_i32_0 = arith.constant 0 : i32
    %c0_i32_1 = arith.constant 0 : i32
    return %c0_i32, %c0_i32_0 : i32, i32
  }
  func.func @transform_5(%arg0: i32) -> (i32, i32) {
    %c0_i32 = arith.constant 0 : i32
    %c0_i32_0 = arith.constant 0 : i32
    %c0_i32_1 = arith.constant 0 : i32
    return %c0_i32, %c0_i32_0 : i32, i32
  }
  func.func @transform_6(%arg0: i32) -> (i32, i32) {
    %c0_i32 = arith.constant 0 : i32
    %c0_i32_0 = arith.constant 0 : i32
    %c0_i32_1 = arith.constant 0 : i32
    return %c0_i32, %c0_i32_0 : i32, i32
  }
  func.func @transform_7(%arg0: i32) -> (i32, i32) {
    %c0_i32 = arith.constant 0 : i32
    %c0_i32_0 = arith.constant 0 : i32
    %c0_i32_1 = arith.constant 0 : i32
    return %c0_i32, %c0_i32_0 : i32, i32
  }
  func.func @transform_8(%arg0: i32) -> (i32, i32) {
    %c0_i32 = arith.constant 0 : i32
    %c0_i32_0 = arith.constant 0 : i32
    %c0_i32_1 = arith.constant 0 : i32
    return %c0_i32, %c0_i32_0 : i32, i32
  }
  func.func @transform_9(%arg0: i32) -> (i32, i32) {
    %c0_i32 = arith.constant 0 : i32
    %c0_i32_0 = arith.constant 0 : i32
    return %arg0, %c0_i32 : i32, i32
  }
}

</mosaic_0001>

<llo_original>
// kernel: tpu_custom_call.1
$region0: #{tpu_custom_call.1}
  #allocation0 [shape = 'u32[]', space=smem, size = 0x4, offset = 0x4, fixed_abs, tag = 'smem constant byte address 0x4 - core index']
  #allocation1 [shape = 'u32[72,128]{1,0:T(1,128)}', space=vmem, size = 0x9000, scoped, tag = 'internal scratch']
  #allocation2 [shape = 'f32[1,1]{1,0:T(1,128)S(1)}', space=vmem, size = 0x200, scoped, tag = 'scoped memory for tpu_custom_call.1']
  %s0 = inlined_call_operand.hbm [shape: bf16[8,896], index: 0, kind: input, shape index: {}]
  %s1 = inlined_call_operand.hbm [shape: bf16[896,1024], index: 1, kind: input, shape index: {}]
  %s2 = inlined_call_operand.hbm [shape: f32[1,1024], index: 2, kind: input, shape index: {}]
  %s3 = inlined_call_operand.hbm [shape: bf16[1024,512], index: 3, kind: input, shape index: {}]
  %s4 = inlined_call_operand.hbm [shape: f32[1,512], index: 4, kind: input, shape index: {}]
  %s5 = inlined_call_operand.hbm [shape: bf16[512,256], index: 5, kind: input, shape index: {}]
  %s6 = inlined_call_operand.hbm [shape: f32[1,256], index: 6, kind: input, shape index: {}]
  %s7 = inlined_call_operand.hbm [shape: f32[1,256], index: 7, kind: input, shape index: {}]
  %s8 = inlined_call_operand.<no memory space> [shape: f32[1,1], index: 8, kind: input, shape index: {}]
  %s9 = inlined_call_operand.vmem [shape: f32[8,1], index: 9, kind: output, shape index: {}]
  %s10 = sld [smem:[#allocation0]]
  $region78: #{tpu_custom_call.1} parent=0
    _
  %s12 = ssub.s32 1, %s10
  %s13 = scalar_select 0, %s12, %s10
  %v14 = vstv %s8
  %15 = vst [vmem:[#allocation2] sm:$0x1] %v14
  $region1: #{tpu_custom_call.1} parent=0
    #allocation3 [shape = 'u8[14336]{0}', space=vmem, size = 0x3800, scoped, tag = 'input window, operand 0, single buffered']
    #allocation4 [shape = 's32[1]{0}', space=sflag, size = 0x4, scoped, tag = 'scoped memory for tpu_custom_call.1']
    #allocation5 [shape = 'u8[1835008]{0}', space=vmem, size = 0x1c0000, scoped, tag = 'input window, operand 1, single buffered']
    #allocation6 [shape = 's32[1]{0}', space=sflag, size = 0x4, scoped, tag = 'scoped memory for tpu_custom_call.1']
    #allocation7 [shape = 'u8[4096]{0}', space=vmem, size = 0x1000, scoped, tag = 'input window, operand 2, single buffered']
    #allocation8 [shape = 'u8[1048576]{0}', space=vmem, size = 0x100000, scoped, tag = 'input window, operand 3, single buffered']
    #allocation9 [shape = 's32[1]{0}', space=sflag, size = 0x4, scoped, tag = 'scoped memory for tpu_custom_call.1']
    #allocation10 [shape = 'u8[2048]{0}', space=vmem, size = 0x800, scoped, tag = 'input window, operand 4, single buffered']
    #allocation11 [shape = 'u8[262144]{0}', space=vmem, size = 0x40000, scoped, tag = 'input window, operand 5, single buffered']
    #allocation12 [shape = 's32[1]{0}', space=sflag, size = 0x4, scoped, tag = 'scoped memory for tpu_custom_call.1']
    #allocation13 [shape = 'u8[1024]{0}', space=vmem, size = 0x400, scoped, tag = 'input window, operand 6, single buffered']
    #allocation14 [shape = 'u8[1024]{0}', space=vmem, size = 0x400, scoped, tag = 'input window, operand 7, single buffered']
    #allocation15 [shape = 's32[1]{0}', space=sflag, size = 0x4, scoped, tag = 'scoped memory for tpu_custom_call.1']
    %16 = vsyncpa [#allocation4], 0
    %17 = vsyncpa [#allocation6], 0
    %18 = vsyncpa [#allocation9], 0
    %19 = vsyncpa [#allocation12], 0
    %20 = vsyncpa [#allocation15], 0
    // Predicated region
    $region2: #{tpu_custom_call.1} parent=1 // pred_check
      _
    $region3: #{tpu_custom_call.1} parent=1 // pred_check_branch
      %22 = sbr.rel (0) target = $region5
    $region4: #{tpu_custom_call.1} parent=1 // pred_region
      %24 = vsyncadd [#allocation4], 0
      %s26 = sshll.u32 %s0, 4
      %s27 = int_to_ptr.hbm [resolvable:$true] %s26
      %s28 = sshll.u32 [#allocation3], 4
      %s29 = int_to_ptr.vmem [resolvable:$true] %s28
      %31 = dma.hbm_to_vmem [thread:$0]  %s27, 448, %s29, [#allocation4]
    $region5: #{tpu_custom_call.1} parent=1 // pred_fallthru
      _
    // Predicated region
    $region6: #{tpu_custom_call.1} parent=1 // pred_check
      _
    $region7: #{tpu_custom_call.1} parent=1 // pred_check_branch
      %33 = sbr.rel (0) target = $region9
    $region8: #{tpu_custom_call.1} parent=1 // pred_region
      %35 = vsyncadd [#allocation6], 0
      %s36 = sshll.u32 %s1, 4
      %s37 = int_to_ptr.hbm [resolvable:$true] %s36
      %s38 = sshll.u32 [#allocation5], 4
      %s39 = int_to_ptr.vmem [resolvable:$true] %s38
      %44 = dma.hbm_to_vmem [thread:$0]  %s37, 57344, %s39, [#allocation6], 512, 512, 32
    $region9: #{tpu_custom_call.1} parent=1 // pred_fallthru
      _
    // Predicated region
    $region10: #{tpu_custom_call.1} parent=1 // pred_check
      _
    $region11: #{tpu_custom_call.1} parent=1 // pred_check_branch
      %46 = sbr.rel (0) target = $region13
    $region12: #{tpu_custom_call.1} parent=1 // pred_region
      %48 = vsyncadd [#allocation6], 0
      %s50 = sshll.u32 %s2, 4
      %s51 = int_to_ptr.hbm [resolvable:$true] %s50
      %s52 = sshll.u32 [#allocation7], 4
      %s53 = int_to_ptr.vmem [resolvable:$true] %s52
      %55 = dma.hbm_to_vmem [thread:$0]  %s51, 128, %s53, [#allocation6]
    $region13: #{tpu_custom_call.1} parent=1 // pred_fallthru
      _
    // Predicated region
    $region14: #{tpu_custom_call.1} parent=1 // pred_check
      _
    $region15: #{tpu_custom_call.1} parent=1 // pred_check_branch
      %57 = sbr.rel (0) target = $region17
    $region16: #{tpu_custom_call.1} parent=1 // pred_region
      %59 = vsyncadd [#allocation9], 0
      %s60 = sshll.u32 %s3, 4
      %s61 = int_to_ptr.hbm [resolvable:$true] %s60
      %s62 = sshll.u32 [#allocation8], 4
      %s63 = int_to_ptr.vmem [resolvable:$true] %s62
      %68 = dma.hbm_to_vmem [thread:$0]  %s61, 32768, %s63, [#allocation9], 256, 256, 16
    $region17: #{tpu_custom_call.1} parent=1 // pred_fallthru
      _
    // Predicated region
    $region18: #{tpu_custom_call.1} parent=1 // pred_check
      _
    $region19: #{tpu_custom_call.1} parent=1 // pred_check_branch
      %70 = sbr.rel (0) target = $region21
    $region20: #{tpu_custom_call.1} parent=1 // pred_region
      %72 = vsyncadd [#allocation9], 0
      %s74 = sshll.u32 %s4, 4
      %s75 = int_to_ptr.hbm [resolvable:$true] %s74
      %s76 = sshll.u32 [#allocation10], 4
      %s77 = int_to_ptr.vmem [resolvable:$true] %s76
      %79 = dma.hbm_to_vmem [thread:$0]  %s75, 64, %s77, [#allocation9]
    $region21: #{tpu_custom_call.1} parent=1 // pred_fallthru
      _
    // Predicated region
    $region22: #{tpu_custom_call.1} parent=1 // pred_check
      _
    $region23: #{tpu_custom_call.1} parent=1 // pred_check_branch
      %81 = sbr.rel (0) target = $region25
    $region24: #{tpu_custom_call.1} parent=1 // pred_region
      %83 = vsyncadd [#allocation12], 0
      %s84 = sshll.u32 %s5, 4
      %s85 = int_to_ptr.hbm [resolvable:$true] %s84
      %s86 = sshll.u32 [#allocation11], 4
      %s87 = int_to_ptr.vmem [resolvable:$true] %s86
      %92 = dma.hbm_to_vmem [thread:$0]  %s85, 8192, %s87, [#allocation12], 128, 128, 8
    $region25: #{tpu_custom_call.1} parent=1 // pred_fallthru
      _
    // Predicated region
    $region26: #{tpu_custom_call.1} parent=1 // pred_check
      _
    $region27: #{tpu_custom_call.1} parent=1 // pred_check_branch
      %94 = sbr.rel (0) target = $region29
    $region28: #{tpu_custom_call.1} parent=1 // pred_region
      %96 = vsyncadd [#allocation12], 0
      %s98 = sshll.u32 %s6, 4
      %s99 = int_to_ptr.hbm [resolvable:$true] %s98
      %s100 = sshll.u32 [#allocation13], 4
      %s101 = int_to_ptr.vmem [resolvable:$true] %s100
      %103 = dma.hbm_to_vmem [thread:$0]  %s99, 32, %s101, [#allocation12]
    $region29: #{tpu_custom_call.1} parent=1 // pred_fallthru
      _
    // Predicated region
    $region30: #{tpu_custom_call.1} parent=1 // pred_check
      _
    $region31: #{tpu_custom_call.1} parent=1 // pred_check_branch
      %105 = sbr.rel (0) target = $region33
    $region32: #{tpu_custom_call.1} parent=1 // pred_region
      %107 = vsyncadd [#allocation15], 0
      %s109 = sshll.u32 %s7, 4
      %s110 = int_to_ptr.hbm [resolvable:$true] %s109
      %s111 = sshll.u32 [#allocation14], 4
      %s112 = int_to_ptr.vmem [resolvable:$true] %s111
      %114 = dma.hbm_to_vmem [thread:$0]  %s110, 32, %s112, [#allocation15]
    $region33: #{tpu_custom_call.1} parent=1 // pred_fallthru
      _
    // Predicated region
    $region34: #{tpu_custom_call.1} parent=1 // pred_check
      _
    $region35: #{tpu_custom_call.1} parent=1 // pred_check_branch
      %116 = sbr.rel (0) target = $region37
    $region36: #{tpu_custom_call.1} parent=1 // pred_region
      _
    $region37: #{tpu_custom_call.1} parent=1 // pred_fallthru
      _
    // Predicated region
    $region38: #{tpu_custom_call.1} parent=1 // pred_check
      _
    $region39: #{tpu_custom_call.1} parent=1 // pred_check_branch
      %118 = sbr.rel (0) target = $region41
    $region40: #{tpu_custom_call.1} parent=1 // pred_region
      %120 = dma.done [#allocation4], 448
    $region41: #{tpu_custom_call.1} parent=1 // pred_fallthru
      _
    // Predicated region
    $region42: #{tpu_custom_call.1} parent=1 // pred_check
      _
    $region43: #{tpu_custom_call.1} parent=1 // pred_check_branch
      %122 = sbr.rel (0) target = $region45
    $region44: #{tpu_custom_call.1} parent=1 // pred_region
      %124 = dma.done [#allocation6], 57344
    $region45: #{tpu_custom_call.1} parent=1 // pred_fallthru
      _
    // Predicated region
    $region46: #{tpu_custom_call.1} parent=1 // pred_check
      _
    $region47: #{tpu_custom_call.1} parent=1 // pred_check_branch
      %126 = sbr.rel (0) target = $region49
    $region48: #{tpu_custom_call.1} parent=1 // pred_region
      %128 = dma.done [#allocation6], 128
    $region49: #{tpu_custom_call.1} parent=1 // pred_fallthru
      _
    // Predicated region
    $region50: #{tpu_custom_call.1} parent=1 // pred_check
      _
    $region51: #{tpu_custom_call.1} parent=1 // pred_check_branch
      %130 = sbr.rel (0) target = $region53
    $region52: #{tpu_custom_call.1} parent=1 // pred_region
      %132 = dma.done [#allocation9], 32768
    $region53: #{tpu_custom_call.1} parent=1 // pred_fallthru
      _
    // Predicated region
    $region54: #{tpu_custom_call.1} parent=1 // pred_check
      _
    $region55: #{tpu_custom_call.1} parent=1 // pred_check_branch
      %134 = sbr.rel (0) target = $region57
    $region56: #{tpu_custom_call.1} parent=1 // pred_region
      %136 = dma.done [#allocation9], 64
    $region57: #{tpu_custom_call.1} parent=1 // pred_fallthru
      _
    // Predicated region
    $region58: #{tpu_custom_call.1} parent=1 // pred_check
      _
    $region59: #{tpu_custom_call.1} parent=1 // pred_check_branch
      %138 = sbr.rel (0) target = $region61
    $region60: #{tpu_custom_call.1} parent=1 // pred_region
      %140 = dma.done [#allocation12], 8192
    $region61: #{tpu_custom_call.1} parent=1 // pred_fallthru
      _
    // Predicated region
    $region62: #{tpu_custom_call.1} parent=1 // pred_check
      _
    $region63: #{tpu_custom_call.1} parent=1 // pred_check_branch
      %142 = sbr.rel (0) target = $region65
    $region64: #{tpu_custom_call.1} parent=1 // pred_region
      %144 = dma.done [#allocation12], 32
    $region65: #{tpu_custom_call.1} parent=1 // pred_fallthru
      _
    // Predicated region
    $region66: #{tpu_custom_call.1} parent=1 // pred_check
      _
    $region67: #{tpu_custom_call.1} parent=1 // pred_check_branch
      %146 = sbr.rel (0) target = $region69
    $region68: #{tpu_custom_call.1} parent=1 // pred_region
      %148 = dma.done [#allocation15], 32
    $region69: #{tpu_custom_call.1} parent=1 // pred_fallthru
      _
    %v149 = vld [vmem:[#allocation3] sm:$0xff]
    %v150 = vld [vmem:[#allocation3 + $0x8] sm:$0xff]
    %v151 = vld [vmem:[#allocation3 + $0x10] sm:$0xff]
    %v152 = vld [vmem:[#allocation3 + $0x18] sm:$0xf]
    %v153 = vld [vmem:[#allocation5] sm:$0xff]
    %v154 = vld [vmem:[#allocation5 + $0x8] sm:$0xff]
    %v155 = vld [vmem:[#allocation5 + $0x10] sm:$0xff]
    %v156 = vld [vmem:[#allocation5 + $0x18] sm:$0xff]
    %v157 = vld [vmem:[#allocation5 + $0x20] sm:$0xff]
    %v158 = vld [vmem:[#allocation5 + $0x28] sm:$0xff]
    %v159 = vld [vmem:[#allocation5 + $0x30] sm:$0xff]
    %v160 = vld [vmem:[#allocation5 + $0x38] sm:$0xff]
    %v161 = vld [vmem:[#allocation5 + $0x40] sm:$0xff]
    %v162 = vld [vmem:[#allocation5 + $0x48] sm:$0xff]
    %v163 = vld [vmem:[#allocation5 + $0x50] sm:$0xff]
    %v164 = vld [vmem:[#allocation5 + $0x58] sm:$0xff]
    %v165 = vld [vmem:[#allocation5 + $0x60] sm:$0xff]
    %v166 = vld [vmem:[#allocation5 + $0x68] sm:$0xff]
    %v167 = vld [vmem:[#allocation5 + $0x70] sm:$0xff]
    %v168 = vld [vmem:[#allocation5 + $0x78] sm:$0xff]
    %v169 = vld [vmem:[#allocation5 + $0x80] sm:$0xff]
    %v170 = vld [vmem:[#allocation5 + $0x88] sm:$0xff]
    %v171 = vld [vmem:[#allocation5 + $0x90] sm:$0xff]
    %v172 = vld [vmem:[#allocation5 + $0x98] sm:$0xff]
    %v173 = vld [vmem:[#allocation5 + $0xa0] sm:$0xff]
    %v174 = vld [vmem:[#allocation5 + $0xa8] sm:$0xff]
    %v175 = vld [vmem:[#allocation5 + $0xb0] sm:$0xff]
    %v176 = vld [vmem:[#allocation5 + $0xb8] sm:$0xff]
    %v177 = vld [vmem:[#allocation5 + $0xc0] sm:$0xff]
    %v178 = vld [vmem:[#allocation5 + $0xc8] sm:$0xff]
    %v179 = vld [vmem:[#allocation5 + $0xd0] sm:$0xff]
    %v180 = vld [vmem:[#allocation5 + $0xd8] sm:$0xff]
    %v181 = vld [vmem:[#allocation5 + $0xe0] sm:$0xff]
    %v182 = vld [vmem:[#allocation5 + $0xe8] sm:$0xff]
    %v183 = vld [vmem:[#allocation5 + $0xf0] sm:$0xff]
    %v184 = vld [vmem:[#allocation5 + $0xf8] sm:$0xff]
    %v185 = vld [vmem:[#allocation5 + $0x100] sm:$0xff]
    %v186 = vld [vmem:[#allocation5 + $0x108] sm:$0xff]
    %v187 = vld [vmem:[#allocation5 + $0x110] sm:$0xff]
    %v188 = vld [vmem:[#allocation5 + $0x118] sm:$0xff]
    %v189 = vld [vmem:[#allocation5 + $0x120] sm:$0xff]
    %v190 = vld [vmem:[#allocation5 + $0x128] sm:$0xff]
    %v191 = vld [vmem:[#allocation5 + $0x130] sm:$0xff]
    %v192 = vld [vmem:[#allocation5 + $0x138] sm:$0xff]
    %v193 = vld [vmem:[#allocation5 + $0x140] sm:$0xff]
    %v194 = vld [vmem:[#allocation5 + $0x148] sm:$0xff]
    %v195 = vld [vmem:[#allocation5 + $0x150] sm:$0xff]
    %v196 = vld [vmem:[#allocation5 + $0x158] sm:$0xff]
    %v197 = vld [vmem:[#allocation5 + $0x160] sm:$0xff]
    %v198 = vld [vmem:[#allocation5 + $0x168] sm:$0xff]
    %v199 = vld [vmem:[#allocation5 + $0x170] sm:$0xff]
    %v200 = vld [vmem:[#allocation5 + $0x178] sm:$0xff]
    %v201 = vld [vmem:[#allocation5 + $0x180] sm:$0xff]
    %v202 = vld [vmem:[#allocation5 + $0x188] sm:$0xff]
    %v203 = vld [vmem:[#allocation5 + $0x190] sm:$0xff]
    %v204 = vld [vmem:[#allocation5 + $0x198] sm:$0xff]
    %v205 = vld [vmem:[#allocation5 + $0x1a0] sm:$0xff]
    %v206 = vld [vmem:[#allocation5 + $0x1a8] sm:$0xff]
    %v207 = vld [vmem:[#allocation5 + $0x1b0] sm:$0xff]
    %v208 = vld [vmem:[#allocation5 + $0x1b8] sm:$0xff]
    %v209 = vld [vmem:[#allocation5 + $0x1c0] sm:$0xff]
    %v210 = vld [vmem:[#allocation5 + $0x1c8] sm:$0xff]
    %v211 = vld [vmem:[#allocation5 + $0x1d0] sm:$0xff]
    %v212 = vld [vmem:[#allocation5 + $0x1d8] sm:$0xff]
    %v213 = vld [vmem:[#allocation5 + $0x1e0] sm:$0xff]
    %v214 = vld [vmem:[#allocation5 + $0x1e8] sm:$0xff]
    %v215 = vld [vmem:[#allocation5 + $0x1f0] sm:$0xff]
    %v216 = vld [vmem:[#allocation5 + $0x1f8] sm:$0xff]
    %v217 = vld [vmem:[#allocation5 + $0x200] sm:$0xff]
    %v218 = vld [vmem:[#allocation5 + $0x208] sm:$0xff]
    %v219 = vld [vmem:[#allocation5 + $0x210] sm:$0xff]
    %v220 = vld [vmem:[#allocation5 + $0x218] sm:$0xff]
    %v221 = vld [vmem:[#allocation5 + $0x220] sm:$0xff]
    %v222 = vld [vmem:[#allocation5 + $0x228] sm:$0xff]
    %v223 = vld [vmem:[#allocation5 + $0x230] sm:$0xff]
    %v224 = vld [vmem:[#allocation5 + $0x238] sm:$0xff]
    %v225 = vld [vmem:[#allocation5 + $0x240] sm:$0xff]
    %v226 = vld [vmem:[#allocation5 + $0x248] sm:$0xff]
    %v227 = vld [vmem:[#allocation5 + $0x250] sm:$0xff]
    %v228 = vld [vmem:[#allocation5 + $0x258] sm:$0xff]
    %v229 = vld [vmem:[#allocation5 + $0x260] sm:$0xff]
    %v230 = vld [vmem:[#allocation5 + $0x268] sm:$0xff]
    %v231 = vld [vmem:[#allocation5 + $0x270] sm:$0xff]
    %v232 = vld [vmem:[#allocation5 + $0x278] sm:$0xff]
    %v233 = vld [vmem:[#allocation5 + $0x280] sm:$0xff]
    %v234 = vld [vmem:[#allocation5 + $0x288] sm:$0xff]
    %v235 = vld [vmem:[#allocation5 + $0x290] sm:$0xff]
    %v236 = vld [vmem:[#allocation5 + $0x298] sm:$0xff]
    %v237 = vld [vmem:[#allocation5 + $0x2a0] sm:$0xff]
    %v238 = vld [vmem:[#allocation5 + $0x2a8] sm:$0xff]
    %v239 = vld [vmem:[#allocation5 + $0x2b0] sm:$0xff]
    %v240 = vld [vmem:[#allocation5 + $0x2b8] sm:$0xff]
    %v241 = vld [vmem:[#allocation5 + $0x2c0] sm:$0xff]
    %v242 = vld [vmem:[#allocation5 + $0x2c8] sm:$0xff]
    %v243 = vld [vmem:[#allocation5 + $0x2d0] sm:$0xff]
    %v244 = vld [vmem:[#allocation5 + $0x2d8] sm:$0xff]
    %v245 = vld [vmem:[#allocation5 + $0x2e0] sm:$0xff]
    %v246 = vld [vmem:[#allocation5 + $0x2e8] sm:$0xff]
    %v247 = vld [vmem:[#allocation5 + $0x2f0] sm:$0xff]
    %v248 = vld [vmem:[#allocation5 + $0x2f8] sm:$0xff]
    %v249 = vld [vmem:[#allocation5 + $0x300] sm:$0xff]
    %v250 = vld [vmem:[#allocation5 + $0x308] sm:$0xff]
    %v251 = vld [vmem:[#allocation5 + $0x310] sm:$0xff]
    %v252 = vld [vmem:[#allocation5 + $0x318] sm:$0xff]
    %v253 = vld [vmem:[#allocation5 + $0x320] sm:$0xff]
    %v254 = vld [vmem:[#allocation5 + $0x328] sm:$0xff]
    %v255 = vld [vmem:[#allocation5 + $0x330] sm:$0xff]
    %v256 = vld [vmem:[#allocation5 + $0x338] sm:$0xff]
    %v257 = vld [vmem:[#allocation5 + $0x340] sm:$0xff]
    %v258 = vld [vmem:[#allocation5 + $0x348] sm:$0xff]
    %v259 = vld [vmem:[#allocation5 + $0x350] sm:$0xff]
    %v260 = vld [vmem:[#allocation5 + $0x358] sm:$0xff]
    %v261 = vld [vmem:[#allocation5 + $0x360] sm:$0xff]
    %v262 = vld [vmem:[#allocation5 + $0x368] sm:$0xff]
    %v263 = vld [vmem:[#allocation5 + $0x370] sm:$0xff]
    %v264 = vld [vmem:[#allocation5 + $0x378] sm:$0xff]
    %v265 = vld [vmem:[#allocation5 + $0x380] sm:$0xff]
    %v266 = vld [vmem:[#allocation5 + $0x388] sm:$0xff]
    %v267 = vld [vmem:[#allocation5 + $0x390] sm:$0xff]
    %v268 = vld [vmem:[#allocation5 + $0x398] sm:$0xff]
    %v269 = vld [vmem:[#allocation5 + $0x3a0] sm:$0xff]
    %v270 = vld [vmem:[#allocation5 + $0x3a8] sm:$0xff]
    %v271 = vld [vmem:[#allocation5 + $0x3b0] sm:$0xff]
    %v272 = vld [vmem:[#allocation5 + $0x3b8] sm:$0xff]
    %v273 = vld [vmem:[#allocation5 + $0x3c0] sm:$0xff]
    %v274 = vld [vmem:[#allocation5 + $0x3c8] sm:$0xff]
    %v275 = vld [vmem:[#allocation5 + $0x3d0] sm:$0xff]
    %v276 = vld [vmem:[#allocation5 + $0x3d8] sm:$0xff]
    %v277 = vld [vmem:[#allocation5 + $0x3e0] sm:$0xff]
    %v278 = vld [vmem:[#allocation5 + $0x3e8] sm:$0xff]
    %v279 = vld [vmem:[#allocation5 + $0x3f0] sm:$0xff]
    %v280 = vld [vmem:[#allocation5 + $0x3f8] sm:$0xff]
    %v281 = vld [vmem:[#allocation5 + $0x400] sm:$0xff]
    %v282 = vld [vmem:[#allocation5 + $0x408] sm:$0xff]
    %v283 = vld [vmem:[#allocation5 + $0x410] sm:$0xff]
    %v284 = vld [vmem:[#allocation5 + $0x418] sm:$0xff]
    %v285 = vld [vmem:[#allocation5 + $0x420] sm:$0xff]
    %v286 = vld [vmem:[#allocation5 + $0x428] sm:$0xff]
    %v287 = vld [vmem:[#allocation5 + $0x430] sm:$0xff]
    %v288 = vld [vmem:[#allocation5 + $0x438] sm:$0xff]
    %v289 = vld [vmem:[#allocation5 + $0x440] sm:$0xff]
    %v290 = vld [vmem:[#allocation5 + $0x448] sm:$0xff]
    %v291 = vld [vmem:[#allocation5 + $0x450] sm:$0xff]
    %v292 = vld [vmem:[#allocation5 + $0x458] sm:$0xff]
    %v293 = vld [vmem:[#allocation5 + $0x460] sm:$0xff]
    %v294 = vld [vmem:[#allocation5 + $0x468] sm:$0xff]
    %v295 = vld [vmem:[#allocation5 + $0x470] sm:$0xff]
    %v296 = vld [vmem:[#allocation5 + $0x478] sm:$0xff]
    %v297 = vld [vmem:[#allocation5 + $0x480] sm:$0xff]
    %v298 = vld [vmem:[#allocation5 + $0x488] sm:$0xff]
    %v299 = vld [vmem:[#allocation5 + $0x490] sm:$0xff]
    %v300 = vld [vmem:[#allocation5 + $0x498] sm:$0xff]
    %v301 = vld [vmem:[#allocation5 + $0x4a0] sm:$0xff]
    %v302 = vld [vmem:[#allocation5 + $0x4a8] sm:$0xff]
    %v303 = vld [vmem:[#allocation5 + $0x4b0] sm:$0xff]
    %v304 = vld [vmem:[#allocation5 + $0x4b8] sm:$0xff]
    %v305 = vld [vmem:[#allocation5 + $0x4c0] sm:$0xff]
    %v306 = vld [vmem:[#allocation5 + $0x4c8] sm:$0xff]
    %v307 = vld [vmem:[#allocation5 + $0x4d0] sm:$0xff]
    %v308 = vld [vmem:[#allocation5 + $0x4d8] sm:$0xff]
    %v309 = vld [vmem:[#allocation5 + $0x4e0] sm:$0xff]
    %v310 = vld [vmem:[#allocation5 + $0x4e8] sm:$0xff]
    %v311 = vld [vmem:[#allocation5 + $0x4f0] sm:$0xff]
    %v312 = vld [vmem:[#allocation5 + $0x4f8] sm:$0xff]
    %v313 = vld [vmem:[#allocation5 + $0x500] sm:$0xff]
    %v314 = vld [vmem:[#allocation5 + $0x508] sm:$0xff]
    %v315 = vld [vmem:[#allocation5 + $0x510] sm:$0xff]
    %v316 = vld [vmem:[#allocation5 + $0x518] sm:$0xff]
    %v317 = vld [vmem:[#allocation5 + $0x520] sm:$0xff]
    %v318 = vld [vmem:[#allocation5 + $0x528] sm:$0xff]
    %v319 = vld [vmem:[#allocation5 + $0x530] sm:$0xff]
    %v320 = vld [vmem:[#allocation5 + $0x538] sm:$0xff]
    %v321 = vld [vmem:[#allocation5 + $0x540] sm:$0xff]
    %v322 = vld [vmem:[#allocation5 + $0x548] sm:$0xff]
    %v323 = vld [vmem:[#allocation5 + $0x550] sm:$0xff]
    %v324 = vld [vmem:[#allocation5 + $0x558] sm:$0xff]
    %v325 = vld [vmem:[#allocation5 + $0x560] sm:$0xff]
    %v326 = vld [vmem:[#allocation5 + $0x568] sm:$0xff]
    %v327 = vld [vmem:[#allocation5 + $0x570] sm:$0xff]
    %v328 = vld [vmem:[#allocation5 + $0x578] sm:$0xff]
    %v329 = vld [vmem:[#allocation5 + $0x580] sm:$0xff]
    %v330 = vld [vmem:[#allocation5 + $0x588] sm:$0xff]
    %v331 = vld [vmem:[#allocation5 + $0x590] sm:$0xff]
    %v332 = vld [vmem:[#allocation5 + $0x598] sm:$0xff]
    %v333 = vld [vmem:[#allocation5 + $0x5a0] sm:$0xff]
    %v334 = vld [vmem:[#allocation5 + $0x5a8] sm:$0xff]
    %v335 = vld [vmem:[#allocation5 + $0x5b0] sm:$0xff]
    %v336 = vld [vmem:[#allocation5 + $0x5b8] sm:$0xff]
    %v337 = vld [vmem:[#allocation5 + $0x5c0] sm:$0xff]
    %v338 = vld [vmem:[#allocation5 + $0x5c8] sm:$0xff]
    %v339 = vld [vmem:[#allocation5 + $0x5d0] sm:$0xff]
    %v340 = vld [vmem:[#allocation5 + $0x5d8] sm:$0xff]
    %v341 = vld [vmem:[#allocation5 + $0x5e0] sm:$0xff]
    %v342 = vld [vmem:[#allocation5 + $0x5e8] sm:$0xff]
    %v343 = vld [vmem:[#allocation5 + $0x5f0] sm:$0xff]
    %v344 = vld [vmem:[#allocation5 + $0x5f8] sm:$0xff]
    %v345 = vld [vmem:[#allocation5 + $0x600] sm:$0xff]
    %v346 = vld [vmem:[#allocation5 + $0x608] sm:$0xff]
    %v347 = vld [vmem:[#allocation5 + $0x610] sm:$0xff]
    %v348 = vld [vmem:[#allocation5 + $0x618] sm:$0xff]
    %v349 = vld [vmem:[#allocation5 + $0x620] sm:$0xff]
    %v350 = vld [vmem:[#allocation5 + $0x628] sm:$0xff]
    %v351 = vld [vmem:[#allocation5 + $0x630] sm:$0xff]
    %v352 = vld [vmem:[#allocation5 + $0x638] sm:$0xff]
    %v353 = vld [vmem:[#allocation5 + $0x640] sm:$0xff]
    %v354 = vld [vmem:[#allocation5 + $0x648] sm:$0xff]
    %v355 = vld [vmem:[#allocation5 + $0x650] sm:$0xff]
    %v356 = vld [vmem:[#allocation5 + $0x658] sm:$0xff]
    %v357 = vld [vmem:[#allocation5 + $0x660] sm:$0xff]
    %v358 = vld [vmem:[#allocation5 + $0x668] sm:$0xff]
    %v359 = vld [vmem:[#allocation5 + $0x670] sm:$0xff]
    %v360 = vld [vmem:[#allocation5 + $0x678] sm:$0xff]
    %v361 = vld [vmem:[#allocation5 + $0x680] sm:$0xff]
    %v362 = vld [vmem:[#allocation5 + $0x688] sm:$0xff]
    %v363 = vld [vmem:[#allocation5 + $0x690] sm:$0xff]
    %v364 = vld [vmem:[#allocation5 + $0x698] sm:$0xff]
    %v365 = vld [vmem:[#allocation5 + $0x6a0] sm:$0xff]
    %v366 = vld [vmem:[#allocation5 + $0x6a8] sm:$0xff]
    %v367 = vld [vmem:[#allocation5 + $0x6b0] sm:$0xff]
    %v368 = vld [vmem:[#allocation5 + $0x6b8] sm:$0xff]
    %v369 = vld [vmem:[#allocation5 + $0x6c0] sm:$0xff]
    %v370 = vld [vmem:[#allocation5 + $0x6c8] sm:$0xff]
    %v371 = vld [vmem:[#allocation5 + $0x6d0] sm:$0xff]
    %v372 = vld [vmem:[#allocation5 + $0x6d8] sm:$0xff]
    %v373 = vld [vmem:[#allocation5 + $0x6e0] sm:$0xff]
    %v374 = vld [vmem:[#allocation5 + $0x6e8] sm:$0xff]
    %v375 = vld [vmem:[#allocation5 + $0x6f0] sm:$0xff]
    %v376 = vld [vmem:[#allocation5 + $0x6f8] sm:$0xff]
    %v377 = vld [vmem:[#allocation5 + $0x700] sm:$0xff]
    %v378 = vld [vmem:[#allocation5 + $0x708] sm:$0xff]
    %v379 = vld [vmem:[#allocation5 + $0x710] sm:$0xff]
    %v380 = vld [vmem:[#allocation5 + $0x718] sm:$0xff]
    %v381 = vld [vmem:[#allocation5 + $0x720] sm:$0xff]
    %v382 = vld [vmem:[#allocation5 + $0x728] sm:$0xff]
    %v383 = vld [vmem:[#allocation5 + $0x730] sm:$0xff]
    %v384 = vld [vmem:[#allocation5 + $0x738] sm:$0xff]
    %v385 = vld [vmem:[#allocation5 + $0x740] sm:$0xff]
    %v386 = vld [vmem:[#allocation5 + $0x748] sm:$0xff]
    %v387 = vld [vmem:[#allocation5 + $0x750] sm:$0xff]
    %v388 = vld [vmem:[#allocation5 + $0x758] sm:$0xff]
    %v389 = vld [vmem:[#allocation5 + $0x760] sm:$0xff]
    %v390 = vld [vmem:[#allocation5 + $0x768] sm:$0xff]
    %v391 = vld [vmem:[#allocation5 + $0x770] sm:$0xff]
    %v392 = vld [vmem:[#allocation5 + $0x778] sm:$0xff]
    %v393 = vld [vmem:[#allocation5 + $0x780] sm:$0xff]
    %v394 = vld [vmem:[#allocation5 + $0x788] sm:$0xff]
    %v395 = vld [vmem:[#allocation5 + $0x790] sm:$0xff]
    %v396 = vld [vmem:[#allocation5 + $0x798] sm:$0xff]
    %v397 = vld [vmem:[#allocation5 + $0x7a0] sm:$0xff]
    %v398 = vld [vmem:[#allocation5 + $0x7a8] sm:$0xff]
    %v399 = vld [vmem:[#allocation5 + $0x7b0] sm:$0xff]
    %v400 = vld [vmem:[#allocation5 + $0x7b8] sm:$0xff]
    %v401 = vld [vmem:[#allocation5 + $0x7c0] sm:$0xff]
    %v402 = vld [vmem:[#allocation5 + $0x7c8] sm:$0xff]
    %v403 = vld [vmem:[#allocation5 + $0x7d0] sm:$0xff]
    %v404 = vld [vmem:[#allocation5 + $0x7d8] sm:$0xff]
    %v405 = vld [vmem:[#allocation5 + $0x7e0] sm:$0xff]
    %v406 = vld [vmem:[#allocation5 + $0x7e8] sm:$0xff]
    %v407 = vld [vmem:[#allocation5 + $0x7f0] sm:$0xff]
    %v408 = vld [vmem:[#allocation5 + $0x7f8] sm:$0xff]
    %v409 = vld [vmem:[#allocation5 + $0x800] sm:$0xff]
    %v410 = vld [vmem:[#allocation5 + $0x808] sm:$0xff]
    %v411 = vld [vmem:[#allocation5 + $0x810] sm:$0xff]
    %v412 = vld [vmem:[#allocation5 + $0x818] sm:$0xff]
    %v413 = vld [vmem:[#allocation5 + $0x820] sm:$0xff]
    %v414 = vld [vmem:[#allocation5 + $0x828] sm:$0xff]
    %v415 = vld [vmem:[#allocation5 + $0x830] sm:$0xff]
    %v416 = vld [vmem:[#allocation5 + $0x838] sm:$0xff]
    %v417 = vld [vmem:[#allocation5 + $0x840] sm:$0xff]
    %v418 = vld [vmem:[#allocation5 + $0x848] sm:$0xff]
    %v419 = vld [vmem:[#allocation5 + $0x850] sm:$0xff]
    %v420 = vld [vmem:[#allocation5 + $0x858] sm:$0xff]
    %v421 = vld [vmem:[#allocation5 + $0x860] sm:$0xff]
    %v422 = vld [vmem:[#allocation5 + $0x868] sm:$0xff]
    %v423 = vld [vmem:[#allocation5 + $0x870] sm:$0xff]
    %v424 = vld [vmem:[#allocation5 + $0x878] sm:$0xff]
    %v425 = vld [vmem:[#allocation5 + $0x880] sm:$0xff]
    %v426 = vld [vmem:[#allocation5 + $0x888] sm:$0xff]
    %v427 = vld [vmem:[#allocation5 + $0x890] sm:$0xff]
    %v428 = vld [vmem:[#allocation5 + $0x898] sm:$0xff]
    %v429 = vld [vmem:[#allocation5 + $0x8a0] sm:$0xff]
    %v430 = vld [vmem:[#allocation5 + $0x8a8] sm:$0xff]
    %v431 = vld [vmem:[#allocation5 + $0x8b0] sm:$0xff]
    %v432 = vld [vmem:[#allocation5 + $0x8b8] sm:$0xff]
    %v433 = vld [vmem:[#allocation5 + $0x8c0] sm:$0xff]
    %v434 = vld [vmem:[#allocation5 + $0x8c8] sm:$0xff]
    %v435 = vld [vmem:[#allocation5 + $0x8d0] sm:$0xff]
    %v436 = vld [vmem:[#allocation5 + $0x8d8] sm:$0xff]
    %v437 = vld [vmem:[#allocation5 + $0x8e0] sm:$0xff]
    %v438 = vld [vmem:[#allocation5 + $0x8e8] sm:$0xff]
    %v439 = vld [vmem:[#allocation5 + $0x8f0] sm:$0xff]
    %v440 = vld [vmem:[#allocation5 + $0x8f8] sm:$0xff]
    %v441 = vld [vmem:[#allocation5 + $0x900] sm:$0xff]
    %v442 = vld [vmem:[#allocation5 + $0x908] sm:$0xff]
    %v443 = vld [vmem:[#allocation5 + $0x910] sm:$0xff]
    %v444 = vld [vmem:[#allocation5 + $0x918] sm:$0xff]
    %v445 = vld [vmem:[#allocation5 + $0x920] sm:$0xff]
    %v446 = vld [vmem:[#allocation5 + $0x928] sm:$0xff]
    %v447 = vld [vmem:[#allocation5 + $0x930] sm:$0xff]
    %v448 = vld [vmem:[#allocation5 + $0x938] sm:$0xff]
    %v449 = vld [vmem:[#allocation5 + $0x940] sm:$0xff]
    %v450 = vld [vmem:[#allocation5 + $0x948] sm:$0xff]
    %v451 = vld [vmem:[#allocation5 + $0x950] sm:$0xff]
    %v452 = vld [vmem:[#allocation5 + $0x958] sm:$0xff]
    %v453 = vld [vmem:[#allocation5 + $0x960] sm:$0xff]
    %v454 = vld [vmem:[#allocation5 + $0x968] sm:$0xff]
    %v455 = vld [vmem:[#allocation5 + $0x970] sm:$0xff]
    %v456 = vld [vmem:[#allocation5 + $0x978] sm:$0xff]
    %v457 = vld [vmem:[#allocation5 + $0x980] sm:$0xff]
    %v458 = vld [vmem:[#allocation5 + $0x988] sm:$0xff]
    %v459 = vld [vmem:[#allocation5 + $0x990] sm:$0xff]
    %v460 = vld [vmem:[#allocation5 + $0x998] sm:$0xff]
    %v461 = vld [vmem:[#allocation5 + $0x9a0] sm:$0xff]
    %v462 = vld [vmem:[#allocation5 + $0x9a8] sm:$0xff]
    %v463 = vld [vmem:[#allocation5 + $0x9b0] sm:$0xff]
    %v464 = vld [vmem:[#allocation5 + $0x9b8] sm:$0xff]
    %v465 = vld [vmem:[#allocation5 + $0x9c0] sm:$0xff]
    %v466 = vld [vmem:[#allocation5 + $0x9c8] sm:$0xff]
    %v467 = vld [vmem:[#allocation5 + $0x9d0] sm:$0xff]
    %v468 = vld [vmem:[#allocation5 + $0x9d8] sm:$0xff]
    %v469 = vld [vmem:[#allocation5 + $0x9e0] sm:$0xff]
    %v470 = vld [vmem:[#allocation5 + $0x9e8] sm:$0xff]
    %v471 = vld [vmem:[#allocation5 + $0x9f0] sm:$0xff]
    %v472 = vld [vmem:[#allocation5 + $0x9f8] sm:$0xff]
    %v473 = vld [vmem:[#allocation5 + $0xa00] sm:$0xff]
    %v474 = vld [vmem:[#allocation5 + $0xa08] sm:$0xff]
    %v475 = vld [vmem:[#allocation5 + $0xa10] sm:$0xff]
    %v476 = vld [vmem:[#allocation5 + $0xa18] sm:$0xff]
    %v477 = vld [vmem:[#allocation5 + $0xa20] sm:$0xff]
    %v478 = vld [vmem:[#allocation5 + $0xa28] sm:$0xff]
    %v479 = vld [vmem:[#allocation5 + $0xa30] sm:$0xff]
    %v480 = vld [vmem:[#allocation5 + $0xa38] sm:$0xff]
    %v481 = vld [vmem:[#allocation5 + $0xa40] sm:$0xff]
    %v482 = vld [vmem:[#allocation5 + $0xa48] sm:$0xff]
    %v483 = vld [vmem:[#allocation5 + $0xa50] sm:$0xff]
    %v484 = vld [vmem:[#allocation5 + $0xa58] sm:$0xff]
    %v485 = vld [vmem:[#allocation5 + $0xa60] sm:$0xff]
    %v486 = vld [vmem:[#allocation5 + $0xa68] sm:$0xff]
    %v487 = vld [vmem:[#allocation5 + $0xa70] sm:$0xff]
    %v488 = vld [vmem:[#allocation5 + $0xa78] sm:$0xff]
    %v489 = vld [vmem:[#allocation5 + $0xa80] sm:$0xff]
    %v490 = vld [vmem:[#allocation5 + $0xa88] sm:$0xff]
    %v491 = vld [vmem:[#allocation5 + $0xa90] sm:$0xff]
    %v492 = vld [vmem:[#allocation5 + $0xa98] sm:$0xff]
    %v493 = vld [vmem:[#allocation5 + $0xaa0] sm:$0xff]
    %v494 = vld [vmem:[#allocation5 + $0xaa8] sm:$0xff]
    %v495 = vld [vmem:[#allocation5 + $0xab0] sm:$0xff]
    %v496 = vld [vmem:[#allocation5 + $0xab8] sm:$0xff]
    %v497 = vld [vmem:[#allocation5 + $0xac0] sm:$0xff]
    %v498 = vld [vmem:[#allocation5 + $0xac8] sm:$0xff]
    %v499 = vld [vmem:[#allocation5 + $0xad0] sm:$0xff]
    %v500 = vld [vmem:[#allocation5 + $0xad8] sm:$0xff]
    %v501 = vld [vmem:[#allocation5 + $0xae0] sm:$0xff]
    %v502 = vld [vmem:[#allocation5 + $0xae8] sm:$0xff]
    %v503 = vld [vmem:[#allocation5 + $0xaf0] sm:$0xff]
    %v504 = vld [vmem:[#allocation5 + $0xaf8] sm:$0xff]
    %v505 = vld [vmem:[#allocation5 + $0xb00] sm:$0xff]
    %v506 = vld [vmem:[#allocation5 + $0xb08] sm:$0xff]
    %v507 = vld [vmem:[#allocation5 + $0xb10] sm:$0xff]
    %v508 = vld [vmem:[#allocation5 + $0xb18] sm:$0xff]
    %v509 = vld [vmem:[#allocation5 + $0xb20] sm:$0xff]
    %v510 = vld [vmem:[#allocation5 + $0xb28] sm:$0xff]
    %v511 = vld [vmem:[#allocation5 + $0xb30] sm:$0xff]
    %v512 = vld [vmem:[#allocation5 + $0xb38] sm:$0xff]
    %v513 = vld [vmem:[#allocation5 + $0xb40] sm:$0xff]
    %v514 = vld [vmem:[#allocation5 + $0xb48] sm:$0xff]
    %v515 = vld [vmem:[#allocation5 + $0xb50] sm:$0xff]
    %v516 = vld [vmem:[#allocation5 + $0xb58] sm:$0xff]
    %v517 = vld [vmem:[#allocation5 + $0xb60] sm:$0xff]
    %v518 = vld [vmem:[#allocation5 + $0xb68] sm:$0xff]
    %v519 = vld [vmem:[#allocation5 + $0xb70] sm:$0xff]
    %v520 = vld [vmem:[#allocation5 + $0xb78] sm:$0xff]
    %v521 = vld [vmem:[#allocation5 + $0xb80] sm:$0xff]
    %v522 = vld [vmem:[#allocation5 + $0xb88] sm:$0xff]
    %v523 = vld [vmem:[#allocation5 + $0xb90] sm:$0xff]
    %v524 = vld [vmem:[#allocation5 + $0xb98] sm:$0xff]
    %v525 = vld [vmem:[#allocation5 + $0xba0] sm:$0xff]
    %v526 = vld [vmem:[#allocation5 + $0xba8] sm:$0xff]
    %v527 = vld [vmem:[#allocation5 + $0xbb0] sm:$0xff]
    %v528 = vld [vmem:[#allocation5 + $0xbb8] sm:$0xff]
    %v529 = vld [vmem:[#allocation5 + $0xbc0] sm:$0xff]
    %v530 = vld [vmem:[#allocation5 + $0xbc8] sm:$0xff]
    %v531 = vld [vmem:[#allocation5 + $0xbd0] sm:$0xff]
    %v532 = vld [vmem:[#allocation5 + $0xbd8] sm:$0xff]
    %v533 = vld [vmem:[#allocation5 + $0xbe0] sm:$0xff]
    %v534 = vld [vmem:[#allocation5 + $0xbe8] sm:$0xff]
    %v535 = vld [vmem:[#allocation5 + $0xbf0] sm:$0xff]
    %v536 = vld [vmem:[#allocation5 + $0xbf8] sm:$0xff]
    %v537 = vld [vmem:[#allocation5 + $0xc00] sm:$0xff]
    %v538 = vld [vmem:[#allocation5 + $0xc08] sm:$0xff]
    %v539 = vld [vmem:[#allocation5 + $0xc10] sm:$0xff]
    %v540 = vld [vmem:[#allocation5 + $0xc18] sm:$0xff]
    %v541 = vld [vmem:[#allocation5 + $0xc20] sm:$0xff]
    %v542 = vld [vmem:[#allocation5 + $0xc28] sm:$0xff]
    %v543 = vld [vmem:[#allocation5 + $0xc30] sm:$0xff]
    %v544 = vld [vmem:[#allocation5 + $0xc38] sm:$0xff]
    %v545 = vld [vmem:[#allocation5 + $0xc40] sm:$0xff]
    %v546 = vld [vmem:[#allocation5 + $0xc48] sm:$0xff]
    %v547 = vld [vmem:[#allocation5 + $0xc50] sm:$0xff]
    %v548 = vld [vmem:[#allocation5 + $0xc58] sm:$0xff]
    %v549 = vld [vmem:[#allocation5 + $0xc60] sm:$0xff]
    %v550 = vld [vmem:[#allocation5 + $0xc68] sm:$0xff]
    %v551 = vld [vmem:[#allocation5 + $0xc70] sm:$0xff]
    %v552 = vld [vmem:[#allocation5 + $0xc78] sm:$0xff]
    %v553 = vld [vmem:[#allocation5 + $0xc80] sm:$0xff]
    %v554 = vld [vmem:[#allocation5 + $0xc88] sm:$0xff]
    %v555 = vld [vmem:[#allocation5 + $0xc90] sm:$0xff]
    %v556 = vld [vmem:[#allocation5 + $0xc98] sm:$0xff]
    %v557 = vld [vmem:[#allocation5 + $0xca0] sm:$0xff]
    %v558 = vld [vmem:[#allocation5 + $0xca8] sm:$0xff]
    %v559 = vld [vmem:[#allocation5 + $0xcb0] sm:$0xff]
    %v560 = vld [vmem:[#allocation5 + $0xcb8] sm:$0xff]
    %v561 = vld [vmem:[#allocation5 + $0xcc0] sm:$0xff]
    %v562 = vld [vmem:[#allocation5 + $0xcc8] sm:$0xff]
    %v563 = vld [vmem:[#allocation5 + $0xcd0] sm:$0xff]
    %v564 = vld [vmem:[#allocation5 + $0xcd8] sm:$0xff]
    %v565 = vld [vmem:[#allocation5 + $0xce0] sm:$0xff]
    %v566 = vld [vmem:[#allocation5 + $0xce8] sm:$0xff]
    %v567 = vld [vmem:[#allocation5 + $0xcf0] sm:$0xff]
    %v568 = vld [vmem:[#allocation5 + $0xcf8] sm:$0xff]
    %v569 = vld [vmem:[#allocation5 + $0xd00] sm:$0xff]
    %v570 = vld [vmem:[#allocation5 + $0xd08] sm:$0xff]
    %v571 = vld [vmem:[#allocation5 + $0xd10] sm:$0xff]
    %v572 = vld [vmem:[#allocation5 + $0xd18] sm:$0xff]
    %v573 = vld [vmem:[#allocation5 + $0xd20] sm:$0xff]
    %v574 = vld [vmem:[#allocation5 + $0xd28] sm:$0xff]
    %v575 = vld [vmem:[#allocation5 + $0xd30] sm:$0xff]
    %v576 = vld [vmem:[#allocation5 + $0xd38] sm:$0xff]
    %v577 = vld [vmem:[#allocation5 + $0xd40] sm:$0xff]
    %v578 = vld [vmem:[#allocation5 + $0xd48] sm:$0xff]
    %v579 = vld [vmem:[#allocation5 + $0xd50] sm:$0xff]
    %v580 = vld [vmem:[#allocation5 + $0xd58] sm:$0xff]
    %v581 = vld [vmem:[#allocation5 + $0xd60] sm:$0xff]
    %v582 = vld [vmem:[#allocation5 + $0xd68] sm:$0xff]
    %v583 = vld [vmem:[#allocation5 + $0xd70] sm:$0xff]
    %v584 = vld [vmem:[#allocation5 + $0xd78] sm:$0xff]
    %v585 = vld [vmem:[#allocation5 + $0xd80] sm:$0xff]
    %v586 = vld [vmem:[#allocation5 + $0xd88] sm:$0xff]
    %v587 = vld [vmem:[#allocation5 + $0xd90] sm:$0xff]
    %v588 = vld [vmem:[#allocation5 + $0xd98] sm:$0xff]
    %v589 = vld [vmem:[#allocation5 + $0xda0] sm:$0xff]
    %v590 = vld [vmem:[#allocation5 + $0xda8] sm:$0xff]
    %v591 = vld [vmem:[#allocation5 + $0xdb0] sm:$0xff]
    %v592 = vld [vmem:[#allocation5 + $0xdb8] sm:$0xff]
    %v593 = vld [vmem:[#allocation5 + $0xdc0] sm:$0xff]
    %v594 = vld [vmem:[#allocation5 + $0xdc8] sm:$0xff]
    %v595 = vld [vmem:[#allocation5 + $0xdd0] sm:$0xff]
    %v596 = vld [vmem:[#allocation5 + $0xdd8] sm:$0xff]
    %v597 = vld [vmem:[#allocation5 + $0xde0] sm:$0xff]
    %v598 = vld [vmem:[#allocation5 + $0xde8] sm:$0xff]
    %v599 = vld [vmem:[#allocation5 + $0xdf0] sm:$0xff]
    %v600 = vld [vmem:[#allocation5 + $0xdf8] sm:$0xff]
    %v601 = vld [vmem:[#allocation7] sm:$0xff]
    %v603 = vperm.slane %v601, 0
    %v604 = vperm.slane %v601, 1
    %v605 = vperm.slane %v601, 2
    %v606 = vperm.slane %v601, 3
    %v607 = vperm.slane %v601, 4
    %v608 = vperm.slane %v601, 5
    %v609 = vperm.slane %v601, 6
    %v610 = vperm.slane %v601, 7
    %v623 = vunpack.c.l.b16 %v149
    %v624 = vunpack.c.h.b16 %v149
    %v625 = vunpack.c.l.b16 %v150
    %v626 = vunpack.c.h.b16 %v150
    %v627 = vunpack.c.l.b16 %v151
    %v628 = vunpack.c.h.b16 %v151
    %v629 = vunpack.c.l.b16 %v152
    %v630 = vpack.c.b16 %v623, %v623
    %v631 = vpack.c.b16 %v624, %v624
    %v632 = vpack.c.b16 %v625, %v625
    %v633 = vpack.c.b16 %v626, %v626
    %v634 = vpack.c.b16 %v627, %v627
    %v635 = vpack.c.b16 %v628, %v628
    %v636 = vpack.c.b16 %v629, %v629
    %v1092 = vunpack.c.l.b16 %v153
    %v1093 = vunpack.c.h.b16 %v153
    %v1094 = vunpack.c.l.b16 %v154
    %v1095 = vunpack.c.h.b16 %v154
    %v1096 = vunpack.c.l.b16 %v155
    %v1097 = vunpack.c.h.b16 %v155
    %v1098 = vunpack.c.l.b16 %v156
    %v1099 = vunpack.c.h.b16 %v156
    %v1100 = vunpack.c.l.b16 %v157
    %v1101 = vunpack.c.h.b16 %v157
    %v1102 = vunpack.c.l.b16 %v158
    %v1103 = vunpack.c.h.b16 %v158
    %v1104 = vunpack.c.l.b16 %v159
    %v1105 = vunpack.c.h.b16 %v159
    %v1106 = vunpack.c.l.b16 %v160
    %v1107 = vunpack.c.h.b16 %v160
    %v1108 = vunpack.c.l.b16 %v161
    %v1109 = vunpack.c.h.b16 %v161
    %v1110 = vunpack.c.l.b16 %v162
    %v1111 = vunpack.c.h.b16 %v162
    %v1112 = vunpack.c.l.b16 %v163
    %v1113 = vunpack.c.h.b16 %v163
    %v1114 = vunpack.c.l.b16 %v164
    %v1115 = vunpack.c.h.b16 %v164
    %v1116 = vunpack.c.l.b16 %v165
    %v1117 = vunpack.c.h.b16 %v165
    %v1118 = vunpack.c.l.b16 %v166
    %v1119 = vunpack.c.h.b16 %v166
    %v1120 = vunpack.c.l.b16 %v167
    %v1121 = vunpack.c.h.b16 %v167
    %v1122 = vunpack.c.l.b16 %v168
    %v1123 = vunpack.c.h.b16 %v168
    %v1124 = vunpack.c.l.b16 %v169
    %v1125 = vunpack.c.h.b16 %v169
    %v1126 = vunpack.c.l.b16 %v170
    %v1127 = vunpack.c.h.b16 %v170
    %v1128 = vunpack.c.l.b16 %v171
    %v1129 = vunpack.c.h.b16 %v171
    %v1130 = vunpack.c.l.b16 %v172
    %v1131 = vunpack.c.h.b16 %v172
    %v1132 = vunpack.c.l.b16 %v173
    %v1133 = vunpack.c.h.b16 %v173
    %v1134 = vunpack.c.l.b16 %v174
    %v1135 = vunpack.c.h.b16 %v174
    %v1136 = vunpack.c.l.b16 %v175
    %v1137 = vunpack.c.h.b16 %v175
    %v1138 = vunpack.c.l.b16 %v176
    %v1139 = vunpack.c.h.b16 %v176
    %v1140 = vunpack.c.l.b16 %v177
    %v1141 = vunpack.c.h.b16 %v177
    %v1142 = vunpack.c.l.b16 %v178
    %v1143 = vunpack.c.h.b16 %v178
    %v1144 = vunpack.c.l.b16 %v179
    %v1145 = vunpack.c.h.b16 %v179
    %v1146 = vunpack.c.l.b16 %v180
    %v1147 = vunpack.c.h.b16 %v180
    %v1148 = vunpack.c.l.b16 %v181
    %v1149 = vunpack.c.h.b16 %v181
    %v1150 = vunpack.c.l.b16 %v182
    %v1151 = vunpack.c.h.b16 %v182
    %v1152 = vunpack.c.l.b16 %v183
    %v1153 = vunpack.c.h.b16 %v183
    %v1154 = vunpack.c.l.b16 %v184
    %v1155 = vunpack.c.h.b16 %v184
    %v1156 = vunpack.c.l.b16 %v185
    %v1157 = vunpack.c.h.b16 %v185
    %v1158 = vunpack.c.l.b16 %v186
    %v1159 = vunpack.c.h.b16 %v186
    %v1160 = vunpack.c.l.b16 %v187
    %v1161 = vunpack.c.h.b16 %v187
    %v1162 = vunpack.c.l.b16 %v188
    %v1163 = vunpack.c.h.b16 %v188
    %v1164 = vunpack.c.l.b16 %v189
    %v1165 = vunpack.c.h.b16 %v189
    %v1166 = vunpack.c.l.b16 %v190
    %v1167 = vunpack.c.h.b16 %v190
    %v1168 = vunpack.c.l.b16 %v191
    %v1169 = vunpack.c.h.b16 %v191
    %v1170 = vunpack.c.l.b16 %v192
    %v1171 = vunpack.c.h.b16 %v192
    %v1172 = vunpack.c.l.b16 %v193
    %v1173 = vunpack.c.h.b16 %v193
    %v1174 = vunpack.c.l.b16 %v194
    %v1175 = vunpack.c.h.b16 %v194
    %v1176 = vunpack.c.l.b16 %v195
    %v1177 = vunpack.c.h.b16 %v195
    %v1178 = vunpack.c.l.b16 %v196
    %v1179 = vunpack.c.h.b16 %v196
    %v1180 = vunpack.c.l.b16 %v197
    %v1181 = vunpack.c.h.b16 %v197
    %v1182 = vunpack.c.l.b16 %v198
    %v1183 = vunpack.c.h.b16 %v198
    %v1184 = vunpack.c.l.b16 %v199
    %v1185 = vunpack.c.h.b16 %v199
    %v1186 = vunpack.c.l.b16 %v200
    %v1187 = vunpack.c.h.b16 %v200
    %v1188 = vunpack.c.l.b16 %v201
    %v1189 = vunpack.c.h.b16 %v201
    %v1190 = vunpack.c.l.b16 %v202
    %v1191 = vunpack.c.h.b16 %v202
    %v1192 = vunpack.c.l.b16 %v203
    %v1193 = vunpack.c.h.b16 %v203
    %v1194 = vunpack.c.l.b16 %v204
    %v1195 = vunpack.c.h.b16 %v204
    %v1196 = vunpack.c.l.b16 %v205
    %v1197 = vunpack.c.h.b16 %v205
    %v1198 = vunpack.c.l.b16 %v206
    %v1199 = vunpack.c.h.b16 %v206
    %v1200 = vunpack.c.l.b16 %v207
    %v1201 = vunpack.c.h.b16 %v207
    %v1202 = vunpack.c.l.b16 %v208
    %v1203 = vunpack.c.h.b16 %v208
    %v1204 = vunpack.c.l.b16 %v209
    %v1205 = vunpack.c.h.b16 %v209
    %v1206 = vunpack.c.l.b16 %v210
    %v1207 = vunpack.c.h.b16 %v210
    %v1208 = vunpack.c.l.b16 %v211
    %v1209 = vunpack.c.h.b16 %v211
    %v1210 = vunpack.c.l.b16 %v212
    %v1211 = vunpack.c.h.b16 %v212
    %v1212 = vunpack.c.l.b16 %v213
    %v1213 = vunpack.c.h.b16 %v213
    %v1214 = vunpack.c.l.b16 %v214
    %v1215 = vunpack.c.h.b16 %v214
    %v1216 = vunpack.c.l.b16 %v215
    %v1217 = vunpack.c.h.b16 %v215
    %v1218 = vunpack.c.l.b16 %v216
    %v1219 = vunpack.c.h.b16 %v216
    %v1220 = vunpack.c.l.b16 %v217
    %v1221 = vunpack.c.h.b16 %v217
    %v1222 = vunpack.c.l.b16 %v218
    %v1223 = vunpack.c.h.b16 %v218
    %v1224 = vunpack.c.l.b16 %v219
    %v1225 = vunpack.c.h.b16 %v219
    %v1226 = vunpack.c.l.b16 %v220
    %v1227 = vunpack.c.h.b16 %v220
    %v1228 = vunpack.c.l.b16 %v221
    %v1229 = vunpack.c.h.b16 %v221
    %v1230 = vunpack.c.l.b16 %v222
    %v1231 = vunpack.c.h.b16 %v222
    %v1232 = vunpack.c.l.b16 %v223
    %v1233 = vunpack.c.h.b16 %v223
    %v1234 = vunpack.c.l.b16 %v224
    %v1235 = vunpack.c.h.b16 %v224
    %v1236 = vunpack.c.l.b16 %v225
    %v1237 = vunpack.c.h.b16 %v225
    %v1238 = vunpack.c.l.b16 %v226
    %v1239 = vunpack.c.h.b16 %v226
    %v1240 = vunpack.c.l.b16 %v227
    %v1241 = vunpack.c.h.b16 %v227
    %v1242 = vunpack.c.l.b16 %v228
    %v1243 = vunpack.c.h.b16 %v228
    %v1244 = vunpack.c.l.b16 %v229
    %v1245 = vunpack.c.h.b16 %v229
    %v1246 = vunpack.c.l.b16 %v230
    %v1247 = vunpack.c.h.b16 %v230
    %v1248 = vunpack.c.l.b16 %v231
    %v1249 = vunpack.c.h.b16 %v231
    %v1250 = vunpack.c.l.b16 %v232
    %v1251 = vunpack.c.h.b16 %v232
    %v1252 = vunpack.c.l.b16 %v233
    %v1253 = vunpack.c.h.b16 %v233
    %v1254 = vunpack.c.l.b16 %v234
    %v1255 = vunpack.c.h.b16 %v234
    %v1256 = vunpack.c.l.b16 %v235
    %v1257 = vunpack.c.h.b16 %v235
    %v1258 = vunpack.c.l.b16 %v236
    %v1259 = vunpack.c.h.b16 %v236
    %v1260 = vunpack.c.l.b16 %v237
    %v1261 = vunpack.c.h.b16 %v237
    %v1262 = vunpack.c.l.b16 %v238
    %v1263 = vunpack.c.h.b16 %v238
    %v1264 = vunpack.c.l.b16 %v239
    %v1265 = vunpack.c.h.b16 %v239
    %v1266 = vunpack.c.l.b16 %v240
    %v1267 = vunpack.c.h.b16 %v240
    %v1268 = vunpack.c.l.b16 %v241
    %v1269 = vunpack.c.h.b16 %v241
    %v1270 = vunpack.c.l.b16 %v242
    %v1271 = vunpack.c.h.b16 %v242
    %v1272 = vunpack.c.l.b16 %v243
    %v1273 = vunpack.c.h.b16 %v243
    %v1274 = vunpack.c.l.b16 %v244
    %v1275 = vunpack.c.h.b16 %v244
    %v1276 = vunpack.c.l.b16 %v245
    %v1277 = vunpack.c.h.b16 %v245
    %v1278 = vunpack.c.l.b16 %v246
    %v1279 = vunpack.c.h.b16 %v246
    %v1280 = vunpack.c.l.b16 %v247
    %v1281 = vunpack.c.h.b16 %v247
    %v1282 = vunpack.c.l.b16 %v248
    %v1283 = vunpack.c.h.b16 %v248
    %v1284 = vunpack.c.l.b16 %v249
    %v1285 = vunpack.c.h.b16 %v249
    %v1286 = vunpack.c.l.b16 %v250
    %v1287 = vunpack.c.h.b16 %v250
    %v1288 = vunpack.c.l.b16 %v251
    %v1289 = vunpack.c.h.b16 %v251
    %v1290 = vunpack.c.l.b16 %v252
    %v1291 = vunpack.c.h.b16 %v252
    %v1292 = vunpack.c.l.b16 %v253
    %v1293 = vunpack.c.h.b16 %v253
    %v1294 = vunpack.c.l.b16 %v254
    %v1295 = vunpack.c.h.b16 %v254
    %v1296 = vunpack.c.l.b16 %v255
    %v1297 = vunpack.c.h.b16 %v255
    %v1298 = vunpack.c.l.b16 %v256
    %v1299 = vunpack.c.h.b16 %v256
    %v1300 = vunpack.c.l.b16 %v257
    %v1301 = vunpack.c.h.b16 %v257
    %v1302 = vunpack.c.l.b16 %v258
    %v1303 = vunpack.c.h.b16 %v258
    %v1304 = vunpack.c.l.b16 %v259
    %v1305 = vunpack.c.h.b16 %v259
    %v1306 = vunpack.c.l.b16 %v260
    %v1307 = vunpack.c.h.b16 %v260
    %v1308 = vunpack.c.l.b16 %v261
    %v1309 = vunpack.c.h.b16 %v261
    %v1310 = vunpack.c.l.b16 %v262
    %v1311 = vunpack.c.h.b16 %v262
    %v1312 = vunpack.c.l.b16 %v263
    %v1313 = vunpack.c.h.b16 %v263
    %v1314 = vunpack.c.l.b16 %v264
    %v1315 = vunpack.c.h.b16 %v264
    %v1316 = vunpack.c.l.b16 %v265
    %v1317 = vunpack.c.h.b16 %v265
    %v1318 = vunpack.c.l.b16 %v266
    %v1319 = vunpack.c.h.b16 %v266
    %v1320 = vunpack.c.l.b16 %v267
    %v1321 = vunpack.c.h.b16 %v267
    %v1322 = vunpack.c.l.b16 %v268
    %v1323 = vunpack.c.h.b16 %v268
    %v1324 = vunpack.c.l.b16 %v269
    %v1325 = vunpack.c.h.b16 %v269
    %v1326 = vunpack.c.l.b16 %v270
    %v1327 = vunpack.c.h.b16 %v270
    %v1328 = vunpack.c.l.b16 %v271
    %v1329 = vunpack.c.h.b16 %v271
    %v1330 = vunpack.c.l.b16 %v272
    %v1331 = vunpack.c.h.b16 %v272
    %v1332 = vunpack.c.l.b16 %v273
    %v1333 = vunpack.c.h.b16 %v273
    %v1334 = vunpack.c.l.b16 %v274
    %v1335 = vunpack.c.h.b16 %v274
    %v1336 = vunpack.c.l.b16 %v275
    %v1337 = vunpack.c.h.b16 %v275
    %v1338 = vunpack.c.l.b16 %v276
    %v1339 = vunpack.c.h.b16 %v276
    %v1340 = vunpack.c.l.b16 %v277
    %v1341 = vunpack.c.h.b16 %v277
    %v1342 = vunpack.c.l.b16 %v278
    %v1343 = vunpack.c.h.b16 %v278
    %v1344 = vunpack.c.l.b16 %v279
    %v1345 = vunpack.c.h.b16 %v279
    %v1346 = vunpack.c.l.b16 %v280
    %v1347 = vunpack.c.h.b16 %v280
    %v1348 = vunpack.c.l.b16 %v281
    %v1349 = vunpack.c.h.b16 %v281
    %v1350 = vunpack.c.l.b16 %v282
    %v1351 = vunpack.c.h.b16 %v282
    %v1352 = vunpack.c.l.b16 %v283
    %v1353 = vunpack.c.h.b16 %v283
    %v1354 = vunpack.c.l.b16 %v284
    %v1355 = vunpack.c.h.b16 %v284
    %v1356 = vunpack.c.l.b16 %v285
    %v1357 = vunpack.c.h.b16 %v285
    %v1358 = vunpack.c.l.b16 %v286
    %v1359 = vunpack.c.h.b16 %v286
    %v1360 = vunpack.c.l.b16 %v287
    %v1361 = vunpack.c.h.b16 %v287
    %v1362 = vunpack.c.l.b16 %v288
    %v1363 = vunpack.c.h.b16 %v288
    %v1364 = vunpack.c.l.b16 %v289
    %v1365 = vunpack.c.h.b16 %v289
    %v1366 = vunpack.c.l.b16 %v290
    %v1367 = vunpack.c.h.b16 %v290
    %v1368 = vunpack.c.l.b16 %v291
    %v1369 = vunpack.c.h.b16 %v291
    %v1370 = vunpack.c.l.b16 %v292
    %v1371 = vunpack.c.h.b16 %v292
    %v1372 = vunpack.c.l.b16 %v293
    %v1373 = vunpack.c.h.b16 %v293
    %v1374 = vunpack.c.l.b16 %v294
    %v1375 = vunpack.c.h.b16 %v294
    %v1376 = vunpack.c.l.b16 %v295
    %v1377 = vunpack.c.h.b16 %v295
    %v1378 = vunpack.c.l.b16 %v296
    %v1379 = vunpack.c.h.b16 %v296
    %v1380 = vunpack.c.l.b16 %v297
    %v1381 = vunpack.c.h.b16 %v297
    %v1382 = vunpack.c.l.b16 %v298
    %v1383 = vunpack.c.h.b16 %v298
    %v1384 = vunpack.c.l.b16 %v299
    %v1385 = vunpack.c.h.b16 %v299
    %v1386 = vunpack.c.l.b16 %v300
    %v1387 = vunpack.c.h.b16 %v300
    %v1388 = vunpack.c.l.b16 %v301
    %v1389 = vunpack.c.h.b16 %v301
    %v1390 = vunpack.c.l.b16 %v302
    %v1391 = vunpack.c.h.b16 %v302
    %v1392 = vunpack.c.l.b16 %v303
    %v1393 = vunpack.c.h.b16 %v303
    %v1394 = vunpack.c.l.b16 %v304
    %v1395 = vunpack.c.h.b16 %v304
    %v1396 = vunpack.c.l.b16 %v305
    %v1397 = vunpack.c.h.b16 %v305
    %v1398 = vunpack.c.l.b16 %v306
    %v1399 = vunpack.c.h.b16 %v306
    %v1400 = vunpack.c.l.b16 %v307
    %v1401 = vunpack.c.h.b16 %v307
    %v1402 = vunpack.c.l.b16 %v308
    %v1403 = vunpack.c.h.b16 %v308
    %v1404 = vunpack.c.l.b16 %v309
    %v1405 = vunpack.c.h.b16 %v309
    %v1406 = vunpack.c.l.b16 %v310
    %v1407 = vunpack.c.h.b16 %v310
    %v1408 = vunpack.c.l.b16 %v311
    %v1409 = vunpack.c.h.b16 %v311
    %v1410 = vunpack.c.l.b16 %v312
    %v1411 = vunpack.c.h.b16 %v312
    %v1412 = vunpack.c.l.b16 %v313
    %v1413 = vunpack.c.h.b16 %v313
    %v1414 = vunpack.c.l.b16 %v314
    %v1415 = vunpack.c.h.b16 %v314
    %v1416 = vunpack.c.l.b16 %v315
    %v1417 = vunpack.c.h.b16 %v315
    %v1418 = vunpack.c.l.b16 %v316
    %v1419 = vunpack.c.h.b16 %v316
    %v1420 = vunpack.c.l.b16 %v317
    %v1421 = vunpack.c.h.b16 %v317
    %v1422 = vunpack.c.l.b16 %v318
    %v1423 = vunpack.c.h.b16 %v318
    %v1424 = vunpack.c.l.b16 %v319
    %v1425 = vunpack.c.h.b16 %v319
    %v1426 = vunpack.c.l.b16 %v320
    %v1427 = vunpack.c.h.b16 %v320
    %v1428 = vunpack.c.l.b16 %v321
    %v1429 = vunpack.c.h.b16 %v321
    %v1430 = vunpack.c.l.b16 %v322
    %v1431 = vunpack.c.h.b16 %v322
    %v1432 = vunpack.c.l.b16 %v323
    %v1433 = vunpack.c.h.b16 %v323
    %v1434 = vunpack.c.l.b16 %v324
    %v1435 = vunpack.c.h.b16 %v324
    %v1436 = vunpack.c.l.b16 %v325
    %v1437 = vunpack.c.h.b16 %v325
    %v1438 = vunpack.c.l.b16 %v326
    %v1439 = vunpack.c.h.b16 %v326
    %v1440 = vunpack.c.l.b16 %v327
    %v1441 = vunpack.c.h.b16 %v327
    %v1442 = vunpack.c.l.b16 %v328
    %v1443 = vunpack.c.h.b16 %v328
    %v1444 = vunpack.c.l.b16 %v329
    %v1445 = vunpack.c.h.b16 %v329
    %v1446 = vunpack.c.l.b16 %v330
    %v1447 = vunpack.c.h.b16 %v330
    %v1448 = vunpack.c.l.b16 %v331
    %v1449 = vunpack.c.h.b16 %v331
    %v1450 = vunpack.c.l.b16 %v332
    %v1451 = vunpack.c.h.b16 %v332
    %v1452 = vunpack.c.l.b16 %v333
    %v1453 = vunpack.c.h.b16 %v333
    %v1454 = vunpack.c.l.b16 %v334
    %v1455 = vunpack.c.h.b16 %v334
    %v1456 = vunpack.c.l.b16 %v335
    %v1457 = vunpack.c.h.b16 %v335
    %v1458 = vunpack.c.l.b16 %v336
    %v1459 = vunpack.c.h.b16 %v336
    %v1460 = vunpack.c.l.b16 %v337
    %v1461 = vunpack.c.h.b16 %v337
    %v1462 = vunpack.c.l.b16 %v338
    %v1463 = vunpack.c.h.b16 %v338
    %v1464 = vunpack.c.l.b16 %v339
    %v1465 = vunpack.c.h.b16 %v339
    %v1466 = vunpack.c.l.b16 %v340
    %v1467 = vunpack.c.h.b16 %v340
    %v1468 = vunpack.c.l.b16 %v341
    %v1469 = vunpack.c.h.b16 %v341
    %v1470 = vunpack.c.l.b16 %v342
    %v1471 = vunpack.c.h.b16 %v342
    %v1472 = vunpack.c.l.b16 %v343
    %v1473 = vunpack.c.h.b16 %v343
    %v1474 = vunpack.c.l.b16 %v344
    %v1475 = vunpack.c.h.b16 %v344
    %v1476 = vunpack.c.l.b16 %v345
    %v1477 = vunpack.c.h.b16 %v345
    %v1478 = vunpack.c.l.b16 %v346
    %v1479 = vunpack.c.h.b16 %v346
    %v1480 = vunpack.c.l.b16 %v347
    %v1481 = vunpack.c.h.b16 %v347
    %v1482 = vunpack.c.l.b16 %v348
    %v1483 = vunpack.c.h.b16 %v348
    %v1484 = vunpack.c.l.b16 %v349
    %v1485 = vunpack.c.h.b16 %v349
    %v1486 = vunpack.c.l.b16 %v350
    %v1487 = vunpack.c.h.b16 %v350
    %v1488 = vunpack.c.l.b16 %v351
    %v1489 = vunpack.c.h.b16 %v351
    %v1490 = vunpack.c.l.b16 %v352
    %v1491 = vunpack.c.h.b16 %v352
    %v1492 = vunpack.c.l.b16 %v353
    %v1493 = vunpack.c.h.b16 %v353
    %v1494 = vunpack.c.l.b16 %v354
    %v1495 = vunpack.c.h.b16 %v354
    %v1496 = vunpack.c.l.b16 %v355
    %v1497 = vunpack.c.h.b16 %v355
    %v1498 = vunpack.c.l.b16 %v356
    %v1499 = vunpack.c.h.b16 %v356
    %v1500 = vunpack.c.l.b16 %v357
    %v1501 = vunpack.c.h.b16 %v357
    %v1502 = vunpack.c.l.b16 %v358
    %v1503 = vunpack.c.h.b16 %v358
    %v1504 = vunpack.c.l.b16 %v359
    %v1505 = vunpack.c.h.b16 %v359
    %v1506 = vunpack.c.l.b16 %v360
    %v1507 = vunpack.c.h.b16 %v360
    %v1508 = vunpack.c.l.b16 %v361
    %v1509 = vunpack.c.h.b16 %v361
    %v1510 = vunpack.c.l.b16 %v362
    %v1511 = vunpack.c.h.b16 %v362
    %v1512 = vunpack.c.l.b16 %v363
    %v1513 = vunpack.c.h.b16 %v363
    %v1514 = vunpack.c.l.b16 %v364
    %v1515 = vunpack.c.h.b16 %v364
    %v1516 = vunpack.c.l.b16 %v365
    %v1517 = vunpack.c.h.b16 %v365
    %v1518 = vunpack.c.l.b16 %v366
    %v1519 = vunpack.c.h.b16 %v366
    %v1520 = vunpack.c.l.b16 %v367
    %v1521 = vunpack.c.h.b16 %v367
    %v1522 = vunpack.c.l.b16 %v368
    %v1523 = vunpack.c.h.b16 %v368
    %v1524 = vunpack.c.l.b16 %v369
    %v1525 = vunpack.c.h.b16 %v369
    %v1526 = vunpack.c.l.b16 %v370
    %v1527 = vunpack.c.h.b16 %v370
    %v1528 = vunpack.c.l.b16 %v371
    %v1529 = vunpack.c.h.b16 %v371
    %v1530 = vunpack.c.l.b16 %v372
    %v1531 = vunpack.c.h.b16 %v372
    %v1532 = vunpack.c.l.b16 %v373
    %v1533 = vunpack.c.h.b16 %v373
    %v1534 = vunpack.c.l.b16 %v374
    %v1535 = vunpack.c.h.b16 %v374
    %v1536 = vunpack.c.l.b16 %v375
    %v1537 = vunpack.c.h.b16 %v375
    %v1538 = vunpack.c.l.b16 %v376
    %v1539 = vunpack.c.h.b16 %v376
    %v1540 = vunpack.c.l.b16 %v377
    %v1541 = vunpack.c.h.b16 %v377
    %v1542 = vunpack.c.l.b16 %v378
    %v1543 = vunpack.c.h.b16 %v378
    %v1544 = vunpack.c.l.b16 %v379
    %v1545 = vunpack.c.h.b16 %v379
    %v1546 = vunpack.c.l.b16 %v380
    %v1547 = vunpack.c.h.b16 %v380
    %v1548 = vunpack.c.l.b16 %v381
    %v1549 = vunpack.c.h.b16 %v381
    %v1550 = vunpack.c.l.b16 %v382
    %v1551 = vunpack.c.h.b16 %v382
    %v1552 = vunpack.c.l.b16 %v383
    %v1553 = vunpack.c.h.b16 %v383
    %v1554 = vunpack.c.l.b16 %v384
    %v1555 = vunpack.c.h.b16 %v384
    %v1556 = vunpack.c.l.b16 %v385
    %v1557 = vunpack.c.h.b16 %v385
    %v1558 = vunpack.c.l.b16 %v386
    %v1559 = vunpack.c.h.b16 %v386
    %v1560 = vunpack.c.l.b16 %v387
    %v1561 = vunpack.c.h.b16 %v387
    %v1562 = vunpack.c.l.b16 %v388
    %v1563 = vunpack.c.h.b16 %v388
    %v1564 = vunpack.c.l.b16 %v389
    %v1565 = vunpack.c.h.b16 %v389
    %v1566 = vunpack.c.l.b16 %v390
    %v1567 = vunpack.c.h.b16 %v390
    %v1568 = vunpack.c.l.b16 %v391
    %v1569 = vunpack.c.h.b16 %v391
    %v1570 = vunpack.c.l.b16 %v392
    %v1571 = vunpack.c.h.b16 %v392
    %v1572 = vunpack.c.l.b16 %v393
    %v1573 = vunpack.c.h.b16 %v393
    %v1574 = vunpack.c.l.b16 %v394
    %v1575 = vunpack.c.h.b16 %v394
    %v1576 = vunpack.c.l.b16 %v395
    %v1577 = vunpack.c.h.b16 %v395
    %v1578 = vunpack.c.l.b16 %v396
    %v1579 = vunpack.c.h.b16 %v396
    %v1580 = vunpack.c.l.b16 %v397
    %v1581 = vunpack.c.h.b16 %v397
    %v1582 = vunpack.c.l.b16 %v398
    %v1583 = vunpack.c.h.b16 %v398
    %v1584 = vunpack.c.l.b16 %v399
    %v1585 = vunpack.c.h.b16 %v399
    %v1586 = vunpack.c.l.b16 %v400
    %v1587 = vunpack.c.h.b16 %v400
    %v1588 = vunpack.c.l.b16 %v401
    %v1589 = vunpack.c.h.b16 %v401
    %v1590 = vunpack.c.l.b16 %v402
    %v1591 = vunpack.c.h.b16 %v402
    %v1592 = vunpack.c.l.b16 %v403
    %v1593 = vunpack.c.h.b16 %v403
    %v1594 = vunpack.c.l.b16 %v404
    %v1595 = vunpack.c.h.b16 %v404
    %v1596 = vunpack.c.l.b16 %v405
    %v1597 = vunpack.c.h.b16 %v405
    %v1598 = vunpack.c.l.b16 %v406
    %v1599 = vunpack.c.h.b16 %v406
    %v1600 = vunpack.c.l.b16 %v407
    %v1601 = vunpack.c.h.b16 %v407
    %v1602 = vunpack.c.l.b16 %v408
    %v1603 = vunpack.c.h.b16 %v408
    %v1604 = vunpack.c.l.b16 %v409
    %v1605 = vunpack.c.h.b16 %v409
    %v1606 = vunpack.c.l.b16 %v410
    %v1607 = vunpack.c.h.b16 %v410
    %v1608 = vunpack.c.l.b16 %v411
    %v1609 = vunpack.c.h.b16 %v411
    %v1610 = vunpack.c.l.b16 %v412
    %v1611 = vunpack.c.h.b16 %v412
    %v1612 = vunpack.c.l.b16 %v413
    %v1613 = vunpack.c.h.b16 %v413
    %v1614 = vunpack.c.l.b16 %v414
    %v1615 = vunpack.c.h.b16 %v414
    %v1616 = vunpack.c.l.b16 %v415
    %v1617 = vunpack.c.h.b16 %v415
    %v1618 = vunpack.c.l.b16 %v416
    %v1619 = vunpack.c.h.b16 %v416
    %v1620 = vunpack.c.l.b16 %v417
    %v1621 = vunpack.c.h.b16 %v417
    %v1622 = vunpack.c.l.b16 %v418
    %v1623 = vunpack.c.h.b16 %v418
    %v1624 = vunpack.c.l.b16 %v419
    %v1625 = vunpack.c.h.b16 %v419
    %v1626 = vunpack.c.l.b16 %v420
    %v1627 = vunpack.c.h.b16 %v420
    %v1628 = vunpack.c.l.b16 %v421
    %v1629 = vunpack.c.h.b16 %v421
    %v1630 = vunpack.c.l.b16 %v422
    %v1631 = vunpack.c.h.b16 %v422
    %v1632 = vunpack.c.l.b16 %v423
    %v1633 = vunpack.c.h.b16 %v423
    %v1634 = vunpack.c.l.b16 %v424
    %v1635 = vunpack.c.h.b16 %v424
    %v1636 = vunpack.c.l.b16 %v425
    %v1637 = vunpack.c.h.b16 %v425
    %v1638 = vunpack.c.l.b16 %v426
    %v1639 = vunpack.c.h.b16 %v426
    %v1640 = vunpack.c.l.b16 %v427
    %v1641 = vunpack.c.h.b16 %v427
    %v1642 = vunpack.c.l.b16 %v428
    %v1643 = vunpack.c.h.b16 %v428
    %v1644 = vunpack.c.l.b16 %v429
    %v1645 = vunpack.c.h.b16 %v429
    %v1646 = vunpack.c.l.b16 %v430
    %v1647 = vunpack.c.h.b16 %v430
    %v1648 = vunpack.c.l.b16 %v431
    %v1649 = vunpack.c.h.b16 %v431
    %v1650 = vunpack.c.l.b16 %v432
    %v1651 = vunpack.c.h.b16 %v432
    %v1652 = vunpack.c.l.b16 %v433
    %v1653 = vunpack.c.h.b16 %v433
    %v1654 = vunpack.c.l.b16 %v434
    %v1655 = vunpack.c.h.b16 %v434
    %v1656 = vunpack.c.l.b16 %v435
    %v1657 = vunpack.c.h.b16 %v435
    %v1658 = vunpack.c.l.b16 %v436
    %v1659 = vunpack.c.h.b16 %v436
    %v1660 = vunpack.c.l.b16 %v437
    %v1661 = vunpack.c.h.b16 %v437
    %v1662 = vunpack.c.l.b16 %v438
    %v1663 = vunpack.c.h.b16 %v438
    %v1664 = vunpack.c.l.b16 %v439
    %v1665 = vunpack.c.h.b16 %v439
    %v1666 = vunpack.c.l.b16 %v440
    %v1667 = vunpack.c.h.b16 %v440
    %v1668 = vunpack.c.l.b16 %v441
    %v1669 = vunpack.c.h.b16 %v441
    %v1670 = vunpack.c.l.b16 %v442
    %v1671 = vunpack.c.h.b16 %v442
    %v1672 = vunpack.c.l.b16 %v443
    %v1673 = vunpack.c.h.b16 %v443
    %v1674 = vunpack.c.l.b16 %v444
    %v1675 = vunpack.c.h.b16 %v444
    %v1676 = vunpack.c.l.b16 %v445
    %v1677 = vunpack.c.h.b16 %v445
    %v1678 = vunpack.c.l.b16 %v446
    %v1679 = vunpack.c.h.b16 %v446
    %v1680 = vunpack.c.l.b16 %v447
    %v1681 = vunpack.c.h.b16 %v447
    %v1682 = vunpack.c.l.b16 %v448
    %v1683 = vunpack.c.h.b16 %v448
    %v1684 = vunpack.c.l.b16 %v449
    %v1685 = vunpack.c.h.b16 %v449
    %v1686 = vunpack.c.l.b16 %v450
    %v1687 = vunpack.c.h.b16 %v450
    %v1688 = vunpack.c.l.b16 %v451
    %v1689 = vunpack.c.h.b16 %v451
    %v1690 = vunpack.c.l.b16 %v452
    %v1691 = vunpack.c.h.b16 %v452
    %v1692 = vunpack.c.l.b16 %v453
    %v1693 = vunpack.c.h.b16 %v453
    %v1694 = vunpack.c.l.b16 %v454
    %v1695 = vunpack.c.h.b16 %v454
    %v1696 = vunpack.c.l.b16 %v455
    %v1697 = vunpack.c.h.b16 %v455
    %v1698 = vunpack.c.l.b16 %v456
    %v1699 = vunpack.c.h.b16 %v456
    %v1700 = vunpack.c.l.b16 %v457
    %v1701 = vunpack.c.h.b16 %v457
    %v1702 = vunpack.c.l.b16 %v458
    %v1703 = vunpack.c.h.b16 %v458
    %v1704 = vunpack.c.l.b16 %v459
    %v1705 = vunpack.c.h.b16 %v459
    %v1706 = vunpack.c.l.b16 %v460
    %v1707 = vunpack.c.h.b16 %v460
    %v1708 = vunpack.c.l.b16 %v461
    %v1709 = vunpack.c.h.b16 %v461
    %v1710 = vunpack.c.l.b16 %v462
    %v1711 = vunpack.c.h.b16 %v462
    %v1712 = vunpack.c.l.b16 %v463
    %v1713 = vunpack.c.h.b16 %v463
    %v1714 = vunpack.c.l.b16 %v464
    %v1715 = vunpack.c.h.b16 %v464
    %v1716 = vunpack.c.l.b16 %v465
    %v1717 = vunpack.c.h.b16 %v465
    %v1718 = vunpack.c.l.b16 %v466
    %v1719 = vunpack.c.h.b16 %v466
    %v1720 = vunpack.c.l.b16 %v467
    %v1721 = vunpack.c.h.b16 %v467
    %v1722 = vunpack.c.l.b16 %v468
    %v1723 = vunpack.c.h.b16 %v468
    %v1724 = vunpack.c.l.b16 %v469
    %v1725 = vunpack.c.h.b16 %v469
    %v1726 = vunpack.c.l.b16 %v470
    %v1727 = vunpack.c.h.b16 %v470
    %v1728 = vunpack.c.l.b16 %v471
    %v1729 = vunpack.c.h.b16 %v471
    %v1730 = vunpack.c.l.b16 %v472
    %v1731 = vunpack.c.h.b16 %v472
    %v1732 = vunpack.c.l.b16 %v473
    %v1733 = vunpack.c.h.b16 %v473
    %v1734 = vunpack.c.l.b16 %v474
    %v1735 = vunpack.c.h.b16 %v474
    %v1736 = vunpack.c.l.b16 %v475
    %v1737 = vunpack.c.h.b16 %v475
    %v1738 = vunpack.c.l.b16 %v476
    %v1739 = vunpack.c.h.b16 %v476
    %v1740 = vunpack.c.l.b16 %v477
    %v1741 = vunpack.c.h.b16 %v477
    %v1742 = vunpack.c.l.b16 %v478
    %v1743 = vunpack.c.h.b16 %v478
    %v1744 = vunpack.c.l.b16 %v479
    %v1745 = vunpack.c.h.b16 %v479
    %v1746 = vunpack.c.l.b16 %v480
    %v1747 = vunpack.c.h.b16 %v480
    %v1748 = vunpack.c.l.b16 %v481
    %v1749 = vunpack.c.h.b16 %v481
    %v1750 = vunpack.c.l.b16 %v482
    %v1751 = vunpack.c.h.b16 %v482
    %v1752 = vunpack.c.l.b16 %v483
    %v1753 = vunpack.c.h.b16 %v483
    %v1754 = vunpack.c.l.b16 %v484
    %v1755 = vunpack.c.h.b16 %v484
    %v1756 = vunpack.c.l.b16 %v485
    %v1757 = vunpack.c.h.b16 %v485
    %v1758 = vunpack.c.l.b16 %v486
    %v1759 = vunpack.c.h.b16 %v486
    %v1760 = vunpack.c.l.b16 %v487
    %v1761 = vunpack.c.h.b16 %v487
    %v1762 = vunpack.c.l.b16 %v488
    %v1763 = vunpack.c.h.b16 %v488
    %v1764 = vunpack.c.l.b16 %v489
    %v1765 = vunpack.c.h.b16 %v489
    %v1766 = vunpack.c.l.b16 %v490
    %v1767 = vunpack.c.h.b16 %v490
    %v1768 = vunpack.c.l.b16 %v491
    %v1769 = vunpack.c.h.b16 %v491
    %v1770 = vunpack.c.l.b16 %v492
    %v1771 = vunpack.c.h.b16 %v492
    %v1772 = vunpack.c.l.b16 %v493
    %v1773 = vunpack.c.h.b16 %v493
    %v1774 = vunpack.c.l.b16 %v494
    %v1775 = vunpack.c.h.b16 %v494
    %v1776 = vunpack.c.l.b16 %v495
    %v1777 = vunpack.c.h.b16 %v495
    %v1778 = vunpack.c.l.b16 %v496
    %v1779 = vunpack.c.h.b16 %v496
    %v1780 = vunpack.c.l.b16 %v497
    %v1781 = vunpack.c.h.b16 %v497
    %v1782 = vunpack.c.l.b16 %v498
    %v1783 = vunpack.c.h.b16 %v498
    %v1784 = vunpack.c.l.b16 %v499
    %v1785 = vunpack.c.h.b16 %v499
    %v1786 = vunpack.c.l.b16 %v500
    %v1787 = vunpack.c.h.b16 %v500
    %v1788 = vunpack.c.l.b16 %v501
    %v1789 = vunpack.c.h.b16 %v501
    %v1790 = vunpack.c.l.b16 %v502
    %v1791 = vunpack.c.h.b16 %v502
    %v1792 = vunpack.c.l.b16 %v503
    %v1793 = vunpack.c.h.b16 %v503
    %v1794 = vunpack.c.l.b16 %v504
    %v1795 = vunpack.c.h.b16 %v504
    %v1796 = vunpack.c.l.b16 %v505
    %v1797 = vunpack.c.h.b16 %v505
    %v1798 = vunpack.c.l.b16 %v506
    %v1799 = vunpack.c.h.b16 %v506
    %v1800 = vunpack.c.l.b16 %v507
    %v1801 = vunpack.c.h.b16 %v507
    %v1802 = vunpack.c.l.b16 %v508
    %v1803 = vunpack.c.h.b16 %v508
    %v1804 = vunpack.c.l.b16 %v509
    %v1805 = vunpack.c.h.b16 %v509
    %v1806 = vunpack.c.l.b16 %v510
    %v1807 = vunpack.c.h.b16 %v510
    %v1808 = vunpack.c.l.b16 %v511
    %v1809 = vunpack.c.h.b16 %v511
    %v1810 = vunpack.c.l.b16 %v512
    %v1811 = vunpack.c.h.b16 %v512
    %v1812 = vunpack.c.l.b16 %v513
    %v1813 = vunpack.c.h.b16 %v513
    %v1814 = vunpack.c.l.b16 %v514
    %v1815 = vunpack.c.h.b16 %v514
    %v1816 = vunpack.c.l.b16 %v515
    %v1817 = vunpack.c.h.b16 %v515
    %v1818 = vunpack.c.l.b16 %v516
    %v1819 = vunpack.c.h.b16 %v516
    %v1820 = vunpack.c.l.b16 %v517
    %v1821 = vunpack.c.h.b16 %v517
    %v1822 = vunpack.c.l.b16 %v518
    %v1823 = vunpack.c.h.b16 %v518
    %v1824 = vunpack.c.l.b16 %v519
    %v1825 = vunpack.c.h.b16 %v519
    %v1826 = vunpack.c.l.b16 %v520
    %v1827 = vunpack.c.h.b16 %v520
    %v1828 = vunpack.c.l.b16 %v521
    %v1829 = vunpack.c.h.b16 %v521
    %v1830 = vunpack.c.l.b16 %v522
    %v1831 = vunpack.c.h.b16 %v522
    %v1832 = vunpack.c.l.b16 %v523
    %v1833 = vunpack.c.h.b16 %v523
    %v1834 = vunpack.c.l.b16 %v524
    %v1835 = vunpack.c.h.b16 %v524
    %v1836 = vunpack.c.l.b16 %v525
    %v1837 = vunpack.c.h.b16 %v525
    %v1838 = vunpack.c.l.b16 %v526
    %v1839 = vunpack.c.h.b16 %v526
    %v1840 = vunpack.c.l.b16 %v527
    %v1841 = vunpack.c.h.b16 %v527
    %v1842 = vunpack.c.l.b16 %v528
    %v1843 = vunpack.c.h.b16 %v528
    %v1844 = vunpack.c.l.b16 %v529
    %v1845 = vunpack.c.h.b16 %v529
    %v1846 = vunpack.c.l.b16 %v530
    %v1847 = vunpack.c.h.b16 %v530
    %v1848 = vunpack.c.l.b16 %v531
    %v1849 = vunpack.c.h.b16 %v531
    %v1850 = vunpack.c.l.b16 %v532
    %v1851 = vunpack.c.h.b16 %v532
    %v1852 = vunpack.c.l.b16 %v533
    %v1853 = vunpack.c.h.b16 %v533
    %v1854 = vunpack.c.l.b16 %v534
    %v1855 = vunpack.c.h.b16 %v534
    %v1856 = vunpack.c.l.b16 %v535
    %v1857 = vunpack.c.h.b16 %v535
    %v1858 = vunpack.c.l.b16 %v536
    %v1859 = vunpack.c.h.b16 %v536
    %v1860 = vunpack.c.l.b16 %v537
    %v1861 = vunpack.c.h.b16 %v537
    %v1862 = vunpack.c.l.b16 %v538
    %v1863 = vunpack.c.h.b16 %v538
    %v1864 = vunpack.c.l.b16 %v539
    %v1865 = vunpack.c.h.b16 %v539
    %v1866 = vunpack.c.l.b16 %v540
    %v1867 = vunpack.c.h.b16 %v540
    %v1868 = vunpack.c.l.b16 %v541
    %v1869 = vunpack.c.h.b16 %v541
    %v1870 = vunpack.c.l.b16 %v542
    %v1871 = vunpack.c.h.b16 %v542
    %v1872 = vunpack.c.l.b16 %v543
    %v1873 = vunpack.c.h.b16 %v543
    %v1874 = vunpack.c.l.b16 %v544
    %v1875 = vunpack.c.h.b16 %v544
    %v1876 = vunpack.c.l.b16 %v545
    %v1877 = vunpack.c.h.b16 %v545
    %v1878 = vunpack.c.l.b16 %v546
    %v1879 = vunpack.c.h.b16 %v546
    %v1880 = vunpack.c.l.b16 %v547
    %v1881 = vunpack.c.h.b16 %v547
    %v1882 = vunpack.c.l.b16 %v548
    %v1883 = vunpack.c.h.b16 %v548
    %v1884 = vunpack.c.l.b16 %v549
    %v1885 = vunpack.c.h.b16 %v549
    %v1886 = vunpack.c.l.b16 %v550
    %v1887 = vunpack.c.h.b16 %v550
    %v1888 = vunpack.c.l.b16 %v551
    %v1889 = vunpack.c.h.b16 %v551
    %v1890 = vunpack.c.l.b16 %v552
    %v1891 = vunpack.c.h.b16 %v552
    %v1892 = vunpack.c.l.b16 %v553
    %v1893 = vunpack.c.h.b16 %v553
    %v1894 = vunpack.c.l.b16 %v554
    %v1895 = vunpack.c.h.b16 %v554
    %v1896 = vunpack.c.l.b16 %v555
    %v1897 = vunpack.c.h.b16 %v555
    %v1898 = vunpack.c.l.b16 %v556
    %v1899 = vunpack.c.h.b16 %v556
    %v1900 = vunpack.c.l.b16 %v557
    %v1901 = vunpack.c.h.b16 %v557
    %v1902 = vunpack.c.l.b16 %v558
    %v1903 = vunpack.c.h.b16 %v558
    %v1904 = vunpack.c.l.b16 %v559
    %v1905 = vunpack.c.h.b16 %v559
    %v1906 = vunpack.c.l.b16 %v560
    %v1907 = vunpack.c.h.b16 %v560
    %v1908 = vunpack.c.l.b16 %v561
    %v1909 = vunpack.c.h.b16 %v561
    %v1910 = vunpack.c.l.b16 %v562
    %v1911 = vunpack.c.h.b16 %v562
    %v1912 = vunpack.c.l.b16 %v563
    %v1913 = vunpack.c.h.b16 %v563
    %v1914 = vunpack.c.l.b16 %v564
    %v1915 = vunpack.c.h.b16 %v564
    %v1916 = vunpack.c.l.b16 %v565
    %v1917 = vunpack.c.h.b16 %v565
    %v1918 = vunpack.c.l.b16 %v566
    %v1919 = vunpack.c.h.b16 %v566
    %v1920 = vunpack.c.l.b16 %v567
    %v1921 = vunpack.c.h.b16 %v567
    %v1922 = vunpack.c.l.b16 %v568
    %v1923 = vunpack.c.h.b16 %v568
    %v1924 = vunpack.c.l.b16 %v569
    %v1925 = vunpack.c.h.b16 %v569
    %v1926 = vunpack.c.l.b16 %v570
    %v1927 = vunpack.c.h.b16 %v570
    %v1928 = vunpack.c.l.b16 %v571
    %v1929 = vunpack.c.h.b16 %v571
    %v1930 = vunpack.c.l.b16 %v572
    %v1931 = vunpack.c.h.b16 %v572
    %v1932 = vunpack.c.l.b16 %v573
    %v1933 = vunpack.c.h.b16 %v573
    %v1934 = vunpack.c.l.b16 %v574
    %v1935 = vunpack.c.h.b16 %v574
    %v1936 = vunpack.c.l.b16 %v575
    %v1937 = vunpack.c.h.b16 %v575
    %v1938 = vunpack.c.l.b16 %v576
    %v1939 = vunpack.c.h.b16 %v576
    %v1940 = vunpack.c.l.b16 %v577
    %v1941 = vunpack.c.h.b16 %v577
    %v1942 = vunpack.c.l.b16 %v578
    %v1943 = vunpack.c.h.b16 %v578
    %v1944 = vunpack.c.l.b16 %v579
    %v1945 = vunpack.c.h.b16 %v579
    %v1946 = vunpack.c.l.b16 %v580
    %v1947 = vunpack.c.h.b16 %v580
    %v1948 = vunpack.c.l.b16 %v581
    %v1949 = vunpack.c.h.b16 %v581
    %v1950 = vunpack.c.l.b16 %v582
    %v1951 = vunpack.c.h.b16 %v582
    %v1952 = vunpack.c.l.b16 %v583
    %v1953 = vunpack.c.h.b16 %v583
    %v1954 = vunpack.c.l.b16 %v584
    %v1955 = vunpack.c.h.b16 %v584
    %v1956 = vunpack.c.l.b16 %v585
    %v1957 = vunpack.c.h.b16 %v585
    %v1958 = vunpack.c.l.b16 %v586
    %v1959 = vunpack.c.h.b16 %v586
    %v1960 = vunpack.c.l.b16 %v587
    %v1961 = vunpack.c.h.b16 %v587
    %v1962 = vunpack.c.l.b16 %v588
    %v1963 = vunpack.c.h.b16 %v588
    %v1964 = vunpack.c.l.b16 %v589
    %v1965 = vunpack.c.h.b16 %v589
    %v1966 = vunpack.c.l.b16 %v590
    %v1967 = vunpack.c.h.b16 %v590
    %v1968 = vunpack.c.l.b16 %v591
    %v1969 = vunpack.c.h.b16 %v591
    %v1970 = vunpack.c.l.b16 %v592
    %v1971 = vunpack.c.h.b16 %v592
    %v1972 = vunpack.c.l.b16 %v593
    %v1973 = vunpack.c.h.b16 %v593
    %v1974 = vunpack.c.l.b16 %v594
    %v1975 = vunpack.c.h.b16 %v594
    %v1976 = vunpack.c.l.b16 %v595
    %v1977 = vunpack.c.h.b16 %v595
    %v1978 = vunpack.c.l.b16 %v596
    %v1979 = vunpack.c.h.b16 %v596
    %v1980 = vunpack.c.l.b16 %v597
    %v1981 = vunpack.c.h.b16 %v597
    %v1982 = vunpack.c.l.b16 %v598
    %v1983 = vunpack.c.h.b16 %v598
    %v1984 = vunpack.c.l.b16 %v599
    %v1985 = vunpack.c.h.b16 %v599
    %v1986 = vunpack.c.l.b16 %v600
    %v1987 = vunpack.c.h.b16 %v600
    %v1988 = vpack.c.b16 %v1100, %v1092
    %v1989 = vpack.c.b16 %v1101, %v1093
    %v1990 = vpack.c.b16 %v1102, %v1094
    %v1991 = vpack.c.b16 %v1103, %v1095
    %v1992 = vpack.c.b16 %v1104, %v1096
    %v1993 = vpack.c.b16 %v1105, %v1097
    %v1994 = vpack.c.b16 %v1106, %v1098
    %v1995 = vpack.c.b16 %v1107, %v1099
    %v1996 = vpack.c.b16 %v1116, %v1108
    %v1997 = vpack.c.b16 %v1117, %v1109
    %v1998 = vpack.c.b16 %v1118, %v1110
    %v1999 = vpack.c.b16 %v1119, %v1111
    %v2000 = vpack.c.b16 %v1120, %v1112
    %v2001 = vpack.c.b16 %v1121, %v1113
    %v2002 = vpack.c.b16 %v1122, %v1114
    %v2003 = vpack.c.b16 %v1123, %v1115
    %v2004 = vpack.c.b16 %v1132, %v1124
    %v2005 = vpack.c.b16 %v1133, %v1125
    %v2006 = vpack.c.b16 %v1134, %v1126
    %v2007 = vpack.c.b16 %v1135, %v1127
    %v2008 = vpack.c.b16 %v1136, %v1128
    %v2009 = vpack.c.b16 %v1137, %v1129
    %v2010 = vpack.c.b16 %v1138, %v1130
    %v2011 = vpack.c.b16 %v1139, %v1131
    %v2012 = vpack.c.b16 %v1148, %v1140
    %v2013 = vpack.c.b16 %v1149, %v1141
    %v2014 = vpack.c.b16 %v1150, %v1142
    %v2015 = vpack.c.b16 %v1151, %v1143
    %v2016 = vpack.c.b16 %v1152, %v1144
    %v2017 = vpack.c.b16 %v1153, %v1145
    %v2018 = vpack.c.b16 %v1154, %v1146
    %v2019 = vpack.c.b16 %v1155, %v1147
    %v2020 = vpack.c.b16 %v1164, %v1156
    %v2021 = vpack.c.b16 %v1165, %v1157
    %v2022 = vpack.c.b16 %v1166, %v1158
    %v2023 = vpack.c.b16 %v1167, %v1159
    %v2024 = vpack.c.b16 %v1168, %v1160
    %v2025 = vpack.c.b16 %v1169, %v1161
    %v2026 = vpack.c.b16 %v1170, %v1162
    %v2027 = vpack.c.b16 %v1171, %v1163
    %v2028 = vpack.c.b16 %v1180, %v1172
    %v2029 = vpack.c.b16 %v1181, %v1173
    %v2030 = vpack.c.b16 %v1182, %v1174
    %v2031 = vpack.c.b16 %v1183, %v1175
    %v2032 = vpack.c.b16 %v1184, %v1176
    %v2033 = vpack.c.b16 %v1185, %v1177
    %v2034 = vpack.c.b16 %v1186, %v1178
    %v2035 = vpack.c.b16 %v1187, %v1179
    %v2036 = vpack.c.b16 %v1196, %v1188
    %v2037 = vpack.c.b16 %v1197, %v1189
    %v2038 = vpack.c.b16 %v1198, %v1190
    %v2039 = vpack.c.b16 %v1199, %v1191
    %v2040 = vpack.c.b16 %v1200, %v1192
    %v2041 = vpack.c.b16 %v1201, %v1193
    %v2042 = vpack.c.b16 %v1202, %v1194
    %v2043 = vpack.c.b16 %v1203, %v1195
    %v2044 = vpack.c.b16 %v1212, %v1204
    %v2045 = vpack.c.b16 %v1213, %v1205
    %v2046 = vpack.c.b16 %v1214, %v1206
    %v2047 = vpack.c.b16 %v1215, %v1207
    %v2048 = vpack.c.b16 %v1216, %v1208
    %v2049 = vpack.c.b16 %v1217, %v1209
    %v2050 = vpack.c.b16 %v1218, %v1210
    %v2051 = vpack.c.b16 %v1219, %v1211
    %v2052 = vpack.c.b16 %v1228, %v1220
    %v2053 = vpack.c.b16 %v1229, %v1221
    %v2054 = vpack.c.b16 %v1230, %v1222
    %v2055 = vpack.c.b16 %v1231, %v1223
    %v2056 = vpack.c.b16 %v1232, %v1224
    %v2057 = vpack.c.b16 %v1233, %v1225
    %v2058 = vpack.c.b16 %v1234, %v1226
    %v2059 = vpack.c.b16 %v1235, %v1227
    %v2060 = vpack.c.b16 %v1244, %v1236
    %v2061 = vpack.c.b16 %v1245, %v1237
    %v2062 = vpack.c.b16 %v1246, %v1238
    %v2063 = vpack.c.b16 %v1247, %v1239
    %v2064 = vpack.c.b16 %v1248, %v1240
    %v2065 = vpack.c.b16 %v1249, %v1241
    %v2066 = vpack.c.b16 %v1250, %v1242
    %v2067 = vpack.c.b16 %v1251, %v1243
    %v2068 = vpack.c.b16 %v1260, %v1252
    %v2069 = vpack.c.b16 %v1261, %v1253
    %v2070 = vpack.c.b16 %v1262, %v1254
    %v2071 = vpack.c.b16 %v1263, %v1255
    %v2072 = vpack.c.b16 %v1264, %v1256
    %v2073 = vpack.c.b16 %v1265, %v1257
    %v2074 = vpack.c.b16 %v1266, %v1258
    %v2075 = vpack.c.b16 %v1267, %v1259
    %v2076 = vpack.c.b16 %v1276, %v1268
    %v2077 = vpack.c.b16 %v1277, %v1269
    %v2078 = vpack.c.b16 %v1278, %v1270
    %v2079 = vpack.c.b16 %v1279, %v1271
    %v2080 = vpack.c.b16 %v1280, %v1272
    %v2081 = vpack.c.b16 %v1281, %v1273
    %v2082 = vpack.c.b16 %v1282, %v1274
    %v2083 = vpack.c.b16 %v1283, %v1275
    %v2084 = vpack.c.b16 %v1292, %v1284
    %v2085 = vpack.c.b16 %v1293, %v1285
    %v2086 = vpack.c.b16 %v1294, %v1286
    %v2087 = vpack.c.b16 %v1295, %v1287
    %v2088 = vpack.c.b16 %v1296, %v1288
    %v2089 = vpack.c.b16 %v1297, %v1289
    %v2090 = vpack.c.b16 %v1298, %v1290
    %v2091 = vpack.c.b16 %v1299, %v1291
    %v2092 = vpack.c.b16 %v1308, %v1300
    %v2093 = vpack.c.b16 %v1309, %v1301
    %v2094 = vpack.c.b16 %v1310, %v1302
    %v2095 = vpack.c.b16 %v1311, %v1303
    %v2096 = vpack.c.b16 %v1312, %v1304
    %v2097 = vpack.c.b16 %v1313, %v1305
    %v2098 = vpack.c.b16 %v1314, %v1306
    %v2099 = vpack.c.b16 %v1315, %v1307
    %v2100 = vpack.c.b16 %v1324, %v1316
    %v2101 = vpack.c.b16 %v1325, %v1317
    %v2102 = vpack.c.b16 %v1326, %v1318
    %v2103 = vpack.c.b16 %v1327, %v1319
    %v2104 = vpack.c.b16 %v1328, %v1320
    %v2105 = vpack.c.b16 %v1329, %v1321
    %v2106 = vpack.c.b16 %v1330, %v1322
    %v2107 = vpack.c.b16 %v1331, %v1323
    %v2108 = vpack.c.b16 %v1340, %v1332
    %v2109 = vpack.c.b16 %v1341, %v1333
    %v2110 = vpack.c.b16 %v1342, %v1334
    %v2111 = vpack.c.b16 %v1343, %v1335
    %v2112 = vpack.c.b16 %v1344, %v1336
    %v2113 = vpack.c.b16 %v1345, %v1337
    %v2114 = vpack.c.b16 %v1346, %v1338
    %v2115 = vpack.c.b16 %v1347, %v1339
    %v2116 = vpack.c.b16 %v1356, %v1348
    %v2117 = vpack.c.b16 %v1357, %v1349
    %v2118 = vpack.c.b16 %v1358, %v1350
    %v2119 = vpack.c.b16 %v1359, %v1351
    %v2120 = vpack.c.b16 %v1360, %v1352
    %v2121 = vpack.c.b16 %v1361, %v1353
    %v2122 = vpack.c.b16 %v1362, %v1354
    %v2123 = vpack.c.b16 %v1363, %v1355
    %v2124 = vpack.c.b16 %v1372, %v1364
    %v2125 = vpack.c.b16 %v1373, %v1365
    %v2126 = vpack.c.b16 %v1374, %v1366
    %v2127 = vpack.c.b16 %v1375, %v1367
    %v2128 = vpack.c.b16 %v1376, %v1368
    %v2129 = vpack.c.b16 %v1377, %v1369
    %v2130 = vpack.c.b16 %v1378, %v1370
    %v2131 = vpack.c.b16 %v1379, %v1371
    %v2132 = vpack.c.b16 %v1388, %v1380
    %v2133 = vpack.c.b16 %v1389, %v1381
    %v2134 = vpack.c.b16 %v1390, %v1382
    %v2135 = vpack.c.b16 %v1391, %v1383
    %v2136 = vpack.c.b16 %v1392, %v1384
    %v2137 = vpack.c.b16 %v1393, %v1385
    %v2138 = vpack.c.b16 %v1394, %v1386
    %v2139 = vpack.c.b16 %v1395, %v1387
    %v2140 = vpack.c.b16 %v1404, %v1396
    %v2141 = vpack.c.b16 %v1405, %v1397
    %v2142 = vpack.c.b16 %v1406, %v1398
    %v2143 = vpack.c.b16 %v1407, %v1399
    %v2144 = vpack.c.b16 %v1408, %v1400
    %v2145 = vpack.c.b16 %v1409, %v1401
    %v2146 = vpack.c.b16 %v1410, %v1402
    %v2147 = vpack.c.b16 %v1411, %v1403
    %v2148 = vpack.c.b16 %v1420, %v1412
    %v2149 = vpack.c.b16 %v1421, %v1413
    %v2150 = vpack.c.b16 %v1422, %v1414
    %v2151 = vpack.c.b16 %v1423, %v1415
    %v2152 = vpack.c.b16 %v1424, %v1416
    %v2153 = vpack.c.b16 %v1425, %v1417
    %v2154 = vpack.c.b16 %v1426, %v1418
    %v2155 = vpack.c.b16 %v1427, %v1419
    %v2156 = vpack.c.b16 %v1436, %v1428
    %v2157 = vpack.c.b16 %v1437, %v1429
    %v2158 = vpack.c.b16 %v1438, %v1430
    %v2159 = vpack.c.b16 %v1439, %v1431
    %v2160 = vpack.c.b16 %v1440, %v1432
    %v2161 = vpack.c.b16 %v1441, %v1433
    %v2162 = vpack.c.b16 %v1442, %v1434
    %v2163 = vpack.c.b16 %v1443, %v1435
    %v2164 = vpack.c.b16 %v1452, %v1444
    %v2165 = vpack.c.b16 %v1453, %v1445
    %v2166 = vpack.c.b16 %v1454, %v1446
    %v2167 = vpack.c.b16 %v1455, %v1447
    %v2168 = vpack.c.b16 %v1456, %v1448
    %v2169 = vpack.c.b16 %v1457, %v1449
    %v2170 = vpack.c.b16 %v1458, %v1450
    %v2171 = vpack.c.b16 %v1459, %v1451
    %v2172 = vpack.c.b16 %v1468, %v1460
    %v2173 = vpack.c.b16 %v1469, %v1461
    %v2174 = vpack.c.b16 %v1470, %v1462
    %v2175 = vpack.c.b16 %v1471, %v1463
    %v2176 = vpack.c.b16 %v1472, %v1464
    %v2177 = vpack.c.b16 %v1473, %v1465
    %v2178 = vpack.c.b16 %v1474, %v1466
    %v2179 = vpack.c.b16 %v1475, %v1467
    %v2180 = vpack.c.b16 %v1484, %v1476
    %v2181 = vpack.c.b16 %v1485, %v1477
    %v2182 = vpack.c.b16 %v1486, %v1478
    %v2183 = vpack.c.b16 %v1487, %v1479
    %v2184 = vpack.c.b16 %v1488, %v1480
    %v2185 = vpack.c.b16 %v1489, %v1481
    %v2186 = vpack.c.b16 %v1490, %v1482
    %v2187 = vpack.c.b16 %v1491, %v1483
    %v2188 = vpack.c.b16 %v1500, %v1492
    %v2189 = vpack.c.b16 %v1501, %v1493
    %v2190 = vpack.c.b16 %v1502, %v1494
    %v2191 = vpack.c.b16 %v1503, %v1495
    %v2192 = vpack.c.b16 %v1504, %v1496
    %v2193 = vpack.c.b16 %v1505, %v1497
    %v2194 = vpack.c.b16 %v1506, %v1498
    %v2195 = vpack.c.b16 %v1507, %v1499
    %v2196 = vpack.c.b16 %v1516, %v1508
    %v2197 = vpack.c.b16 %v1517, %v1509
    %v2198 = vpack.c.b16 %v1518, %v1510
    %v2199 = vpack.c.b16 %v1519, %v1511
    %v2200 = vpack.c.b16 %v1520, %v1512
    %v2201 = vpack.c.b16 %v1521, %v1513
    %v2202 = vpack.c.b16 %v1522, %v1514
    %v2203 = vpack.c.b16 %v1523, %v1515
    %v2204 = vpack.c.b16 %v1532, %v1524
    %v2205 = vpack.c.b16 %v1533, %v1525
    %v2206 = vpack.c.b16 %v1534, %v1526
    %v2207 = vpack.c.b16 %v1535, %v1527
    %v2208 = vpack.c.b16 %v1536, %v1528
    %v2209 = vpack.c.b16 %v1537, %v1529
    %v2210 = vpack.c.b16 %v1538, %v1530
    %v2211 = vpack.c.b16 %v1539, %v1531
    %v2212 = vpack.c.b16 %v1548, %v1540
    %v2213 = vpack.c.b16 %v1549, %v1541
    %v2214 = vpack.c.b16 %v1550, %v1542
    %v2215 = vpack.c.b16 %v1551, %v1543
    %v2216 = vpack.c.b16 %v1552, %v1544
    %v2217 = vpack.c.b16 %v1553, %v1545
    %v2218 = vpack.c.b16 %v1554, %v1546
    %v2219 = vpack.c.b16 %v1555, %v1547
    %v2220 = vpack.c.b16 %v1564, %v1556
    %v2221 = vpack.c.b16 %v1565, %v1557
    %v2222 = vpack.c.b16 %v1566, %v1558
    %v2223 = vpack.c.b16 %v1567, %v1559
    %v2224 = vpack.c.b16 %v1568, %v1560
    %v2225 = vpack.c.b16 %v1569, %v1561
    %v2226 = vpack.c.b16 %v1570, %v1562
    %v2227 = vpack.c.b16 %v1571, %v1563
    %v2228 = vpack.c.b16 %v1580, %v1572
    %v2229 = vpack.c.b16 %v1581, %v1573
    %v2230 = vpack.c.b16 %v1582, %v1574
    %v2231 = vpack.c.b16 %v1583, %v1575
    %v2232 = vpack.c.b16 %v1584, %v1576
    %v2233 = vpack.c.b16 %v1585, %v1577
    %v2234 = vpack.c.b16 %v1586, %v1578
    %v2235 = vpack.c.b16 %v1587, %v1579
    %v2236 = vpack.c.b16 %v1596, %v1588
    %v2237 = vpack.c.b16 %v1597, %v1589
    %v2238 = vpack.c.b16 %v1598, %v1590
    %v2239 = vpack.c.b16 %v1599, %v1591
    %v2240 = vpack.c.b16 %v1600, %v1592
    %v2241 = vpack.c.b16 %v1601, %v1593
    %v2242 = vpack.c.b16 %v1602, %v1594
    %v2243 = vpack.c.b16 %v1603, %v1595
    %v2244 = vpack.c.b16 %v1612, %v1604
    %v2245 = vpack.c.b16 %v1613, %v1605
    %v2246 = vpack.c.b16 %v1614, %v1606
    %v2247 = vpack.c.b16 %v1615, %v1607
    %v2248 = vpack.c.b16 %v1616, %v1608
    %v2249 = vpack.c.b16 %v1617, %v1609
    %v2250 = vpack.c.b16 %v1618, %v1610
    %v2251 = vpack.c.b16 %v1619, %v1611
    %v2252 = vpack.c.b16 %v1628, %v1620
    %v2253 = vpack.c.b16 %v1629, %v1621
    %v2254 = vpack.c.b16 %v1630, %v1622
    %v2255 = vpack.c.b16 %v1631, %v1623
    %v2256 = vpack.c.b16 %v1632, %v1624
    %v2257 = vpack.c.b16 %v1633, %v1625
    %v2258 = vpack.c.b16 %v1634, %v1626
    %v2259 = vpack.c.b16 %v1635, %v1627
    %v2260 = vpack.c.b16 %v1644, %v1636
    %v2261 = vpack.c.b16 %v1645, %v1637
    %v2262 = vpack.c.b16 %v1646, %v1638
    %v2263 = vpack.c.b16 %v1647, %v1639
    %v2264 = vpack.c.b16 %v1648, %v1640
    %v2265 = vpack.c.b16 %v1649, %v1641
    %v2266 = vpack.c.b16 %v1650, %v1642
    %v2267 = vpack.c.b16 %v1651, %v1643
    %v2268 = vpack.c.b16 %v1660, %v1652
    %v2269 = vpack.c.b16 %v1661, %v1653
    %v2270 = vpack.c.b16 %v1662, %v1654
    %v2271 = vpack.c.b16 %v1663, %v1655
    %v2272 = vpack.c.b16 %v1664, %v1656
    %v2273 = vpack.c.b16 %v1665, %v1657
    %v2274 = vpack.c.b16 %v1666, %v1658
    %v2275 = vpack.c.b16 %v1667, %v1659
    %v2276 = vpack.c.b16 %v1676, %v1668
    %v2277 = vpack.c.b16 %v1677, %v1669
    %v2278 = vpack.c.b16 %v1678, %v1670
    %v2279 = vpack.c.b16 %v1679, %v1671
    %v2280 = vpack.c.b16 %v1680, %v1672
    %v2281 = vpack.c.b16 %v1681, %v1673
    %v2282 = vpack.c.b16 %v1682, %v1674
    %v2283 = vpack.c.b16 %v1683, %v1675
    %v2284 = vpack.c.b16 %v1692, %v1684
    %v2285 = vpack.c.b16 %v1693, %v1685
    %v2286 = vpack.c.b16 %v1694, %v1686
    %v2287 = vpack.c.b16 %v1695, %v1687
    %v2288 = vpack.c.b16 %v1696, %v1688
    %v2289 = vpack.c.b16 %v1697, %v1689
    %v2290 = vpack.c.b16 %v1698, %v1690
    %v2291 = vpack.c.b16 %v1699, %v1691
    %v2292 = vpack.c.b16 %v1708, %v1700
    %v2293 = vpack.c.b16 %v1709, %v1701
    %v2294 = vpack.c.b16 %v1710, %v1702
    %v2295 = vpack.c.b16 %v1711, %v1703
    %v2296 = vpack.c.b16 %v1712, %v1704
    %v2297 = vpack.c.b16 %v1713, %v1705
    %v2298 = vpack.c.b16 %v1714, %v1706
    %v2299 = vpack.c.b16 %v1715, %v1707
    %v2300 = vpack.c.b16 %v1724, %v1716
    %v2301 = vpack.c.b16 %v1725, %v1717
    %v2302 = vpack.c.b16 %v1726, %v1718
    %v2303 = vpack.c.b16 %v1727, %v1719
    %v2304 = vpack.c.b16 %v1728, %v1720
    %v2305 = vpack.c.b16 %v1729, %v1721
    %v2306 = vpack.c.b16 %v1730, %v1722
    %v2307 = vpack.c.b16 %v1731, %v1723
    %v2308 = vpack.c.b16 %v1740, %v1732
    %v2309 = vpack.c.b16 %v1741, %v1733
    %v2310 = vpack.c.b16 %v1742, %v1734
    %v2311 = vpack.c.b16 %v1743, %v1735
    %v2312 = vpack.c.b16 %v1744, %v1736
    %v2313 = vpack.c.b16 %v1745, %v1737
    %v2314 = vpack.c.b16 %v1746, %v1738
    %v2315 = vpack.c.b16 %v1747, %v1739
    %v2316 = vpack.c.b16 %v1756, %v1748
    %v2317 = vpack.c.b16 %v1757, %v1749
    %v2318 = vpack.c.b16 %v1758, %v1750
    %v2319 = vpack.c.b16 %v1759, %v1751
    %v2320 = vpack.c.b16 %v1760, %v1752
    %v2321 = vpack.c.b16 %v1761, %v1753
    %v2322 = vpack.c.b16 %v1762, %v1754
    %v2323 = vpack.c.b16 %v1763, %v1755
    %v2324 = vpack.c.b16 %v1772, %v1764
    %v2325 = vpack.c.b16 %v1773, %v1765
    %v2326 = vpack.c.b16 %v1774, %v1766
    %v2327 = vpack.c.b16 %v1775, %v1767
    %v2328 = vpack.c.b16 %v1776, %v1768
    %v2329 = vpack.c.b16 %v1777, %v1769
    %v2330 = vpack.c.b16 %v1778, %v1770
    %v2331 = vpack.c.b16 %v1779, %v1771
    %v2332 = vpack.c.b16 %v1788, %v1780
    %v2333 = vpack.c.b16 %v1789, %v1781
    %v2334 = vpack.c.b16 %v1790, %v1782
    %v2335 = vpack.c.b16 %v1791, %v1783
    %v2336 = vpack.c.b16 %v1792, %v1784
    %v2337 = vpack.c.b16 %v1793, %v1785
    %v2338 = vpack.c.b16 %v1794, %v1786
    %v2339 = vpack.c.b16 %v1795, %v1787
    %v2340 = vpack.c.b16 %v1804, %v1796
    %v2341 = vpack.c.b16 %v1805, %v1797
    %v2342 = vpack.c.b16 %v1806, %v1798
    %v2343 = vpack.c.b16 %v1807, %v1799
    %v2344 = vpack.c.b16 %v1808, %v1800
    %v2345 = vpack.c.b16 %v1809, %v1801
    %v2346 = vpack.c.b16 %v1810, %v1802
    %v2347 = vpack.c.b16 %v1811, %v1803
    %v2348 = vpack.c.b16 %v1820, %v1812
    %v2349 = vpack.c.b16 %v1821, %v1813
    %v2350 = vpack.c.b16 %v1822, %v1814
    %v2351 = vpack.c.b16 %v1823, %v1815
    %v2352 = vpack.c.b16 %v1824, %v1816
    %v2353 = vpack.c.b16 %v1825, %v1817
    %v2354 = vpack.c.b16 %v1826, %v1818
    %v2355 = vpack.c.b16 %v1827, %v1819
    %v2356 = vpack.c.b16 %v1836, %v1828
    %v2357 = vpack.c.b16 %v1837, %v1829
    %v2358 = vpack.c.b16 %v1838, %v1830
    %v2359 = vpack.c.b16 %v1839, %v1831
    %v2360 = vpack.c.b16 %v1840, %v1832
    %v2361 = vpack.c.b16 %v1841, %v1833
    %v2362 = vpack.c.b16 %v1842, %v1834
    %v2363 = vpack.c.b16 %v1843, %v1835
    %v2364 = vpack.c.b16 %v1852, %v1844
    %v2365 = vpack.c.b16 %v1853, %v1845
    %v2366 = vpack.c.b16 %v1854, %v1846
    %v2367 = vpack.c.b16 %v1855, %v1847
    %v2368 = vpack.c.b16 %v1856, %v1848
    %v2369 = vpack.c.b16 %v1857, %v1849
    %v2370 = vpack.c.b16 %v1858, %v1850
    %v2371 = vpack.c.b16 %v1859, %v1851
    %v2372 = vpack.c.b16 %v1868, %v1860
    %v2373 = vpack.c.b16 %v1869, %v1861
    %v2374 = vpack.c.b16 %v1870, %v1862
    %v2375 = vpack.c.b16 %v1871, %v1863
    %v2376 = vpack.c.b16 %v1872, %v1864
    %v2377 = vpack.c.b16 %v1873, %v1865
    %v2378 = vpack.c.b16 %v1874, %v1866
    %v2379 = vpack.c.b16 %v1875, %v1867
    %v2380 = vpack.c.b16 %v1884, %v1876
    %v2381 = vpack.c.b16 %v1885, %v1877
    %v2382 = vpack.c.b16 %v1886, %v1878
    %v2383 = vpack.c.b16 %v1887, %v1879
    %v2384 = vpack.c.b16 %v1888, %v1880
    %v2385 = vpack.c.b16 %v1889, %v1881
    %v2386 = vpack.c.b16 %v1890, %v1882
    %v2387 = vpack.c.b16 %v1891, %v1883
    %v2388 = vpack.c.b16 %v1900, %v1892
    %v2389 = vpack.c.b16 %v1901, %v1893
    %v2390 = vpack.c.b16 %v1902, %v1894
    %v2391 = vpack.c.b16 %v1903, %v1895
    %v2392 = vpack.c.b16 %v1904, %v1896
    %v2393 = vpack.c.b16 %v1905, %v1897
    %v2394 = vpack.c.b16 %v1906, %v1898
    %v2395 = vpack.c.b16 %v1907, %v1899
    %v2396 = vpack.c.b16 %v1916, %v1908
    %v2397 = vpack.c.b16 %v1917, %v1909
    %v2398 = vpack.c.b16 %v1918, %v1910
    %v2399 = vpack.c.b16 %v1919, %v1911
    %v2400 = vpack.c.b16 %v1920, %v1912
    %v2401 = vpack.c.b16 %v1921, %v1913
    %v2402 = vpack.c.b16 %v1922, %v1914
    %v2403 = vpack.c.b16 %v1923, %v1915
    %v2404 = vpack.c.b16 %v1932, %v1924
    %v2405 = vpack.c.b16 %v1933, %v1925
    %v2406 = vpack.c.b16 %v1934, %v1926
    %v2407 = vpack.c.b16 %v1935, %v1927
    %v2408 = vpack.c.b16 %v1936, %v1928
    %v2409 = vpack.c.b16 %v1937, %v1929
    %v2410 = vpack.c.b16 %v1938, %v1930
    %v2411 = vpack.c.b16 %v1939, %v1931
    %v2412 = vpack.c.b16 %v1948, %v1940
    %v2413 = vpack.c.b16 %v1949, %v1941
    %v2414 = vpack.c.b16 %v1950, %v1942
    %v2415 = vpack.c.b16 %v1951, %v1943
    %v2416 = vpack.c.b16 %v1952, %v1944
    %v2417 = vpack.c.b16 %v1953, %v1945
    %v2418 = vpack.c.b16 %v1954, %v1946
    %v2419 = vpack.c.b16 %v1955, %v1947
    %v2420 = vpack.c.b16 %v1964, %v1956
    %v2421 = vpack.c.b16 %v1965, %v1957
    %v2422 = vpack.c.b16 %v1966, %v1958
    %v2423 = vpack.c.b16 %v1967, %v1959
    %v2424 = vpack.c.b16 %v1968, %v1960
    %v2425 = vpack.c.b16 %v1969, %v1961
    %v2426 = vpack.c.b16 %v1970, %v1962
    %v2427 = vpack.c.b16 %v1971, %v1963
    %v2428 = vpack.c.b16 %v1980, %v1972
    %v2429 = vpack.c.b16 %v1981, %v1973
    %v2430 = vpack.c.b16 %v1982, %v1974
    %v2431 = vpack.c.b16 %v1983, %v1975
    %v2432 = vpack.c.b16 %v1984, %v1976
    %v2433 = vpack.c.b16 %v1985, %v1977
    %v2434 = vpack.c.b16 %v1986, %v1978
    %v2435 = vpack.c.b16 %v1987, %v1979
    %2884 = vmatpush.bf16.msra.mxu0 %v2044
    %2885 = vmatpush.bf16.msra.mxu0 %v2036
    %2886 = vmatpush.bf16.msra.mxu0 %v2028
    %2887 = vmatpush.bf16.msra.mxu0 %v2020
    %2888 = vmatpush.bf16.msra.mxu0 %v2012
    %2889 = vmatpush.bf16.msra.mxu0 %v2004
    %2890 = vmatpush.bf16.msra.mxu0 %v1996
    %2891 = vmatpush.bf16.msra.mxu0 %v1988
    %2892 = vmatmul.bf16.gmra.mxu0 %v630
    %v2893 = vpop.f32.mrf.mxu0
    %v2894 = vadd.f32 %v603, %v2893
    %v2895 = vpop.f32.mrf.mxu0
    %2896 = vdwg.mxu0
    %2897 = vmatpush.bf16.msra.mxu0 %v2108
    %2898 = vmatpush.bf16.msra.mxu0 %v2100
    %2899 = vmatpush.bf16.msra.mxu0 %v2092
    %2900 = vmatpush.bf16.msra.mxu0 %v2084
    %2901 = vmatpush.bf16.msra.mxu0 %v2076
    %2902 = vmatpush.bf16.msra.mxu0 %v2068
    %2903 = vmatpush.bf16.msra.mxu0 %v2060
    %2904 = vmatpush.bf16.msra.mxu0 %v2052
    %2905 = vmatmul.bf16.gmra.mxu0 %v631
    %v2906 = vpop.f32.mrf.mxu0
    %v2907 = vadd.f32 %v2894, %v2906
    %v2908 = vpop.f32.mrf.mxu0
    %2909 = vdwg.mxu0
    %2910 = vmatpush.bf16.msra.mxu0 %v2172
    %2911 = vmatpush.bf16.msra.mxu0 %v2164
    %2912 = vmatpush.bf16.msra.mxu0 %v2156
    %2913 = vmatpush.bf16.msra.mxu0 %v2148
    %2914 = vmatpush.bf16.msra.mxu0 %v2140
    %2915 = vmatpush.bf16.msra.mxu0 %v2132
    %2916 = vmatpush.bf16.msra.mxu0 %v2124
    %2917 = vmatpush.bf16.msra.mxu0 %v2116
    %2918 = vmatmul.bf16.gmra.mxu0 %v632
    %v2919 = vpop.f32.mrf.mxu0
    %v2920 = vadd.f32 %v2907, %v2919
    %v2921 = vpop.f32.mrf.mxu0
    %2922 = vdwg.mxu0
    %2923 = vmatpush.bf16.msra.mxu0 %v2236
    %2924 = vmatpush.bf16.msra.mxu0 %v2228
    %2925 = vmatpush.bf16.msra.mxu0 %v2220
    %2926 = vmatpush.bf16.msra.mxu0 %v2212
    %2927 = vmatpush.bf16.msra.mxu0 %v2204
    %2928 = vmatpush.bf16.msra.mxu0 %v2196
    %2929 = vmatpush.bf16.msra.mxu0 %v2188
    %2930 = vmatpush.bf16.msra.mxu0 %v2180
    %2931 = vmatmul.bf16.gmra.mxu0 %v633
    %v2932 = vpop.f32.mrf.mxu0
    %v2933 = vadd.f32 %v2920, %v2932
    %v2934 = vpop.f32.mrf.mxu0
    %2935 = vdwg.mxu0
    %2936 = vmatpush.bf16.msra.mxu0 %v2300
    %2937 = vmatpush.bf16.msra.mxu0 %v2292
    %2938 = vmatpush.bf16.msra.mxu0 %v2284
    %2939 = vmatpush.bf16.msra.mxu0 %v2276
    %2940 = vmatpush.bf16.msra.mxu0 %v2268
    %2941 = vmatpush.bf16.msra.mxu0 %v2260
    %2942 = vmatpush.bf16.msra.mxu0 %v2252
    %2943 = vmatpush.bf16.msra.mxu0 %v2244
    %2944 = vmatmul.bf16.gmra.mxu0 %v634
    %v2945 = vpop.f32.mrf.mxu0
    %v2946 = vadd.f32 %v2933, %v2945
    %v2947 = vpop.f32.mrf.mxu0
    %2948 = vdwg.mxu0
    %2949 = vmatpush.bf16.msra.mxu0 %v2364
    %2950 = vmatpush.bf16.msra.mxu0 %v2356
    %2951 = vmatpush.bf16.msra.mxu0 %v2348
    %2952 = vmatpush.bf16.msra.mxu0 %v2340
    %2953 = vmatpush.bf16.msra.mxu0 %v2332
    %2954 = vmatpush.bf16.msra.mxu0 %v2324
    %2955 = vmatpush.bf16.msra.mxu0 %v2316
    %2956 = vmatpush.bf16.msra.mxu0 %v2308
    %2957 = vmatmul.bf16.gmra.mxu0 %v635
    %v2958 = vpop.f32.mrf.mxu0
    %v2959 = vadd.f32 %v2946, %v2958
    %v2960 = vpop.f32.mrf.mxu0
    %2961 = vdwg.mxu0
    %2962 = vmatpush.bf16.msra.mxu0 %v2428
    %2963 = vmatpush.bf16.msra.mxu0 %v2420
    %2964 = vmatpush.bf16.msra.mxu0 %v2412
    %2965 = vmatpush.bf16.msra.mxu0 %v2404
    %2966 = vmatpush.bf16.msra.mxu0 %v2396
    %2967 = vmatpush.bf16.msra.mxu0 %v2388
    %2968 = vmatpush.bf16.msra.mxu0 %v2380
    %2969 = vmatpush.bf16.msra.mxu0 %v2372
    %2970 = vmatmul.bf16.gmra.mxu0 %v636
    %v2971 = vpop.f32.mrf.mxu0
    %v2972 = vadd.f32 %v2959, %v2971
    %v2973 = vpop.f32.mrf.mxu0
    %2974 = vdwg.mxu0
    %2975 = vmatpush.bf16.msra.mxu0 %v2045
    %2976 = vmatpush.bf16.msra.mxu0 %v2037
    %2977 = vmatpush.bf16.msra.mxu0 %v2029
    %2978 = vmatpush.bf16.msra.mxu0 %v2021
    %2979 = vmatpush.bf16.msra.mxu0 %v2013
    %2980 = vmatpush.bf16.msra.mxu0 %v2005
    %2981 = vmatpush.bf16.msra.mxu0 %v1997
    %2982 = vmatpush.bf16.msra.mxu0 %v1989
    %2983 = vmatmul.bf16.gmra.mxu0 %v630
    %v2984 = vpop.f32.mrf.mxu0
    %v2985 = vadd.f32 %v604, %v2984
    %v2986 = vpop.f32.mrf.mxu0
    %2987 = vdwg.mxu0
    %2988 = vmatpush.bf16.msra.mxu0 %v2109
    %2989 = vmatpush.bf16.msra.mxu0 %v2101
    %2990 = vmatpush.bf16.msra.mxu0 %v2093
    %2991 = vmatpush.bf16.msra.mxu0 %v2085
    %2992 = vmatpush.bf16.msra.mxu0 %v2077
    %2993 = vmatpush.bf16.msra.mxu0 %v2069
    %2994 = vmatpush.bf16.msra.mxu0 %v2061
    %2995 = vmatpush.bf16.msra.mxu0 %v2053
    %2996 = vmatmul.bf16.gmra.mxu0 %v631
    %v2997 = vpop.f32.mrf.mxu0
    %v2998 = vadd.f32 %v2985, %v2997
    %v2999 = vpop.f32.mrf.mxu0
    %3000 = vdwg.mxu0
    %3001 = vmatpush.bf16.msra.mxu0 %v2173
    %3002 = vmatpush.bf16.msra.mxu0 %v2165
    %3003 = vmatpush.bf16.msra.mxu0 %v2157
    %3004 = vmatpush.bf16.msra.mxu0 %v2149
    %3005 = vmatpush.bf16.msra.mxu0 %v2141
    %3006 = vmatpush.bf16.msra.mxu0 %v2133
    %3007 = vmatpush.bf16.msra.mxu0 %v2125
    %3008 = vmatpush.bf16.msra.mxu0 %v2117
    %3009 = vmatmul.bf16.gmra.mxu0 %v632
    %v3010 = vpop.f32.mrf.mxu0
    %v3011 = vadd.f32 %v2998, %v3010
    %v3012 = vpop.f32.mrf.mxu0
    %3013 = vdwg.mxu0
    %3014 = vmatpush.bf16.msra.mxu0 %v2237
    %3015 = vmatpush.bf16.msra.mxu0 %v2229
    %3016 = vmatpush.bf16.msra.mxu0 %v2221
    %3017 = vmatpush.bf16.msra.mxu0 %v2213
    %3018 = vmatpush.bf16.msra.mxu0 %v2205
    %3019 = vmatpush.bf16.msra.mxu0 %v2197
    %3020 = vmatpush.bf16.msra.mxu0 %v2189
    %3021 = vmatpush.bf16.msra.mxu0 %v2181
    %3022 = vmatmul.bf16.gmra.mxu0 %v633
    %v3023 = vpop.f32.mrf.mxu0
    %v3024 = vadd.f32 %v3011, %v3023
    %v3025 = vpop.f32.mrf.mxu0
    %3026 = vdwg.mxu0
    %3027 = vmatpush.bf16.msra.mxu0 %v2301
    %3028 = vmatpush.bf16.msra.mxu0 %v2293
    %3029 = vmatpush.bf16.msra.mxu0 %v2285
    %3030 = vmatpush.bf16.msra.mxu0 %v2277
    %3031 = vmatpush.bf16.msra.mxu0 %v2269
    %3032 = vmatpush.bf16.msra.mxu0 %v2261
    %3033 = vmatpush.bf16.msra.mxu0 %v2253
    %3034 = vmatpush.bf16.msra.mxu0 %v2245
    %3035 = vmatmul.bf16.gmra.mxu0 %v634
    %v3036 = vpop.f32.mrf.mxu0
    %v3037 = vadd.f32 %v3024, %v3036
    %v3038 = vpop.f32.mrf.mxu0
    %3039 = vdwg.mxu0
    %3040 = vmatpush.bf16.msra.mxu0 %v2365
    %3041 = vmatpush.bf16.msra.mxu0 %v2357
    %3042 = vmatpush.bf16.msra.mxu0 %v2349
    %3043 = vmatpush.bf16.msra.mxu0 %v2341
    %3044 = vmatpush.bf16.msra.mxu0 %v2333
    %3045 = vmatpush.bf16.msra.mxu0 %v2325
    %3046 = vmatpush.bf16.msra.mxu0 %v2317
    %3047 = vmatpush.bf16.msra.mxu0 %v2309
    %3048 = vmatmul.bf16.gmra.mxu0 %v635
    %v3049 = vpop.f32.mrf.mxu0
    %v3050 = vadd.f32 %v3037, %v3049
    %v3051 = vpop.f32.mrf.mxu0
    %3052 = vdwg.mxu0
    %3053 = vmatpush.bf16.msra.mxu0 %v2429
    %3054 = vmatpush.bf16.msra.mxu0 %v2421
    %3055 = vmatpush.bf16.msra.mxu0 %v2413
    %3056 = vmatpush.bf16.msra.mxu0 %v2405
    %3057 = vmatpush.bf16.msra.mxu0 %v2397
    %3058 = vmatpush.bf16.msra.mxu0 %v2389
    %3059 = vmatpush.bf16.msra.mxu0 %v2381
    %3060 = vmatpush.bf16.msra.mxu0 %v2373
    %3061 = vmatmul.bf16.gmra.mxu0 %v636
    %v3062 = vpop.f32.mrf.mxu0
    %v3063 = vadd.f32 %v3050, %v3062
    %v3064 = vpop.f32.mrf.mxu0
    %3065 = vdwg.mxu0
    %3066 = vmatpush.bf16.msra.mxu0 %v2046
    %3067 = vmatpush.bf16.msra.mxu0 %v2038
    %3068 = vmatpush.bf16.msra.mxu0 %v2030
    %3069 = vmatpush.bf16.msra.mxu0 %v2022
    %3070 = vmatpush.bf16.msra.mxu0 %v2014
    %3071 = vmatpush.bf16.msra.mxu0 %v2006
    %3072 = vmatpush.bf16.msra.mxu0 %v1998
    %3073 = vmatpush.bf16.msra.mxu0 %v1990
    %3074 = vmatmul.bf16.gmra.mxu0 %v630
    %v3075 = vpop.f32.mrf.mxu0
    %v3076 = vadd.f32 %v605, %v3075
    %v3077 = vpop.f32.mrf.mxu0
    %3078 = vdwg.mxu0
    %3079 = vmatpush.bf16.msra.mxu0 %v2110
    %3080 = vmatpush.bf16.msra.mxu0 %v2102
    %3081 = vmatpush.bf16.msra.mxu0 %v2094
    %3082 = vmatpush.bf16.msra.mxu0 %v2086
    %3083 = vmatpush.bf16.msra.mxu0 %v2078
    %3084 = vmatpush.bf16.msra.mxu0 %v2070
    %3085 = vmatpush.bf16.msra.mxu0 %v2062
    %3086 = vmatpush.bf16.msra.mxu0 %v2054
    %3087 = vmatmul.bf16.gmra.mxu0 %v631
    %v3088 = vpop.f32.mrf.mxu0
    %v3089 = vadd.f32 %v3076, %v3088
    %v3090 = vpop.f32.mrf.mxu0
    %3091 = vdwg.mxu0
    %3092 = vmatpush.bf16.msra.mxu0 %v2174
    %3093 = vmatpush.bf16.msra.mxu0 %v2166
    %3094 = vmatpush.bf16.msra.mxu0 %v2158
    %3095 = vmatpush.bf16.msra.mxu0 %v2150
    %3096 = vmatpush.bf16.msra.mxu0 %v2142
    %3097 = vmatpush.bf16.msra.mxu0 %v2134
    %3098 = vmatpush.bf16.msra.mxu0 %v2126
    %3099 = vmatpush.bf16.msra.mxu0 %v2118
    %3100 = vmatmul.bf16.gmra.mxu0 %v632
    %v3101 = vpop.f32.mrf.mxu0
    %v3102 = vadd.f32 %v3089, %v3101
    %v3103 = vpop.f32.mrf.mxu0
    %3104 = vdwg.mxu0
    %3105 = vmatpush.bf16.msra.mxu0 %v2238
    %3106 = vmatpush.bf16.msra.mxu0 %v2230
    %3107 = vmatpush.bf16.msra.mxu0 %v2222
    %3108 = vmatpush.bf16.msra.mxu0 %v2214
    %3109 = vmatpush.bf16.msra.mxu0 %v2206
    %3110 = vmatpush.bf16.msra.mxu0 %v2198
    %3111 = vmatpush.bf16.msra.mxu0 %v2190
    %3112 = vmatpush.bf16.msra.mxu0 %v2182
    %3113 = vmatmul.bf16.gmra.mxu0 %v633
    %v3114 = vpop.f32.mrf.mxu0
    %v3115 = vadd.f32 %v3102, %v3114
    %v3116 = vpop.f32.mrf.mxu0
    %3117 = vdwg.mxu0
    %3118 = vmatpush.bf16.msra.mxu0 %v2302
    %3119 = vmatpush.bf16.msra.mxu0 %v2294
    %3120 = vmatpush.bf16.msra.mxu0 %v2286
    %3121 = vmatpush.bf16.msra.mxu0 %v2278
    %3122 = vmatpush.bf16.msra.mxu0 %v2270
    %3123 = vmatpush.bf16.msra.mxu0 %v2262
    %3124 = vmatpush.bf16.msra.mxu0 %v2254
    %3125 = vmatpush.bf16.msra.mxu0 %v2246
    %3126 = vmatmul.bf16.gmra.mxu0 %v634
    %v3127 = vpop.f32.mrf.mxu0
    %v3128 = vadd.f32 %v3115, %v3127
    %v3129 = vpop.f32.mrf.mxu0
    %3130 = vdwg.mxu0
    %3131 = vmatpush.bf16.msra.mxu0 %v2366
    %3132 = vmatpush.bf16.msra.mxu0 %v2358
    %3133 = vmatpush.bf16.msra.mxu0 %v2350
    %3134 = vmatpush.bf16.msra.mxu0 %v2342
    %3135 = vmatpush.bf16.msra.mxu0 %v2334
    %3136 = vmatpush.bf16.msra.mxu0 %v2326
    %3137 = vmatpush.bf16.msra.mxu0 %v2318
    %3138 = vmatpush.bf16.msra.mxu0 %v2310
    %3139 = vmatmul.bf16.gmra.mxu0 %v635
    %v3140 = vpop.f32.mrf.mxu0
    %v3141 = vadd.f32 %v3128, %v3140
    %v3142 = vpop.f32.mrf.mxu0
    %3143 = vdwg.mxu0
    %3144 = vmatpush.bf16.msra.mxu0 %v2430
    %3145 = vmatpush.bf16.msra.mxu0 %v2422
    %3146 = vmatpush.bf16.msra.mxu0 %v2414
    %3147 = vmatpush.bf16.msra.mxu0 %v2406
    %3148 = vmatpush.bf16.msra.mxu0 %v2398
    %3149 = vmatpush.bf16.msra.mxu0 %v2390
    %3150 = vmatpush.bf16.msra.mxu0 %v2382
    %3151 = vmatpush.bf16.msra.mxu0 %v2374
    %3152 = vmatmul.bf16.gmra.mxu0 %v636
    %v3153 = vpop.f32.mrf.mxu0
    %v3154 = vadd.f32 %v3141, %v3153
    %v3155 = vpop.f32.mrf.mxu0
    %3156 = vdwg.mxu0
    %3157 = vmatpush.bf16.msra.mxu0 %v2047
    %3158 = vmatpush.bf16.msra.mxu0 %v2039
    %3159 = vmatpush.bf16.msra.mxu0 %v2031
    %3160 = vmatpush.bf16.msra.mxu0 %v2023
    %3161 = vmatpush.bf16.msra.mxu0 %v2015
    %3162 = vmatpush.bf16.msra.mxu0 %v2007
    %3163 = vmatpush.bf16.msra.mxu0 %v1999
    %3164 = vmatpush.bf16.msra.mxu0 %v1991
    %3165 = vmatmul.bf16.gmra.mxu0 %v630
    %v3166 = vpop.f32.mrf.mxu0
    %v3167 = vadd.f32 %v606, %v3166
    %v3168 = vpop.f32.mrf.mxu0
    %3169 = vdwg.mxu0
    %3170 = vmatpush.bf16.msra.mxu0 %v2111
    %3171 = vmatpush.bf16.msra.mxu0 %v2103
    %3172 = vmatpush.bf16.msra.mxu0 %v2095
    %3173 = vmatpush.bf16.msra.mxu0 %v2087
    %3174 = vmatpush.bf16.msra.mxu0 %v2079
    %3175 = vmatpush.bf16.msra.mxu0 %v2071
    %3176 = vmatpush.bf16.msra.mxu0 %v2063
    %3177 = vmatpush.bf16.msra.mxu0 %v2055
    %3178 = vmatmul.bf16.gmra.mxu0 %v631
    %v3179 = vpop.f32.mrf.mxu0
    %v3180 = vadd.f32 %v3167, %v3179
    %v3181 = vpop.f32.mrf.mxu0
    %3182 = vdwg.mxu0
    %3183 = vmatpush.bf16.msra.mxu0 %v2175
    %3184 = vmatpush.bf16.msra.mxu0 %v2167
    %3185 = vmatpush.bf16.msra.mxu0 %v2159
    %3186 = vmatpush.bf16.msra.mxu0 %v2151
    %3187 = vmatpush.bf16.msra.mxu0 %v2143
    %3188 = vmatpush.bf16.msra.mxu0 %v2135
    %3189 = vmatpush.bf16.msra.mxu0 %v2127
    %3190 = vmatpush.bf16.msra.mxu0 %v2119
    %3191 = vmatmul.bf16.gmra.mxu0 %v632
    %v3192 = vpop.f32.mrf.mxu0
    %v3193 = vadd.f32 %v3180, %v3192
    %v3194 = vpop.f32.mrf.mxu0
    %3195 = vdwg.mxu0
    %3196 = vmatpush.bf16.msra.mxu0 %v2239
    %3197 = vmatpush.bf16.msra.mxu0 %v2231
    %3198 = vmatpush.bf16.msra.mxu0 %v2223
    %3199 = vmatpush.bf16.msra.mxu0 %v2215
    %3200 = vmatpush.bf16.msra.mxu0 %v2207
    %3201 = vmatpush.bf16.msra.mxu0 %v2199
    %3202 = vmatpush.bf16.msra.mxu0 %v2191
    %3203 = vmatpush.bf16.msra.mxu0 %v2183
    %3204 = vmatmul.bf16.gmra.mxu0 %v633
    %v3205 = vpop.f32.mrf.mxu0
    %v3206 = vadd.f32 %v3193, %v3205
    %v3207 = vpop.f32.mrf.mxu0
    %3208 = vdwg.mxu0
    %3209 = vmatpush.bf16.msra.mxu0 %v2303
    %3210 = vmatpush.bf16.msra.mxu0 %v2295
    %3211 = vmatpush.bf16.msra.mxu0 %v2287
    %3212 = vmatpush.bf16.msra.mxu0 %v2279
    %3213 = vmatpush.bf16.msra.mxu0 %v2271
    %3214 = vmatpush.bf16.msra.mxu0 %v2263
    %3215 = vmatpush.bf16.msra.mxu0 %v2255
    %3216 = vmatpush.bf16.msra.mxu0 %v2247
    %3217 = vmatmul.bf16.gmra.mxu0 %v634
    %v3218 = vpop.f32.mrf.mxu0
    %v3219 = vadd.f32 %v3206, %v3218
    %v3220 = vpop.f32.mrf.mxu0
    %3221 = vdwg.mxu0
    %3222 = vmatpush.bf16.msra.mxu0 %v2367
    %3223 = vmatpush.bf16.msra.mxu0 %v2359
    %3224 = vmatpush.bf16.msra.mxu0 %v2351
    %3225 = vmatpush.bf16.msra.mxu0 %v2343
    %3226 = vmatpush.bf16.msra.mxu0 %v2335
    %3227 = vmatpush.bf16.msra.mxu0 %v2327
    %3228 = vmatpush.bf16.msra.mxu0 %v2319
    %3229 = vmatpush.bf16.msra.mxu0 %v2311
    %3230 = vmatmul.bf16.gmra.mxu0 %v635
    %v3231 = vpop.f32.mrf.mxu0
    %v3232 = vadd.f32 %v3219, %v3231
    %v3233 = vpop.f32.mrf.mxu0
    %3234 = vdwg.mxu0
    %3235 = vmatpush.bf16.msra.mxu0 %v2431
    %3236 = vmatpush.bf16.msra.mxu0 %v2423
    %3237 = vmatpush.bf16.msra.mxu0 %v2415
    %3238 = vmatpush.bf16.msra.mxu0 %v2407
    %3239 = vmatpush.bf16.msra.mxu0 %v2399
    %3240 = vmatpush.bf16.msra.mxu0 %v2391
    %3241 = vmatpush.bf16.msra.mxu0 %v2383
    %3242 = vmatpush.bf16.msra.mxu0 %v2375
    %3243 = vmatmul.bf16.gmra.mxu0 %v636
    %v3244 = vpop.f32.mrf.mxu0
    %v3245 = vadd.f32 %v3232, %v3244
    %v3246 = vpop.f32.mrf.mxu0
    %3247 = vdwg.mxu0
    %3248 = vmatpush.bf16.msra.mxu0 %v2048
    %3249 = vmatpush.bf16.msra.mxu0 %v2040
    %3250 = vmatpush.bf16.msra.mxu0 %v2032
    %3251 = vmatpush.bf16.msra.mxu0 %v2024
    %3252 = vmatpush.bf16.msra.mxu0 %v2016
    %3253 = vmatpush.bf16.msra.mxu0 %v2008
    %3254 = vmatpush.bf16.msra.mxu0 %v2000
    %3255 = vmatpush.bf16.msra.mxu0 %v1992
    %3256 = vmatmul.bf16.gmra.mxu0 %v630
    %v3257 = vpop.f32.mrf.mxu0
    %v3258 = vadd.f32 %v607, %v3257
    %v3259 = vpop.f32.mrf.mxu0
    %3260 = vdwg.mxu0
    %3261 = vmatpush.bf16.msra.mxu0 %v2112
    %3262 = vmatpush.bf16.msra.mxu0 %v2104
    %3263 = vmatpush.bf16.msra.mxu0 %v2096
    %3264 = vmatpush.bf16.msra.mxu0 %v2088
    %3265 = vmatpush.bf16.msra.mxu0 %v2080
    %3266 = vmatpush.bf16.msra.mxu0 %v2072
    %3267 = vmatpush.bf16.msra.mxu0 %v2064
    %3268 = vmatpush.bf16.msra.mxu0 %v2056
    %3269 = vmatmul.bf16.gmra.mxu0 %v631
    %v3270 = vpop.f32.mrf.mxu0
    %v3271 = vadd.f32 %v3258, %v3270
    %v3272 = vpop.f32.mrf.mxu0
    %3273 = vdwg.mxu0
    %3274 = vmatpush.bf16.msra.mxu0 %v2176
    %3275 = vmatpush.bf16.msra.mxu0 %v2168
    %3276 = vmatpush.bf16.msra.mxu0 %v2160
    %3277 = vmatpush.bf16.msra.mxu0 %v2152
    %3278 = vmatpush.bf16.msra.mxu0 %v2144
    %3279 = vmatpush.bf16.msra.mxu0 %v2136
    %3280 = vmatpush.bf16.msra.mxu0 %v2128
    %3281 = vmatpush.bf16.msra.mxu0 %v2120
    %3282 = vmatmul.bf16.gmra.mxu0 %v632
    %v3283 = vpop.f32.mrf.mxu0
    %v3284 = vadd.f32 %v3271, %v3283
    %v3285 = vpop.f32.mrf.mxu0
    %3286 = vdwg.mxu0
    %3287 = vmatpush.bf16.msra.mxu0 %v2240
    %3288 = vmatpush.bf16.msra.mxu0 %v2232
    %3289 = vmatpush.bf16.msra.mxu0 %v2224
    %3290 = vmatpush.bf16.msra.mxu0 %v2216
    %3291 = vmatpush.bf16.msra.mxu0 %v2208
    %3292 = vmatpush.bf16.msra.mxu0 %v2200
    %3293 = vmatpush.bf16.msra.mxu0 %v2192
    %3294 = vmatpush.bf16.msra.mxu0 %v2184
    %3295 = vmatmul.bf16.gmra.mxu0 %v633
    %v3296 = vpop.f32.mrf.mxu0
    %v3297 = vadd.f32 %v3284, %v3296
    %v3298 = vpop.f32.mrf.mxu0
    %3299 = vdwg.mxu0
    %3300 = vmatpush.bf16.msra.mxu0 %v2304
    %3301 = vmatpush.bf16.msra.mxu0 %v2296
    %3302 = vmatpush.bf16.msra.mxu0 %v2288
    %3303 = vmatpush.bf16.msra.mxu0 %v2280
    %3304 = vmatpush.bf16.msra.mxu0 %v2272
    %3305 = vmatpush.bf16.msra.mxu0 %v2264
    %3306 = vmatpush.bf16.msra.mxu0 %v2256
    %3307 = vmatpush.bf16.msra.mxu0 %v2248
    %3308 = vmatmul.bf16.gmra.mxu0 %v634
    %v3309 = vpop.f32.mrf.mxu0
    %v3310 = vadd.f32 %v3297, %v3309
    %v3311 = vpop.f32.mrf.mxu0
    %3312 = vdwg.mxu0
    %3313 = vmatpush.bf16.msra.mxu0 %v2368
    %3314 = vmatpush.bf16.msra.mxu0 %v2360
    %3315 = vmatpush.bf16.msra.mxu0 %v2352
    %3316 = vmatpush.bf16.msra.mxu0 %v2344
    %3317 = vmatpush.bf16.msra.mxu0 %v2336
    %3318 = vmatpush.bf16.msra.mxu0 %v2328
    %3319 = vmatpush.bf16.msra.mxu0 %v2320
    %3320 = vmatpush.bf16.msra.mxu0 %v2312
    %3321 = vmatmul.bf16.gmra.mxu0 %v635
    %v3322 = vpop.f32.mrf.mxu0
    %v3323 = vadd.f32 %v3310, %v3322
    %v3324 = vpop.f32.mrf.mxu0
    %3325 = vdwg.mxu0
    %3326 = vmatpush.bf16.msra.mxu0 %v2432
    %3327 = vmatpush.bf16.msra.mxu0 %v2424
    %3328 = vmatpush.bf16.msra.mxu0 %v2416
    %3329 = vmatpush.bf16.msra.mxu0 %v2408
    %3330 = vmatpush.bf16.msra.mxu0 %v2400
    %3331 = vmatpush.bf16.msra.mxu0 %v2392
    %3332 = vmatpush.bf16.msra.mxu0 %v2384
    %3333 = vmatpush.bf16.msra.mxu0 %v2376
    %3334 = vmatmul.bf16.gmra.mxu0 %v636
    %v3335 = vpop.f32.mrf.mxu0
    %v3336 = vadd.f32 %v3323, %v3335
    %v3337 = vpop.f32.mrf.mxu0
    %3338 = vdwg.mxu0
    %3339 = vmatpush.bf16.msra.mxu0 %v2049
    %3340 = vmatpush.bf16.msra.mxu0 %v2041
    %3341 = vmatpush.bf16.msra.mxu0 %v2033
    %3342 = vmatpush.bf16.msra.mxu0 %v2025
    %3343 = vmatpush.bf16.msra.mxu0 %v2017
    %3344 = vmatpush.bf16.msra.mxu0 %v2009
    %3345 = vmatpush.bf16.msra.mxu0 %v2001
    %3346 = vmatpush.bf16.msra.mxu0 %v1993
    %3347 = vmatmul.bf16.gmra.mxu0 %v630
    %v3348 = vpop.f32.mrf.mxu0
    %v3349 = vadd.f32 %v608, %v3348
    %v3350 = vpop.f32.mrf.mxu0
    %3351 = vdwg.mxu0
    %3352 = vmatpush.bf16.msra.mxu0 %v2113
    %3353 = vmatpush.bf16.msra.mxu0 %v2105
    %3354 = vmatpush.bf16.msra.mxu0 %v2097
    %3355 = vmatpush.bf16.msra.mxu0 %v2089
    %3356 = vmatpush.bf16.msra.mxu0 %v2081
    %3357 = vmatpush.bf16.msra.mxu0 %v2073
    %3358 = vmatpush.bf16.msra.mxu0 %v2065
    %3359 = vmatpush.bf16.msra.mxu0 %v2057
    %3360 = vmatmul.bf16.gmra.mxu0 %v631
    %v3361 = vpop.f32.mrf.mxu0
    %v3362 = vadd.f32 %v3349, %v3361
    %v3363 = vpop.f32.mrf.mxu0
    %3364 = vdwg.mxu0
    %3365 = vmatpush.bf16.msra.mxu0 %v2177
    %3366 = vmatpush.bf16.msra.mxu0 %v2169
    %3367 = vmatpush.bf16.msra.mxu0 %v2161
    %3368 = vmatpush.bf16.msra.mxu0 %v2153
    %3369 = vmatpush.bf16.msra.mxu0 %v2145
    %3370 = vmatpush.bf16.msra.mxu0 %v2137
    %3371 = vmatpush.bf16.msra.mxu0 %v2129
    %3372 = vmatpush.bf16.msra.mxu0 %v2121
    %3373 = vmatmul.bf16.gmra.mxu0 %v632
    %v3374 = vpop.f32.mrf.mxu0
    %v3375 = vadd.f32 %v3362, %v3374
    %v3376 = vpop.f32.mrf.mxu0
    %3377 = vdwg.mxu0
    %3378 = vmatpush.bf16.msra.mxu0 %v2241
    %3379 = vmatpush.bf16.msra.mxu0 %v2233
    %3380 = vmatpush.bf16.msra.mxu0 %v2225
    %3381 = vmatpush.bf16.msra.mxu0 %v2217
    %3382 = vmatpush.bf16.msra.mxu0 %v2209
    %3383 = vmatpush.bf16.msra.mxu0 %v2201
    %3384 = vmatpush.bf16.msra.mxu0 %v2193
    %3385 = vmatpush.bf16.msra.mxu0 %v2185
    %3386 = vmatmul.bf16.gmra.mxu0 %v633
    %v3387 = vpop.f32.mrf.mxu0
    %v3388 = vadd.f32 %v3375, %v3387
    %v3389 = vpop.f32.mrf.mxu0
    %3390 = vdwg.mxu0
    %3391 = vmatpush.bf16.msra.mxu0 %v2305
    %3392 = vmatpush.bf16.msra.mxu0 %v2297
    %3393 = vmatpush.bf16.msra.mxu0 %v2289
    %3394 = vmatpush.bf16.msra.mxu0 %v2281
    %3395 = vmatpush.bf16.msra.mxu0 %v2273
    %3396 = vmatpush.bf16.msra.mxu0 %v2265
    %3397 = vmatpush.bf16.msra.mxu0 %v2257
    %3398 = vmatpush.bf16.msra.mxu0 %v2249
    %3399 = vmatmul.bf16.gmra.mxu0 %v634
    %v3400 = vpop.f32.mrf.mxu0
    %v3401 = vadd.f32 %v3388, %v3400
    %v3402 = vpop.f32.mrf.mxu0
    %3403 = vdwg.mxu0
    %3404 = vmatpush.bf16.msra.mxu0 %v2369
    %3405 = vmatpush.bf16.msra.mxu0 %v2361
    %3406 = vmatpush.bf16.msra.mxu0 %v2353
    %3407 = vmatpush.bf16.msra.mxu0 %v2345
    %3408 = vmatpush.bf16.msra.mxu0 %v2337
    %3409 = vmatpush.bf16.msra.mxu0 %v2329
    %3410 = vmatpush.bf16.msra.mxu0 %v2321
    %3411 = vmatpush.bf16.msra.mxu0 %v2313
    %3412 = vmatmul.bf16.gmra.mxu0 %v635
    %v3413 = vpop.f32.mrf.mxu0
    %v3414 = vadd.f32 %v3401, %v3413
    %v3415 = vpop.f32.mrf.mxu0
    %3416 = vdwg.mxu0
    %3417 = vmatpush.bf16.msra.mxu0 %v2433
    %3418 = vmatpush.bf16.msra.mxu0 %v2425
    %3419 = vmatpush.bf16.msra.mxu0 %v2417
    %3420 = vmatpush.bf16.msra.mxu0 %v2409
    %3421 = vmatpush.bf16.msra.mxu0 %v2401
    %3422 = vmatpush.bf16.msra.mxu0 %v2393
    %3423 = vmatpush.bf16.msra.mxu0 %v2385
    %3424 = vmatpush.bf16.msra.mxu0 %v2377
    %3425 = vmatmul.bf16.gmra.mxu0 %v636
    %v3426 = vpop.f32.mrf.mxu0
    %v3427 = vadd.f32 %v3414, %v3426
    %v3428 = vpop.f32.mrf.mxu0
    %3429 = vdwg.mxu0
    %3430 = vmatpush.bf16.msra.mxu0 %v2050
    %3431 = vmatpush.bf16.msra.mxu0 %v2042
    %3432 = vmatpush.bf16.msra.mxu0 %v2034
    %3433 = vmatpush.bf16.msra.mxu0 %v2026
    %3434 = vmatpush.bf16.msra.mxu0 %v2018
    %3435 = vmatpush.bf16.msra.mxu0 %v2010
    %3436 = vmatpush.bf16.msra.mxu0 %v2002
    %3437 = vmatpush.bf16.msra.mxu0 %v1994
    %3438 = vmatmul.bf16.gmra.mxu0 %v630
    %v3439 = vpop.f32.mrf.mxu0
    %v3440 = vadd.f32 %v609, %v3439
    %v3441 = vpop.f32.mrf.mxu0
    %3442 = vdwg.mxu0
    %3443 = vmatpush.bf16.msra.mxu0 %v2114
    %3444 = vmatpush.bf16.msra.mxu0 %v2106
    %3445 = vmatpush.bf16.msra.mxu0 %v2098
    %3446 = vmatpush.bf16.msra.mxu0 %v2090
    %3447 = vmatpush.bf16.msra.mxu0 %v2082
    %3448 = vmatpush.bf16.msra.mxu0 %v2074
    %3449 = vmatpush.bf16.msra.mxu0 %v2066
    %3450 = vmatpush.bf16.msra.mxu0 %v2058
    %3451 = vmatmul.bf16.gmra.mxu0 %v631
    %v3452 = vpop.f32.mrf.mxu0
    %v3453 = vadd.f32 %v3440, %v3452
    %v3454 = vpop.f32.mrf.mxu0
    %3455 = vdwg.mxu0
    %3456 = vmatpush.bf16.msra.mxu0 %v2178
    %3457 = vmatpush.bf16.msra.mxu0 %v2170
    %3458 = vmatpush.bf16.msra.mxu0 %v2162
    %3459 = vmatpush.bf16.msra.mxu0 %v2154
    %3460 = vmatpush.bf16.msra.mxu0 %v2146
    %3461 = vmatpush.bf16.msra.mxu0 %v2138
    %3462 = vmatpush.bf16.msra.mxu0 %v2130
    %3463 = vmatpush.bf16.msra.mxu0 %v2122
    %3464 = vmatmul.bf16.gmra.mxu0 %v632
    %v3465 = vpop.f32.mrf.mxu0
    %v3466 = vadd.f32 %v3453, %v3465
    %v3467 = vpop.f32.mrf.mxu0
    %3468 = vdwg.mxu0
    %3469 = vmatpush.bf16.msra.mxu0 %v2242
    %3470 = vmatpush.bf16.msra.mxu0 %v2234
    %3471 = vmatpush.bf16.msra.mxu0 %v2226
    %3472 = vmatpush.bf16.msra.mxu0 %v2218
    %3473 = vmatpush.bf16.msra.mxu0 %v2210
    %3474 = vmatpush.bf16.msra.mxu0 %v2202
    %3475 = vmatpush.bf16.msra.mxu0 %v2194
    %3476 = vmatpush.bf16.msra.mxu0 %v2186
    %3477 = vmatmul.bf16.gmra.mxu0 %v633
    %v3478 = vpop.f32.mrf.mxu0
    %v3479 = vadd.f32 %v3466, %v3478
    %v3480 = vpop.f32.mrf.mxu0
    %3481 = vdwg.mxu0
    %3482 = vmatpush.bf16.msra.mxu0 %v2306
    %3483 = vmatpush.bf16.msra.mxu0 %v2298
    %3484 = vmatpush.bf16.msra.mxu0 %v2290
    %3485 = vmatpush.bf16.msra.mxu0 %v2282
    %3486 = vmatpush.bf16.msra.mxu0 %v2274
    %3487 = vmatpush.bf16.msra.mxu0 %v2266
    %3488 = vmatpush.bf16.msra.mxu0 %v2258
    %3489 = vmatpush.bf16.msra.mxu0 %v2250
    %3490 = vmatmul.bf16.gmra.mxu0 %v634
    %v3491 = vpop.f32.mrf.mxu0
    %v3492 = vadd.f32 %v3479, %v3491
    %v3493 = vpop.f32.mrf.mxu0
    %3494 = vdwg.mxu0
    %3495 = vmatpush.bf16.msra.mxu0 %v2370
    %3496 = vmatpush.bf16.msra.mxu0 %v2362
    %3497 = vmatpush.bf16.msra.mxu0 %v2354
    %3498 = vmatpush.bf16.msra.mxu0 %v2346
    %3499 = vmatpush.bf16.msra.mxu0 %v2338
    %3500 = vmatpush.bf16.msra.mxu0 %v2330
    %3501 = vmatpush.bf16.msra.mxu0 %v2322
    %3502 = vmatpush.bf16.msra.mxu0 %v2314
    %3503 = vmatmul.bf16.gmra.mxu0 %v635
    %v3504 = vpop.f32.mrf.mxu0
    %v3505 = vadd.f32 %v3492, %v3504
    %v3506 = vpop.f32.mrf.mxu0
    %3507 = vdwg.mxu0
    %3508 = vmatpush.bf16.msra.mxu0 %v2434
    %3509 = vmatpush.bf16.msra.mxu0 %v2426
    %3510 = vmatpush.bf16.msra.mxu0 %v2418
    %3511 = vmatpush.bf16.msra.mxu0 %v2410
    %3512 = vmatpush.bf16.msra.mxu0 %v2402
    %3513 = vmatpush.bf16.msra.mxu0 %v2394
    %3514 = vmatpush.bf16.msra.mxu0 %v2386
    %3515 = vmatpush.bf16.msra.mxu0 %v2378
    %3516 = vmatmul.bf16.gmra.mxu0 %v636
    %v3517 = vpop.f32.mrf.mxu0
    %v3518 = vadd.f32 %v3505, %v3517
    %v3519 = vpop.f32.mrf.mxu0
    %3520 = vdwg.mxu0
    %3521 = vmatpush.bf16.msra.mxu0 %v2051
    %3522 = vmatpush.bf16.msra.mxu0 %v2043
    %3523 = vmatpush.bf16.msra.mxu0 %v2035
    %3524 = vmatpush.bf16.msra.mxu0 %v2027
    %3525 = vmatpush.bf16.msra.mxu0 %v2019
    %3526 = vmatpush.bf16.msra.mxu0 %v2011
    %3527 = vmatpush.bf16.msra.mxu0 %v2003
    %3528 = vmatpush.bf16.msra.mxu0 %v1995
    %3529 = vmatmul.bf16.gmra.mxu0 %v630
    %v3530 = vpop.f32.mrf.mxu0
    %v3531 = vadd.f32 %v610, %v3530
    %v3532 = vpop.f32.mrf.mxu0
    %3533 = vdwg.mxu0
    %3534 = vmatpush.bf16.msra.mxu0 %v2115
    %3535 = vmatpush.bf16.msra.mxu0 %v2107
    %3536 = vmatpush.bf16.msra.mxu0 %v2099
    %3537 = vmatpush.bf16.msra.mxu0 %v2091
    %3538 = vmatpush.bf16.msra.mxu0 %v2083
    %3539 = vmatpush.bf16.msra.mxu0 %v2075
    %3540 = vmatpush.bf16.msra.mxu0 %v2067
    %3541 = vmatpush.bf16.msra.mxu0 %v2059
    %3542 = vmatmul.bf16.gmra.mxu0 %v631
    %v3543 = vpop.f32.mrf.mxu0
    %v3544 = vadd.f32 %v3531, %v3543
    %v3545 = vpop.f32.mrf.mxu0
    %3546 = vdwg.mxu0
    %3547 = vmatpush.bf16.msra.mxu0 %v2179
    %3548 = vmatpush.bf16.msra.mxu0 %v2171
    %3549 = vmatpush.bf16.msra.mxu0 %v2163
    %3550 = vmatpush.bf16.msra.mxu0 %v2155
    %3551 = vmatpush.bf16.msra.mxu0 %v2147
    %3552 = vmatpush.bf16.msra.mxu0 %v2139
    %3553 = vmatpush.bf16.msra.mxu0 %v2131
    %3554 = vmatpush.bf16.msra.mxu0 %v2123
    %3555 = vmatmul.bf16.gmra.mxu0 %v632
    %v3556 = vpop.f32.mrf.mxu0
    %v3557 = vadd.f32 %v3544, %v3556
    %v3558 = vpop.f32.mrf.mxu0
    %3559 = vdwg.mxu0
    %3560 = vmatpush.bf16.msra.mxu0 %v2243
    %3561 = vmatpush.bf16.msra.mxu0 %v2235
    %3562 = vmatpush.bf16.msra.mxu0 %v2227
    %3563 = vmatpush.bf16.msra.mxu0 %v2219
    %3564 = vmatpush.bf16.msra.mxu0 %v2211
    %3565 = vmatpush.bf16.msra.mxu0 %v2203
    %3566 = vmatpush.bf16.msra.mxu0 %v2195
    %3567 = vmatpush.bf16.msra.mxu0 %v2187
    %3568 = vmatmul.bf16.gmra.mxu0 %v633
    %v3569 = vpop.f32.mrf.mxu0
    %v3570 = vadd.f32 %v3557, %v3569
    %v3571 = vpop.f32.mrf.mxu0
    %3572 = vdwg.mxu0
    %3573 = vmatpush.bf16.msra.mxu0 %v2307
    %3574 = vmatpush.bf16.msra.mxu0 %v2299
    %3575 = vmatpush.bf16.msra.mxu0 %v2291
    %3576 = vmatpush.bf16.msra.mxu0 %v2283
    %3577 = vmatpush.bf16.msra.mxu0 %v2275
    %3578 = vmatpush.bf16.msra.mxu0 %v2267
    %3579 = vmatpush.bf16.msra.mxu0 %v2259
    %3580 = vmatpush.bf16.msra.mxu0 %v2251
    %3581 = vmatmul.bf16.gmra.mxu0 %v634
    %v3582 = vpop.f32.mrf.mxu0
    %v3583 = vadd.f32 %v3570, %v3582
    %v3584 = vpop.f32.mrf.mxu0
    %3585 = vdwg.mxu0
    %3586 = vmatpush.bf16.msra.mxu0 %v2371
    %3587 = vmatpush.bf16.msra.mxu0 %v2363
    %3588 = vmatpush.bf16.msra.mxu0 %v2355
    %3589 = vmatpush.bf16.msra.mxu0 %v2347
    %3590 = vmatpush.bf16.msra.mxu0 %v2339
    %3591 = vmatpush.bf16.msra.mxu0 %v2331
    %3592 = vmatpush.bf16.msra.mxu0 %v2323
    %3593 = vmatpush.bf16.msra.mxu0 %v2315
    %3594 = vmatmul.bf16.gmra.mxu0 %v635
    %v3595 = vpop.f32.mrf.mxu0
    %v3596 = vadd.f32 %v3583, %v3595
    %v3597 = vpop.f32.mrf.mxu0
    %3598 = vdwg.mxu0
    %3599 = vmatpush.bf16.msra.mxu0 %v2435
    %3600 = vmatpush.bf16.msra.mxu0 %v2427
    %3601 = vmatpush.bf16.msra.mxu0 %v2419
    %3602 = vmatpush.bf16.msra.mxu0 %v2411
    %3603 = vmatpush.bf16.msra.mxu0 %v2403
    %3604 = vmatpush.bf16.msra.mxu0 %v2395
    %3605 = vmatpush.bf16.msra.mxu0 %v2387
    %3606 = vmatpush.bf16.msra.mxu0 %v2379
    %3607 = vmatmul.bf16.gmra.mxu0 %v636
    %v3608 = vpop.f32.mrf.mxu0
    %v3609 = vadd.f32 %v3596, %v3608
    %v3610 = vpop.f32.mrf.mxu0
    %3611 = vdwg.mxu0
    %vm3612 = vcmp.gt.f32.partialorder %v2972, 0.0
    %vm3613 = vcmp.gt.f32.partialorder %v3063, 0.0
    %vm3614 = vcmp.gt.f32.partialorder %v3154, 0.0
    %vm3615 = vcmp.gt.f32.partialorder %v3245, 0.0
    %vm3616 = vcmp.gt.f32.partialorder %v3336, 0.0
    %vm3617 = vcmp.gt.f32.partialorder %v3427, 0.0
    %vm3618 = vcmp.gt.f32.partialorder %v3518, 0.0
    %vm3619 = vcmp.gt.f32.partialorder %v3609, 0.0
    %v3620 = vmul.f32 %v2972, 0.2
    %v3621 = vmul.f32 %v3063, 0.2
    %v3622 = vmul.f32 %v3154, 0.2
    %v3623 = vmul.f32 %v3245, 0.2
    %v3624 = vmul.f32 %v3336, 0.2
    %v3625 = vmul.f32 %v3427, 0.2
    %v3626 = vmul.f32 %v3518, 0.2
    %v3627 = vmul.f32 %v3609, 0.2
    %v3628 = vsel %vm3612, %v2972, %v3620
    %v3629 = vsel %vm3613, %v3063, %v3621
    %v3630 = vsel %vm3614, %v3154, %v3622
    %v3631 = vsel %vm3615, %v3245, %v3623
    %v3632 = vsel %vm3616, %v3336, %v3624
    %v3633 = vsel %vm3617, %v3427, %v3625
    %v3634 = vsel %vm3618, %v3518, %v3626
    %v3635 = vsel %vm3619, %v3609, %v3627
    %v3636 = vpack.c.bf16 %v3628, %v3628
    %v3637 = vpack.c.bf16 %v3629, %v3629
    %v3638 = vpack.c.bf16 %v3630, %v3630
    %v3639 = vpack.c.bf16 %v3631, %v3631
    %v3640 = vpack.c.bf16 %v3632, %v3632
    %v3641 = vpack.c.bf16 %v3633, %v3633
    %v3642 = vpack.c.bf16 %v3634, %v3634
    %v3643 = vpack.c.bf16 %v3635, %v3635
    %v3644 = vld [vmem:[#allocation8] sm:$0xff]
    %v3645 = vld [vmem:[#allocation8 + $0x8] sm:$0xff]
    %v3646 = vld [vmem:[#allocation8 + $0x10] sm:$0xff]
    %v3647 = vld [vmem:[#allocation8 + $0x18] sm:$0xff]
    %v3648 = vld [vmem:[#allocation8 + $0x20] sm:$0xff]
    %v3649 = vld [vmem:[#allocation8 + $0x28] sm:$0xff]
    %v3650 = vld [vmem:[#allocation8 + $0x30] sm:$0xff]
    %v3651 = vld [vmem:[#allocation8 + $0x38] sm:$0xff]
    %v3652 = vld [vmem:[#allocation8 + $0x40] sm:$0xff]
    %v3653 = vld [vmem:[#allocation8 + $0x48] sm:$0xff]
    %v3654 = vld [vmem:[#allocation8 + $0x50] sm:$0xff]
    %v3655 = vld [vmem:[#allocation8 + $0x58] sm:$0xff]
    %v3656 = vld [vmem:[#allocation8 + $0x60] sm:$0xff]
    %v3657 = vld [vmem:[#allocation8 + $0x68] sm:$0xff]
    %v3658 = vld [vmem:[#allocation8 + $0x70] sm:$0xff]
    %v3659 = vld [vmem:[#allocation8 + $0x78] sm:$0xff]
    %v3660 = vld [vmem:[#allocation8 + $0x80] sm:$0xff]
    %v3661 = vld [vmem:[#allocation8 + $0x88] sm:$0xff]
    %v3662 = vld [vmem:[#allocation8 + $0x90] sm:$0xff]
    %v3663 = vld [vmem:[#allocation8 + $0x98] sm:$0xff]
    %v3664 = vld [vmem:[#allocation8 + $0xa0] sm:$0xff]
    %v3665 = vld [vmem:[#allocation8 + $0xa8] sm:$0xff]
    %v3666 = vld [vmem:[#allocation8 + $0xb0] sm:$0xff]
    %v3667 = vld [vmem:[#allocation8 + $0xb8] sm:$0xff]
    %v3668 = vld [vmem:[#allocation8 + $0xc0] sm:$0xff]
    %v3669 = vld [vmem:[#allocation8 + $0xc8] sm:$0xff]
    %v3670 = vld [vmem:[#allocation8 + $0xd0] sm:$0xff]
    %v3671 = vld [vmem:[#allocation8 + $0xd8] sm:$0xff]
    %v3672 = vld [vmem:[#allocation8 + $0xe0] sm:$0xff]
    %v3673 = vld [vmem:[#allocation8 + $0xe8] sm:$0xff]
    %v3674 = vld [vmem:[#allocation8 + $0xf0] sm:$0xff]
    %v3675 = vld [vmem:[#allocation8 + $0xf8] sm:$0xff]
    %v3676 = vld [vmem:[#allocation8 + $0x100] sm:$0xff]
    %v3677 = vld [vmem:[#allocation8 + $0x108] sm:$0xff]
    %v3678 = vld [vmem:[#allocation8 + $0x110] sm:$0xff]
    %v3679 = vld [vmem:[#allocation8 + $0x118] sm:$0xff]
    %v3680 = vld [vmem:[#allocation8 + $0x120] sm:$0xff]
    %v3681 = vld [vmem:[#allocation8 + $0x128] sm:$0xff]
    %v3682 = vld [vmem:[#allocation8 + $0x130] sm:$0xff]
    %v3683 = vld [vmem:[#allocation8 + $0x138] sm:$0xff]
    %v3684 = vld [vmem:[#allocation8 + $0x140] sm:$0xff]
    %v3685 = vld [vmem:[#allocation8 + $0x148] sm:$0xff]
    %v3686 = vld [vmem:[#allocation8 + $0x150] sm:$0xff]
    %v3687 = vld [vmem:[#allocation8 + $0x158] sm:$0xff]
    %v3688 = vld [vmem:[#allocation8 + $0x160] sm:$0xff]
    %v3689 = vld [vmem:[#allocation8 + $0x168] sm:$0xff]
    %v3690 = vld [vmem:[#allocation8 + $0x170] sm:$0xff]
    %v3691 = vld [vmem:[#allocation8 + $0x178] sm:$0xff]
    %v3692 = vld [vmem:[#allocation8 + $0x180] sm:$0xff]
    %v3693 = vld [vmem:[#allocation8 + $0x188] sm:$0xff]
    %v3694 = vld [vmem:[#allocation8 + $0x190] sm:$0xff]
    %v3695 = vld [vmem:[#allocation8 + $0x198] sm:$0xff]
    %v3696 = vld [vmem:[#allocation8 + $0x1a0] sm:$0xff]
    %v3697 = vld [vmem:[#allocation8 + $0x1a8] sm:$0xff]
    %v3698 = vld [vmem:[#allocation8 + $0x1b0] sm:$0xff]
    %v3699 = vld [vmem:[#allocation8 + $0x1b8] sm:$0xff]
    %v3700 = vld [vmem:[#allocation8 + $0x1c0] sm:$0xff]
    %v3701 = vld [vmem:[#allocation8 + $0x1c8] sm:$0xff]
    %v3702 = vld [vmem:[#allocation8 + $0x1d0] sm:$0xff]
    %v3703 = vld [vmem:[#allocation8 + $0x1d8] sm:$0xff]
    %v3704 = vld [vmem:[#allocation8 + $0x1e0] sm:$0xff]
    %v3705 = vld [vmem:[#allocation8 + $0x1e8] sm:$0xff]
    %v3706 = vld [vmem:[#allocation8 + $0x1f0] sm:$0xff]
    %v3707 = vld [vmem:[#allocation8 + $0x1f8] sm:$0xff]
    %v3708 = vld [vmem:[#allocation8 + $0x200] sm:$0xff]
    %v3709 = vld [vmem:[#allocation8 + $0x208] sm:$0xff]
    %v3710 = vld [vmem:[#allocation8 + $0x210] sm:$0xff]
    %v3711 = vld [vmem:[#allocation8 + $0x218] sm:$0xff]
    %v3712 = vld [vmem:[#allocation8 + $0x220] sm:$0xff]
    %v3713 = vld [vmem:[#allocation8 + $0x228] sm:$0xff]
    %v3714 = vld [vmem:[#allocation8 + $0x230] sm:$0xff]
    %v3715 = vld [vmem:[#allocation8 + $0x238] sm:$0xff]
    %v3716 = vld [vmem:[#allocation8 + $0x240] sm:$0xff]
    %v3717 = vld [vmem:[#allocation8 + $0x248] sm:$0xff]
    %v3718 = vld [vmem:[#allocation8 + $0x250] sm:$0xff]
    %v3719 = vld [vmem:[#allocation8 + $0x258] sm:$0xff]
    %v3720 = vld [vmem:[#allocation8 + $0x260] sm:$0xff]
    %v3721 = vld [vmem:[#allocation8 + $0x268] sm:$0xff]
    %v3722 = vld [vmem:[#allocation8 + $0x270] sm:$0xff]
    %v3723 = vld [vmem:[#allocation8 + $0x278] sm:$0xff]
    %v3724 = vld [vmem:[#allocation8 + $0x280] sm:$0xff]
    %v3725 = vld [vmem:[#allocation8 + $0x288] sm:$0xff]
    %v3726 = vld [vmem:[#allocation8 + $0x290] sm:$0xff]
    %v3727 = vld [vmem:[#allocation8 + $0x298] sm:$0xff]
    %v3728 = vld [vmem:[#allocation8 + $0x2a0] sm:$0xff]
    %v3729 = vld [vmem:[#allocation8 + $0x2a8] sm:$0xff]
    %v3730 = vld [vmem:[#allocation8 + $0x2b0] sm:$0xff]
    %v3731 = vld [vmem:[#allocation8 + $0x2b8] sm:$0xff]
    %v3732 = vld [vmem:[#allocation8 + $0x2c0] sm:$0xff]
    %v3733 = vld [vmem:[#allocation8 + $0x2c8] sm:$0xff]
    %v3734 = vld [vmem:[#allocation8 + $0x2d0] sm:$0xff]
    %v3735 = vld [vmem:[#allocation8 + $0x2d8] sm:$0xff]
    %v3736 = vld [vmem:[#allocation8 + $0x2e0] sm:$0xff]
    %v3737 = vld [vmem:[#allocation8 + $0x2e8] sm:$0xff]
    %v3738 = vld [vmem:[#allocation8 + $0x2f0] sm:$0xff]
    %v3739 = vld [vmem:[#allocation8 + $0x2f8] sm:$0xff]
    %v3740 = vld [vmem:[#allocation8 + $0x300] sm:$0xff]
    %v3741 = vld [vmem:[#allocation8 + $0x308] sm:$0xff]
    %v3742 = vld [vmem:[#allocation8 + $0x310] sm:$0xff]
    %v3743 = vld [vmem:[#allocation8 + $0x318] sm:$0xff]
    %v3744 = vld [vmem:[#allocation8 + $0x320] sm:$0xff]
    %v3745 = vld [vmem:[#allocation8 + $0x328] sm:$0xff]
    %v3746 = vld [vmem:[#allocation8 + $0x330] sm:$0xff]
    %v3747 = vld [vmem:[#allocation8 + $0x338] sm:$0xff]
    %v3748 = vld [vmem:[#allocation8 + $0x340] sm:$0xff]
    %v3749 = vld [vmem:[#allocation8 + $0x348] sm:$0xff]
    %v3750 = vld [vmem:[#allocation8 + $0x350] sm:$0xff]
    %v3751 = vld [vmem:[#allocation8 + $0x358] sm:$0xff]
    %v3752 = vld [vmem:[#allocation8 + $0x360] sm:$0xff]
    %v3753 = vld [vmem:[#allocation8 + $0x368] sm:$0xff]
    %v3754 = vld [vmem:[#allocation8 + $0x370] sm:$0xff]
    %v3755 = vld [vmem:[#allocation8 + $0x378] sm:$0xff]
    %v3756 = vld [vmem:[#allocation8 + $0x380] sm:$0xff]
    %v3757 = vld [vmem:[#allocation8 + $0x388] sm:$0xff]
    %v3758 = vld [vmem:[#allocation8 + $0x390] sm:$0xff]
    %v3759 = vld [vmem:[#allocation8 + $0x398] sm:$0xff]
    %v3760 = vld [vmem:[#allocation8 + $0x3a0] sm:$0xff]
    %v3761 = vld [vmem:[#allocation8 + $0x3a8] sm:$0xff]
    %v3762 = vld [vmem:[#allocation8 + $0x3b0] sm:$0xff]
    %v3763 = vld [vmem:[#allocation8 + $0x3b8] sm:$0xff]
    %v3764 = vld [vmem:[#allocation8 + $0x3c0] sm:$0xff]
    %v3765 = vld [vmem:[#allocation8 + $0x3c8] sm:$0xff]
    %v3766 = vld [vmem:[#allocation8 + $0x3d0] sm:$0xff]
    %v3767 = vld [vmem:[#allocation8 + $0x3d8] sm:$0xff]
    %v3768 = vld [vmem:[#allocation8 + $0x3e0] sm:$0xff]
    %v3769 = vld [vmem:[#allocation8 + $0x3e8] sm:$0xff]
    %v3770 = vld [vmem:[#allocation8 + $0x3f0] sm:$0xff]
    %v3771 = vld [vmem:[#allocation8 + $0x3f8] sm:$0xff]
    %v3772 = vld [vmem:[#allocation8 + $0x400] sm:$0xff]
    %v3773 = vld [vmem:[#allocation8 + $0x408] sm:$0xff]
    %v3774 = vld [vmem:[#allocation8 + $0x410] sm:$0xff]
    %v3775 = vld [vmem:[#allocation8 + $0x418] sm:$0xff]
    %v3776 = vld [vmem:[#allocation8 + $0x420] sm:$0xff]
    %v3777 = vld [vmem:[#allocation8 + $0x428] sm:$0xff]
    %v3778 = vld [vmem:[#allocation8 + $0x430] sm:$0xff]
    %v3779 = vld [vmem:[#allocation8 + $0x438] sm:$0xff]
    %v3780 = vld [vmem:[#allocation8 + $0x440] sm:$0xff]
    %v3781 = vld [vmem:[#allocation8 + $0x448] sm:$0xff]
    %v3782 = vld [vmem:[#allocation8 + $0x450] sm:$0xff]
    %v3783 = vld [vmem:[#allocation8 + $0x458] sm:$0xff]
    %v3784 = vld [vmem:[#allocation8 + $0x460] sm:$0xff]
    %v3785 = vld [vmem:[#allocation8 + $0x468] sm:$0xff]
    %v3786 = vld [vmem:[#allocation8 + $0x470] sm:$0xff]
    %v3787 = vld [vmem:[#allocation8 + $0x478] sm:$0xff]
    %v3788 = vld [vmem:[#allocation8 + $0x480] sm:$0xff]
    %v3789 = vld [vmem:[#allocation8 + $0x488] sm:$0xff]
    %v3790 = vld [vmem:[#allocation8 + $0x490] sm:$0xff]
    %v3791 = vld [vmem:[#allocation8 + $0x498] sm:$0xff]
    %v3792 = vld [vmem:[#allocation8 + $0x4a0] sm:$0xff]
    %v3793 = vld [vmem:[#allocation8 + $0x4a8] sm:$0xff]
    %v3794 = vld [vmem:[#allocation8 + $0x4b0] sm:$0xff]
    %v3795 = vld [vmem:[#allocation8 + $0x4b8] sm:$0xff]
    %v3796 = vld [vmem:[#allocation8 + $0x4c0] sm:$0xff]
    %v3797 = vld [vmem:[#allocation8 + $0x4c8] sm:$0xff]
    %v3798 = vld [vmem:[#allocation8 + $0x4d0] sm:$0xff]
    %v3799 = vld [vmem:[#allocation8 + $0x4d8] sm:$0xff]
    %v3800 = vld [vmem:[#allocation8 + $0x4e0] sm:$0xff]
    %v3801 = vld [vmem:[#allocation8 + $0x4e8] sm:$0xff]
    %v3802 = vld [vmem:[#allocation8 + $0x4f0] sm:$0xff]
    %v3803 = vld [vmem:[#allocation8 + $0x4f8] sm:$0xff]
    %v3804 = vld [vmem:[#allocation8 + $0x500] sm:$0xff]
    %v3805 = vld [vmem:[#allocation8 + $0x508] sm:$0xff]
    %v3806 = vld [vmem:[#allocation8 + $0x510] sm:$0xff]
    %v3807 = vld [vmem:[#allocation8 + $0x518] sm:$0xff]
    %v3808 = vld [vmem:[#allocation8 + $0x520] sm:$0xff]
    %v3809 = vld [vmem:[#allocation8 + $0x528] sm:$0xff]
    %v3810 = vld [vmem:[#allocation8 + $0x530] sm:$0xff]
    %v3811 = vld [vmem:[#allocation8 + $0x538] sm:$0xff]
    %v3812 = vld [vmem:[#allocation8 + $0x540] sm:$0xff]
    %v3813 = vld [vmem:[#allocation8 + $0x548] sm:$0xff]
    %v3814 = vld [vmem:[#allocation8 + $0x550] sm:$0xff]
    %v3815 = vld [vmem:[#allocation8 + $0x558] sm:$0xff]
    %v3816 = vld [vmem:[#allocation8 + $0x560] sm:$0xff]
    %v3817 = vld [vmem:[#allocation8 + $0x568] sm:$0xff]
    %v3818 = vld [vmem:[#allocation8 + $0x570] sm:$0xff]
    %v3819 = vld [vmem:[#allocation8 + $0x578] sm:$0xff]
    %v3820 = vld [vmem:[#allocation8 + $0x580] sm:$0xff]
    %v3821 = vld [vmem:[#allocation8 + $0x588] sm:$0xff]
    %v3822 = vld [vmem:[#allocation8 + $0x590] sm:$0xff]
    %v3823 = vld [vmem:[#allocation8 + $0x598] sm:$0xff]
    %v3824 = vld [vmem:[#allocation8 + $0x5a0] sm:$0xff]
    %v3825 = vld [vmem:[#allocation8 + $0x5a8] sm:$0xff]
    %v3826 = vld [vmem:[#allocation8 + $0x5b0] sm:$0xff]
    %v3827 = vld [vmem:[#allocation8 + $0x5b8] sm:$0xff]
    %v3828 = vld [vmem:[#allocation8 + $0x5c0] sm:$0xff]
    %v3829 = vld [vmem:[#allocation8 + $0x5c8] sm:$0xff]
    %v3830 = vld [vmem:[#allocation8 + $0x5d0] sm:$0xff]
    %v3831 = vld [vmem:[#allocation8 + $0x5d8] sm:$0xff]
    %v3832 = vld [vmem:[#allocation8 + $0x5e0] sm:$0xff]
    %v3833 = vld [vmem:[#allocation8 + $0x5e8] sm:$0xff]
    %v3834 = vld [vmem:[#allocation8 + $0x5f0] sm:$0xff]
    %v3835 = vld [vmem:[#allocation8 + $0x5f8] sm:$0xff]
    %v3836 = vld [vmem:[#allocation8 + $0x600] sm:$0xff]
    %v3837 = vld [vmem:[#allocation8 + $0x608] sm:$0xff]
    %v3838 = vld [vmem:[#allocation8 + $0x610] sm:$0xff]
    %v3839 = vld [vmem:[#allocation8 + $0x618] sm:$0xff]
    %v3840 = vld [vmem:[#allocation8 + $0x620] sm:$0xff]
    %v3841 = vld [vmem:[#allocation8 + $0x628] sm:$0xff]
    %v3842 = vld [vmem:[#allocation8 + $0x630] sm:$0xff]
    %v3843 = vld [vmem:[#allocation8 + $0x638] sm:$0xff]
    %v3844 = vld [vmem:[#allocation8 + $0x640] sm:$0xff]
    %v3845 = vld [vmem:[#allocation8 + $0x648] sm:$0xff]
    %v3846 = vld [vmem:[#allocation8 + $0x650] sm:$0xff]
    %v3847 = vld [vmem:[#allocation8 + $0x658] sm:$0xff]
    %v3848 = vld [vmem:[#allocation8 + $0x660] sm:$0xff]
    %v3849 = vld [vmem:[#allocation8 + $0x668] sm:$0xff]
    %v3850 = vld [vmem:[#allocation8 + $0x670] sm:$0xff]
    %v3851 = vld [vmem:[#allocation8 + $0x678] sm:$0xff]
    %v3852 = vld [vmem:[#allocation8 + $0x680] sm:$0xff]
    %v3853 = vld [vmem:[#allocation8 + $0x688] sm:$0xff]
    %v3854 = vld [vmem:[#allocation8 + $0x690] sm:$0xff]
    %v3855 = vld [vmem:[#allocation8 + $0x698] sm:$0xff]
    %v3856 = vld [vmem:[#allocation8 + $0x6a0] sm:$0xff]
    %v3857 = vld [vmem:[#allocation8 + $0x6a8] sm:$0xff]
    %v3858 = vld [vmem:[#allocation8 + $0x6b0] sm:$0xff]
    %v3859 = vld [vmem:[#allocation8 + $0x6b8] sm:$0xff]
    %v3860 = vld [vmem:[#allocation8 + $0x6c0] sm:$0xff]
    %v3861 = vld [vmem:[#allocation8 + $0x6c8] sm:$0xff]
    %v3862 = vld [vmem:[#allocation8 + $0x6d0] sm:$0xff]
    %v3863 = vld [vmem:[#allocation8 + $0x6d8] sm:$0xff]
    %v3864 = vld [vmem:[#allocation8 + $0x6e0] sm:$0xff]
    %v3865 = vld [vmem:[#allocation8 + $0x6e8] sm:$0xff]
    %v3866 = vld [vmem:[#allocation8 + $0x6f0] sm:$0xff]
    %v3867 = vld [vmem:[#allocation8 + $0x6f8] sm:$0xff]
    %v3868 = vld [vmem:[#allocation8 + $0x700] sm:$0xff]
    %v3869 = vld [vmem:[#allocation8 + $0x708] sm:$0xff]
    %v3870 = vld [vmem:[#allocation8 + $0x710] sm:$0xff]
    %v3871 = vld [vmem:[#allocation8 + $0x718] sm:$0xff]
    %v3872 = vld [vmem:[#allocation8 + $0x720] sm:$0xff]
    %v3873 = vld [vmem:[#allocation8 + $0x728] sm:$0xff]
    %v3874 = vld [vmem:[#allocation8 + $0x730] sm:$0xff]
    %v3875 = vld [vmem:[#allocation8 + $0x738] sm:$0xff]
    %v3876 = vld [vmem:[#allocation8 + $0x740] sm:$0xff]
    %v3877 = vld [vmem:[#allocation8 + $0x748] sm:$0xff]
    %v3878 = vld [vmem:[#allocation8 + $0x750] sm:$0xff]
    %v3879 = vld [vmem:[#allocation8 + $0x758] sm:$0xff]
    %v3880 = vld [vmem:[#allocation8 + $0x760] sm:$0xff]
    %v3881 = vld [vmem:[#allocation8 + $0x768] sm:$0xff]
    %v3882 = vld [vmem:[#allocation8 + $0x770] sm:$0xff]
    %v3883 = vld [vmem:[#allocation8 + $0x778] sm:$0xff]
    %v3884 = vld [vmem:[#allocation8 + $0x780] sm:$0xff]
    %v3885 = vld [vmem:[#allocation8 + $0x788] sm:$0xff]
    %v3886 = vld [vmem:[#allocation8 + $0x790] sm:$0xff]
    %v3887 = vld [vmem:[#allocation8 + $0x798] sm:$0xff]
    %v3888 = vld [vmem:[#allocation8 + $0x7a0] sm:$0xff]
    %v3889 = vld [vmem:[#allocation8 + $0x7a8] sm:$0xff]
    %v3890 = vld [vmem:[#allocation8 + $0x7b0] sm:$0xff]
    %v3891 = vld [vmem:[#allocation8 + $0x7b8] sm:$0xff]
    %v3892 = vld [vmem:[#allocation8 + $0x7c0] sm:$0xff]
    %v3893 = vld [vmem:[#allocation8 + $0x7c8] sm:$0xff]
    %v3894 = vld [vmem:[#allocation8 + $0x7d0] sm:$0xff]
    %v3895 = vld [vmem:[#allocation8 + $0x7d8] sm:$0xff]
    %v3896 = vld [vmem:[#allocation8 + $0x7e0] sm:$0xff]
    %v3897 = vld [vmem:[#allocation8 + $0x7e8] sm:$0xff]
    %v3898 = vld [vmem:[#allocation8 + $0x7f0] sm:$0xff]
    %v3899 = vld [vmem:[#allocation8 + $0x7f8] sm:$0xff]
    %v3900 = vld [vmem:[#allocation10] sm:$0xf]
    %v3902 = vperm.slane %v3900, 0
    %v3903 = vperm.slane %v3900, 1
    %v3904 = vperm.slane %v3900, 2
    %v3905 = vperm.slane %v3900, 3
    %v4166 = vunpack.c.l.b16 %v3644
    %v4167 = vunpack.c.h.b16 %v3644
    %v4168 = vunpack.c.l.b16 %v3645
    %v4169 = vunpack.c.h.b16 %v3645
    %v4170 = vunpack.c.l.b16 %v3646
    %v4171 = vunpack.c.h.b16 %v3646
    %v4172 = vunpack.c.l.b16 %v3647
    %v4173 = vunpack.c.h.b16 %v3647
    %v4174 = vunpack.c.l.b16 %v3648
    %v4175 = vunpack.c.h.b16 %v3648
    %v4176 = vunpack.c.l.b16 %v3649
    %v4177 = vunpack.c.h.b16 %v3649
    %v4178 = vunpack.c.l.b16 %v3650
    %v4179 = vunpack.c.h.b16 %v3650
    %v4180 = vunpack.c.l.b16 %v3651
    %v4181 = vunpack.c.h.b16 %v3651
    %v4182 = vunpack.c.l.b16 %v3652
    %v4183 = vunpack.c.h.b16 %v3652
    %v4184 = vunpack.c.l.b16 %v3653
    %v4185 = vunpack.c.h.b16 %v3653
    %v4186 = vunpack.c.l.b16 %v3654
    %v4187 = vunpack.c.h.b16 %v3654
    %v4188 = vunpack.c.l.b16 %v3655
    %v4189 = vunpack.c.h.b16 %v3655
    %v4190 = vunpack.c.l.b16 %v3656
    %v4191 = vunpack.c.h.b16 %v3656
    %v4192 = vunpack.c.l.b16 %v3657
    %v4193 = vunpack.c.h.b16 %v3657
    %v4194 = vunpack.c.l.b16 %v3658
    %v4195 = vunpack.c.h.b16 %v3658
    %v4196 = vunpack.c.l.b16 %v3659
    %v4197 = vunpack.c.h.b16 %v3659
    %v4198 = vunpack.c.l.b16 %v3660
    %v4199 = vunpack.c.h.b16 %v3660
    %v4200 = vunpack.c.l.b16 %v3661
    %v4201 = vunpack.c.h.b16 %v3661
    %v4202 = vunpack.c.l.b16 %v3662
    %v4203 = vunpack.c.h.b16 %v3662
    %v4204 = vunpack.c.l.b16 %v3663
    %v4205 = vunpack.c.h.b16 %v3663
    %v4206 = vunpack.c.l.b16 %v3664
    %v4207 = vunpack.c.h.b16 %v3664
    %v4208 = vunpack.c.l.b16 %v3665
    %v4209 = vunpack.c.h.b16 %v3665
    %v4210 = vunpack.c.l.b16 %v3666
    %v4211 = vunpack.c.h.b16 %v3666
    %v4212 = vunpack.c.l.b16 %v3667
    %v4213 = vunpack.c.h.b16 %v3667
    %v4214 = vunpack.c.l.b16 %v3668
    %v4215 = vunpack.c.h.b16 %v3668
    %v4216 = vunpack.c.l.b16 %v3669
    %v4217 = vunpack.c.h.b16 %v3669
    %v4218 = vunpack.c.l.b16 %v3670
    %v4219 = vunpack.c.h.b16 %v3670
    %v4220 = vunpack.c.l.b16 %v3671
    %v4221 = vunpack.c.h.b16 %v3671
    %v4222 = vunpack.c.l.b16 %v3672
    %v4223 = vunpack.c.h.b16 %v3672
    %v4224 = vunpack.c.l.b16 %v3673
    %v4225 = vunpack.c.h.b16 %v3673
    %v4226 = vunpack.c.l.b16 %v3674
    %v4227 = vunpack.c.h.b16 %v3674
    %v4228 = vunpack.c.l.b16 %v3675
    %v4229 = vunpack.c.h.b16 %v3675
    %v4230 = vunpack.c.l.b16 %v3676
    %v4231 = vunpack.c.h.b16 %v3676
    %v4232 = vunpack.c.l.b16 %v3677
    %v4233 = vunpack.c.h.b16 %v3677
    %v4234 = vunpack.c.l.b16 %v3678
    %v4235 = vunpack.c.h.b16 %v3678
    %v4236 = vunpack.c.l.b16 %v3679
    %v4237 = vunpack.c.h.b16 %v3679
    %v4238 = vunpack.c.l.b16 %v3680
    %v4239 = vunpack.c.h.b16 %v3680
    %v4240 = vunpack.c.l.b16 %v3681
    %v4241 = vunpack.c.h.b16 %v3681
    %v4242 = vunpack.c.l.b16 %v3682
    %v4243 = vunpack.c.h.b16 %v3682
    %v4244 = vunpack.c.l.b16 %v3683
    %v4245 = vunpack.c.h.b16 %v3683
    %v4246 = vunpack.c.l.b16 %v3684
    %v4247 = vunpack.c.h.b16 %v3684
    %v4248 = vunpack.c.l.b16 %v3685
    %v4249 = vunpack.c.h.b16 %v3685
    %v4250 = vunpack.c.l.b16 %v3686
    %v4251 = vunpack.c.h.b16 %v3686
    %v4252 = vunpack.c.l.b16 %v3687
    %v4253 = vunpack.c.h.b16 %v3687
    %v4254 = vunpack.c.l.b16 %v3688
    %v4255 = vunpack.c.h.b16 %v3688
    %v4256 = vunpack.c.l.b16 %v3689
    %v4257 = vunpack.c.h.b16 %v3689
    %v4258 = vunpack.c.l.b16 %v3690
    %v4259 = vunpack.c.h.b16 %v3690
    %v4260 = vunpack.c.l.b16 %v3691
    %v4261 = vunpack.c.h.b16 %v3691
    %v4262 = vunpack.c.l.b16 %v3692
    %v4263 = vunpack.c.h.b16 %v3692
    %v4264 = vunpack.c.l.b16 %v3693
    %v4265 = vunpack.c.h.b16 %v3693
    %v4266 = vunpack.c.l.b16 %v3694
    %v4267 = vunpack.c.h.b16 %v3694
    %v4268 = vunpack.c.l.b16 %v3695
    %v4269 = vunpack.c.h.b16 %v3695
    %v4270 = vunpack.c.l.b16 %v3696
    %v4271 = vunpack.c.h.b16 %v3696
    %v4272 = vunpack.c.l.b16 %v3697
    %v4273 = vunpack.c.h.b16 %v3697
    %v4274 = vunpack.c.l.b16 %v3698
    %v4275 = vunpack.c.h.b16 %v3698
    %v4276 = vunpack.c.l.b16 %v3699
    %v4277 = vunpack.c.h.b16 %v3699
    %v4278 = vunpack.c.l.b16 %v3700
    %v4279 = vunpack.c.h.b16 %v3700
    %v4280 = vunpack.c.l.b16 %v3701
    %v4281 = vunpack.c.h.b16 %v3701
    %v4282 = vunpack.c.l.b16 %v3702
    %v4283 = vunpack.c.h.b16 %v3702
    %v4284 = vunpack.c.l.b16 %v3703
    %v4285 = vunpack.c.h.b16 %v3703
    %v4286 = vunpack.c.l.b16 %v3704
    %v4287 = vunpack.c.h.b16 %v3704
    %v4288 = vunpack.c.l.b16 %v3705
    %v4289 = vunpack.c.h.b16 %v3705
    %v4290 = vunpack.c.l.b16 %v3706
    %v4291 = vunpack.c.h.b16 %v3706
    %v4292 = vunpack.c.l.b16 %v3707
    %v4293 = vunpack.c.h.b16 %v3707
    %v4294 = vunpack.c.l.b16 %v3708
    %v4295 = vunpack.c.h.b16 %v3708
    %v4296 = vunpack.c.l.b16 %v3709
    %v4297 = vunpack.c.h.b16 %v3709
    %v4298 = vunpack.c.l.b16 %v3710
    %v4299 = vunpack.c.h.b16 %v3710
    %v4300 = vunpack.c.l.b16 %v3711
    %v4301 = vunpack.c.h.b16 %v3711
    %v4302 = vunpack.c.l.b16 %v3712
    %v4303 = vunpack.c.h.b16 %v3712
    %v4304 = vunpack.c.l.b16 %v3713
    %v4305 = vunpack.c.h.b16 %v3713
    %v4306 = vunpack.c.l.b16 %v3714
    %v4307 = vunpack.c.h.b16 %v3714
    %v4308 = vunpack.c.l.b16 %v3715
    %v4309 = vunpack.c.h.b16 %v3715
    %v4310 = vunpack.c.l.b16 %v3716
    %v4311 = vunpack.c.h.b16 %v3716
    %v4312 = vunpack.c.l.b16 %v3717
    %v4313 = vunpack.c.h.b16 %v3717
    %v4314 = vunpack.c.l.b16 %v3718
    %v4315 = vunpack.c.h.b16 %v3718
    %v4316 = vunpack.c.l.b16 %v3719
    %v4317 = vunpack.c.h.b16 %v3719
    %v4318 = vunpack.c.l.b16 %v3720
    %v4319 = vunpack.c.h.b16 %v3720
    %v4320 = vunpack.c.l.b16 %v3721
    %v4321 = vunpack.c.h.b16 %v3721
    %v4322 = vunpack.c.l.b16 %v3722
    %v4323 = vunpack.c.h.b16 %v3722
    %v4324 = vunpack.c.l.b16 %v3723
    %v4325 = vunpack.c.h.b16 %v3723
    %v4326 = vunpack.c.l.b16 %v3724
    %v4327 = vunpack.c.h.b16 %v3724
    %v4328 = vunpack.c.l.b16 %v3725
    %v4329 = vunpack.c.h.b16 %v3725
    %v4330 = vunpack.c.l.b16 %v3726
    %v4331 = vunpack.c.h.b16 %v3726
    %v4332 = vunpack.c.l.b16 %v3727
    %v4333 = vunpack.c.h.b16 %v3727
    %v4334 = vunpack.c.l.b16 %v3728
    %v4335 = vunpack.c.h.b16 %v3728
    %v4336 = vunpack.c.l.b16 %v3729
    %v4337 = vunpack.c.h.b16 %v3729
    %v4338 = vunpack.c.l.b16 %v3730
    %v4339 = vunpack.c.h.b16 %v3730
    %v4340 = vunpack.c.l.b16 %v3731
    %v4341 = vunpack.c.h.b16 %v3731
    %v4342 = vunpack.c.l.b16 %v3732
    %v4343 = vunpack.c.h.b16 %v3732
    %v4344 = vunpack.c.l.b16 %v3733
    %v4345 = vunpack.c.h.b16 %v3733
    %v4346 = vunpack.c.l.b16 %v3734
    %v4347 = vunpack.c.h.b16 %v3734
    %v4348 = vunpack.c.l.b16 %v3735
    %v4349 = vunpack.c.h.b16 %v3735
    %v4350 = vunpack.c.l.b16 %v3736
    %v4351 = vunpack.c.h.b16 %v3736
    %v4352 = vunpack.c.l.b16 %v3737
    %v4353 = vunpack.c.h.b16 %v3737
    %v4354 = vunpack.c.l.b16 %v3738
    %v4355 = vunpack.c.h.b16 %v3738
    %v4356 = vunpack.c.l.b16 %v3739
    %v4357 = vunpack.c.h.b16 %v3739
    %v4358 = vunpack.c.l.b16 %v3740
    %v4359 = vunpack.c.h.b16 %v3740
    %v4360 = vunpack.c.l.b16 %v3741
    %v4361 = vunpack.c.h.b16 %v3741
    %v4362 = vunpack.c.l.b16 %v3742
    %v4363 = vunpack.c.h.b16 %v3742
    %v4364 = vunpack.c.l.b16 %v3743
    %v4365 = vunpack.c.h.b16 %v3743
    %v4366 = vunpack.c.l.b16 %v3744
    %v4367 = vunpack.c.h.b16 %v3744
    %v4368 = vunpack.c.l.b16 %v3745
    %v4369 = vunpack.c.h.b16 %v3745
    %v4370 = vunpack.c.l.b16 %v3746
    %v4371 = vunpack.c.h.b16 %v3746
    %v4372 = vunpack.c.l.b16 %v3747
    %v4373 = vunpack.c.h.b16 %v3747
    %v4374 = vunpack.c.l.b16 %v3748
    %v4375 = vunpack.c.h.b16 %v3748
    %v4376 = vunpack.c.l.b16 %v3749
    %v4377 = vunpack.c.h.b16 %v3749
    %v4378 = vunpack.c.l.b16 %v3750
    %v4379 = vunpack.c.h.b16 %v3750
    %v4380 = vunpack.c.l.b16 %v3751
    %v4381 = vunpack.c.h.b16 %v3751
    %v4382 = vunpack.c.l.b16 %v3752
    %v4383 = vunpack.c.h.b16 %v3752
    %v4384 = vunpack.c.l.b16 %v3753
    %v4385 = vunpack.c.h.b16 %v3753
    %v4386 = vunpack.c.l.b16 %v3754
    %v4387 = vunpack.c.h.b16 %v3754
    %v4388 = vunpack.c.l.b16 %v3755
    %v4389 = vunpack.c.h.b16 %v3755
    %v4390 = vunpack.c.l.b16 %v3756
    %v4391 = vunpack.c.h.b16 %v3756
    %v4392 = vunpack.c.l.b16 %v3757
    %v4393 = vunpack.c.h.b16 %v3757
    %v4394 = vunpack.c.l.b16 %v3758
    %v4395 = vunpack.c.h.b16 %v3758
    %v4396 = vunpack.c.l.b16 %v3759
    %v4397 = vunpack.c.h.b16 %v3759
    %v4398 = vunpack.c.l.b16 %v3760
    %v4399 = vunpack.c.h.b16 %v3760
    %v4400 = vunpack.c.l.b16 %v3761
    %v4401 = vunpack.c.h.b16 %v3761
    %v4402 = vunpack.c.l.b16 %v3762
    %v4403 = vunpack.c.h.b16 %v3762
    %v4404 = vunpack.c.l.b16 %v3763
    %v4405 = vunpack.c.h.b16 %v3763
    %v4406 = vunpack.c.l.b16 %v3764
    %v4407 = vunpack.c.h.b16 %v3764
    %v4408 = vunpack.c.l.b16 %v3765
    %v4409 = vunpack.c.h.b16 %v3765
    %v4410 = vunpack.c.l.b16 %v3766
    %v4411 = vunpack.c.h.b16 %v3766
    %v4412 = vunpack.c.l.b16 %v3767
    %v4413 = vunpack.c.h.b16 %v3767
    %v4414 = vunpack.c.l.b16 %v3768
    %v4415 = vunpack.c.h.b16 %v3768
    %v4416 = vunpack.c.l.b16 %v3769
    %v4417 = vunpack.c.h.b16 %v3769
    %v4418 = vunpack.c.l.b16 %v3770
    %v4419 = vunpack.c.h.b16 %v3770
    %v4420 = vunpack.c.l.b16 %v3771
    %v4421 = vunpack.c.h.b16 %v3771
    %v4422 = vunpack.c.l.b16 %v3772
    %v4423 = vunpack.c.h.b16 %v3772
    %v4424 = vunpack.c.l.b16 %v3773
    %v4425 = vunpack.c.h.b16 %v3773
    %v4426 = vunpack.c.l.b16 %v3774
    %v4427 = vunpack.c.h.b16 %v3774
    %v4428 = vunpack.c.l.b16 %v3775
    %v4429 = vunpack.c.h.b16 %v3775
    %v4430 = vunpack.c.l.b16 %v3776
    %v4431 = vunpack.c.h.b16 %v3776
    %v4432 = vunpack.c.l.b16 %v3777
    %v4433 = vunpack.c.h.b16 %v3777
    %v4434 = vunpack.c.l.b16 %v3778
    %v4435 = vunpack.c.h.b16 %v3778
    %v4436 = vunpack.c.l.b16 %v3779
    %v4437 = vunpack.c.h.b16 %v3779
    %v4438 = vunpack.c.l.b16 %v3780
    %v4439 = vunpack.c.h.b16 %v3780
    %v4440 = vunpack.c.l.b16 %v3781
    %v4441 = vunpack.c.h.b16 %v3781
    %v4442 = vunpack.c.l.b16 %v3782
    %v4443 = vunpack.c.h.b16 %v3782
    %v4444 = vunpack.c.l.b16 %v3783
    %v4445 = vunpack.c.h.b16 %v3783
    %v4446 = vunpack.c.l.b16 %v3784
    %v4447 = vunpack.c.h.b16 %v3784
    %v4448 = vunpack.c.l.b16 %v3785
    %v4449 = vunpack.c.h.b16 %v3785
    %v4450 = vunpack.c.l.b16 %v3786
    %v4451 = vunpack.c.h.b16 %v3786
    %v4452 = vunpack.c.l.b16 %v3787
    %v4453 = vunpack.c.h.b16 %v3787
    %v4454 = vunpack.c.l.b16 %v3788
    %v4455 = vunpack.c.h.b16 %v3788
    %v4456 = vunpack.c.l.b16 %v3789
    %v4457 = vunpack.c.h.b16 %v3789
    %v4458 = vunpack.c.l.b16 %v3790
    %v4459 = vunpack.c.h.b16 %v3790
    %v4460 = vunpack.c.l.b16 %v3791
    %v4461 = vunpack.c.h.b16 %v3791
    %v4462 = vunpack.c.l.b16 %v3792
    %v4463 = vunpack.c.h.b16 %v3792
    %v4464 = vunpack.c.l.b16 %v3793
    %v4465 = vunpack.c.h.b16 %v3793
    %v4466 = vunpack.c.l.b16 %v3794
    %v4467 = vunpack.c.h.b16 %v3794
    %v4468 = vunpack.c.l.b16 %v3795
    %v4469 = vunpack.c.h.b16 %v3795
    %v4470 = vunpack.c.l.b16 %v3796
    %v4471 = vunpack.c.h.b16 %v3796
    %v4472 = vunpack.c.l.b16 %v3797
    %v4473 = vunpack.c.h.b16 %v3797
    %v4474 = vunpack.c.l.b16 %v3798
    %v4475 = vunpack.c.h.b16 %v3798
    %v4476 = vunpack.c.l.b16 %v3799
    %v4477 = vunpack.c.h.b16 %v3799
    %v4478 = vunpack.c.l.b16 %v3800
    %v4479 = vunpack.c.h.b16 %v3800
    %v4480 = vunpack.c.l.b16 %v3801
    %v4481 = vunpack.c.h.b16 %v3801
    %v4482 = vunpack.c.l.b16 %v3802
    %v4483 = vunpack.c.h.b16 %v3802
    %v4484 = vunpack.c.l.b16 %v3803
    %v4485 = vunpack.c.h.b16 %v3803
    %v4486 = vunpack.c.l.b16 %v3804
    %v4487 = vunpack.c.h.b16 %v3804
    %v4488 = vunpack.c.l.b16 %v3805
    %v4489 = vunpack.c.h.b16 %v3805
    %v4490 = vunpack.c.l.b16 %v3806
    %v4491 = vunpack.c.h.b16 %v3806
    %v4492 = vunpack.c.l.b16 %v3807
    %v4493 = vunpack.c.h.b16 %v3807
    %v4494 = vunpack.c.l.b16 %v3808
    %v4495 = vunpack.c.h.b16 %v3808
    %v4496 = vunpack.c.l.b16 %v3809
    %v4497 = vunpack.c.h.b16 %v3809
    %v4498 = vunpack.c.l.b16 %v3810
    %v4499 = vunpack.c.h.b16 %v3810
    %v4500 = vunpack.c.l.b16 %v3811
    %v4501 = vunpack.c.h.b16 %v3811
    %v4502 = vunpack.c.l.b16 %v3812
    %v4503 = vunpack.c.h.b16 %v3812
    %v4504 = vunpack.c.l.b16 %v3813
    %v4505 = vunpack.c.h.b16 %v3813
    %v4506 = vunpack.c.l.b16 %v3814
    %v4507 = vunpack.c.h.b16 %v3814
    %v4508 = vunpack.c.l.b16 %v3815
    %v4509 = vunpack.c.h.b16 %v3815
    %v4510 = vunpack.c.l.b16 %v3816
    %v4511 = vunpack.c.h.b16 %v3816
    %v4512 = vunpack.c.l.b16 %v3817
    %v4513 = vunpack.c.h.b16 %v3817
    %v4514 = vunpack.c.l.b16 %v3818
    %v4515 = vunpack.c.h.b16 %v3818
    %v4516 = vunpack.c.l.b16 %v3819
    %v4517 = vunpack.c.h.b16 %v3819
    %v4518 = vunpack.c.l.b16 %v3820
    %v4519 = vunpack.c.h.b16 %v3820
    %v4520 = vunpack.c.l.b16 %v3821
    %v4521 = vunpack.c.h.b16 %v3821
    %v4522 = vunpack.c.l.b16 %v3822
    %v4523 = vunpack.c.h.b16 %v3822
    %v4524 = vunpack.c.l.b16 %v3823
    %v4525 = vunpack.c.h.b16 %v3823
    %v4526 = vunpack.c.l.b16 %v3824
    %v4527 = vunpack.c.h.b16 %v3824
    %v4528 = vunpack.c.l.b16 %v3825
    %v4529 = vunpack.c.h.b16 %v3825
    %v4530 = vunpack.c.l.b16 %v3826
    %v4531 = vunpack.c.h.b16 %v3826
    %v4532 = vunpack.c.l.b16 %v3827
    %v4533 = vunpack.c.h.b16 %v3827
    %v4534 = vunpack.c.l.b16 %v3828
    %v4535 = vunpack.c.h.b16 %v3828
    %v4536 = vunpack.c.l.b16 %v3829
    %v4537 = vunpack.c.h.b16 %v3829
    %v4538 = vunpack.c.l.b16 %v3830
    %v4539 = vunpack.c.h.b16 %v3830
    %v4540 = vunpack.c.l.b16 %v3831
    %v4541 = vunpack.c.h.b16 %v3831
    %v4542 = vunpack.c.l.b16 %v3832
    %v4543 = vunpack.c.h.b16 %v3832
    %v4544 = vunpack.c.l.b16 %v3833
    %v4545 = vunpack.c.h.b16 %v3833
    %v4546 = vunpack.c.l.b16 %v3834
    %v4547 = vunpack.c.h.b16 %v3834
    %v4548 = vunpack.c.l.b16 %v3835
    %v4549 = vunpack.c.h.b16 %v3835
    %v4550 = vunpack.c.l.b16 %v3836
    %v4551 = vunpack.c.h.b16 %v3836
    %v4552 = vunpack.c.l.b16 %v3837
    %v4553 = vunpack.c.h.b16 %v3837
    %v4554 = vunpack.c.l.b16 %v3838
    %v4555 = vunpack.c.h.b16 %v3838
    %v4556 = vunpack.c.l.b16 %v3839
    %v4557 = vunpack.c.h.b16 %v3839
    %v4558 = vunpack.c.l.b16 %v3840
    %v4559 = vunpack.c.h.b16 %v3840
    %v4560 = vunpack.c.l.b16 %v3841
    %v4561 = vunpack.c.h.b16 %v3841
    %v4562 = vunpack.c.l.b16 %v3842
    %v4563 = vunpack.c.h.b16 %v3842
    %v4564 = vunpack.c.l.b16 %v3843
    %v4565 = vunpack.c.h.b16 %v3843
    %v4566 = vunpack.c.l.b16 %v3844
    %v4567 = vunpack.c.h.b16 %v3844
    %v4568 = vunpack.c.l.b16 %v3845
    %v4569 = vunpack.c.h.b16 %v3845
    %v4570 = vunpack.c.l.b16 %v3846
    %v4571 = vunpack.c.h.b16 %v3846
    %v4572 = vunpack.c.l.b16 %v3847
    %v4573 = vunpack.c.h.b16 %v3847
    %v4574 = vunpack.c.l.b16 %v3848
    %v4575 = vunpack.c.h.b16 %v3848
    %v4576 = vunpack.c.l.b16 %v3849
    %v4577 = vunpack.c.h.b16 %v3849
    %v4578 = vunpack.c.l.b16 %v3850
    %v4579 = vunpack.c.h.b16 %v3850
    %v4580 = vunpack.c.l.b16 %v3851
    %v4581 = vunpack.c.h.b16 %v3851
    %v4582 = vunpack.c.l.b16 %v3852
    %v4583 = vunpack.c.h.b16 %v3852
    %v4584 = vunpack.c.l.b16 %v3853
    %v4585 = vunpack.c.h.b16 %v3853
    %v4586 = vunpack.c.l.b16 %v3854
    %v4587 = vunpack.c.h.b16 %v3854
    %v4588 = vunpack.c.l.b16 %v3855
    %v4589 = vunpack.c.h.b16 %v3855
    %v4590 = vunpack.c.l.b16 %v3856
    %v4591 = vunpack.c.h.b16 %v3856
    %v4592 = vunpack.c.l.b16 %v3857
    %v4593 = vunpack.c.h.b16 %v3857
    %v4594 = vunpack.c.l.b16 %v3858
    %v4595 = vunpack.c.h.b16 %v3858
    %v4596 = vunpack.c.l.b16 %v3859
    %v4597 = vunpack.c.h.b16 %v3859
    %v4598 = vunpack.c.l.b16 %v3860
    %v4599 = vunpack.c.h.b16 %v3860
    %v4600 = vunpack.c.l.b16 %v3861
    %v4601 = vunpack.c.h.b16 %v3861
    %v4602 = vunpack.c.l.b16 %v3862
    %v4603 = vunpack.c.h.b16 %v3862
    %v4604 = vunpack.c.l.b16 %v3863
    %v4605 = vunpack.c.h.b16 %v3863
    %v4606 = vunpack.c.l.b16 %v3864
    %v4607 = vunpack.c.h.b16 %v3864
    %v4608 = vunpack.c.l.b16 %v3865
    %v4609 = vunpack.c.h.b16 %v3865
    %v4610 = vunpack.c.l.b16 %v3866
    %v4611 = vunpack.c.h.b16 %v3866
    %v4612 = vunpack.c.l.b16 %v3867
    %v4613 = vunpack.c.h.b16 %v3867
    %v4614 = vunpack.c.l.b16 %v3868
    %v4615 = vunpack.c.h.b16 %v3868
    %v4616 = vunpack.c.l.b16 %v3869
    %v4617 = vunpack.c.h.b16 %v3869
    %v4618 = vunpack.c.l.b16 %v3870
    %v4619 = vunpack.c.h.b16 %v3870
    %v4620 = vunpack.c.l.b16 %v3871
    %v4621 = vunpack.c.h.b16 %v3871
    %v4622 = vunpack.c.l.b16 %v3872
    %v4623 = vunpack.c.h.b16 %v3872
    %v4624 = vunpack.c.l.b16 %v3873
    %v4625 = vunpack.c.h.b16 %v3873
    %v4626 = vunpack.c.l.b16 %v3874
    %v4627 = vunpack.c.h.b16 %v3874
    %v4628 = vunpack.c.l.b16 %v3875
    %v4629 = vunpack.c.h.b16 %v3875
    %v4630 = vunpack.c.l.b16 %v3876
    %v4631 = vunpack.c.h.b16 %v3876
    %v4632 = vunpack.c.l.b16 %v3877
    %v4633 = vunpack.c.h.b16 %v3877
    %v4634 = vunpack.c.l.b16 %v3878
    %v4635 = vunpack.c.h.b16 %v3878
    %v4636 = vunpack.c.l.b16 %v3879
    %v4637 = vunpack.c.h.b16 %v3879
    %v4638 = vunpack.c.l.b16 %v3880
    %v4639 = vunpack.c.h.b16 %v3880
    %v4640 = vunpack.c.l.b16 %v3881
    %v4641 = vunpack.c.h.b16 %v3881
    %v4642 = vunpack.c.l.b16 %v3882
    %v4643 = vunpack.c.h.b16 %v3882
    %v4644 = vunpack.c.l.b16 %v3883
    %v4645 = vunpack.c.h.b16 %v3883
    %v4646 = vunpack.c.l.b16 %v3884
    %v4647 = vunpack.c.h.b16 %v3884
    %v4648 = vunpack.c.l.b16 %v3885
    %v4649 = vunpack.c.h.b16 %v3885
    %v4650 = vunpack.c.l.b16 %v3886
    %v4651 = vunpack.c.h.b16 %v3886
    %v4652 = vunpack.c.l.b16 %v3887
    %v4653 = vunpack.c.h.b16 %v3887
    %v4654 = vunpack.c.l.b16 %v3888
    %v4655 = vunpack.c.h.b16 %v3888
    %v4656 = vunpack.c.l.b16 %v3889
    %v4657 = vunpack.c.h.b16 %v3889
    %v4658 = vunpack.c.l.b16 %v3890
    %v4659 = vunpack.c.h.b16 %v3890
    %v4660 = vunpack.c.l.b16 %v3891
    %v4661 = vunpack.c.h.b16 %v3891
    %v4662 = vunpack.c.l.b16 %v3892
    %v4663 = vunpack.c.h.b16 %v3892
    %v4664 = vunpack.c.l.b16 %v3893
    %v4665 = vunpack.c.h.b16 %v3893
    %v4666 = vunpack.c.l.b16 %v3894
    %v4667 = vunpack.c.h.b16 %v3894
    %v4668 = vunpack.c.l.b16 %v3895
    %v4669 = vunpack.c.h.b16 %v3895
    %v4670 = vunpack.c.l.b16 %v3896
    %v4671 = vunpack.c.h.b16 %v3896
    %v4672 = vunpack.c.l.b16 %v3897
    %v4673 = vunpack.c.h.b16 %v3897
    %v4674 = vunpack.c.l.b16 %v3898
    %v4675 = vunpack.c.h.b16 %v3898
    %v4676 = vunpack.c.l.b16 %v3899
    %v4677 = vunpack.c.h.b16 %v3899
    %v4678 = vpack.c.b16 %v4170, %v4166
    %v4679 = vpack.c.b16 %v4171, %v4167
    %v4680 = vpack.c.b16 %v4172, %v4168
    %v4681 = vpack.c.b16 %v4173, %v4169
    %v4682 = vpack.c.b16 %v4178, %v4174
    %v4683 = vpack.c.b16 %v4179, %v4175
    %v4684 = vpack.c.b16 %v4180, %v4176
    %v4685 = vpack.c.b16 %v4181, %v4177
    %v4686 = vpack.c.b16 %v4186, %v4182
    %v4687 = vpack.c.b16 %v4187, %v4183
    %v4688 = vpack.c.b16 %v4188, %v4184
    %v4689 = vpack.c.b16 %v4189, %v4185
    %v4690 = vpack.c.b16 %v4194, %v4190
    %v4691 = vpack.c.b16 %v4195, %v4191
    %v4692 = vpack.c.b16 %v4196, %v4192
    %v4693 = vpack.c.b16 %v4197, %v4193
    %v4694 = vpack.c.b16 %v4202, %v4198
    %v4695 = vpack.c.b16 %v4203, %v4199
    %v4696 = vpack.c.b16 %v4204, %v4200
    %v4697 = vpack.c.b16 %v4205, %v4201
    %v4698 = vpack.c.b16 %v4210, %v4206
    %v4699 = vpack.c.b16 %v4211, %v4207
    %v4700 = vpack.c.b16 %v4212, %v4208
    %v4701 = vpack.c.b16 %v4213, %v4209
    %v4702 = vpack.c.b16 %v4218, %v4214
    %v4703 = vpack.c.b16 %v4219, %v4215
    %v4704 = vpack.c.b16 %v4220, %v4216
    %v4705 = vpack.c.b16 %v4221, %v4217
    %v4706 = vpack.c.b16 %v4226, %v4222
    %v4707 = vpack.c.b16 %v4227, %v4223
    %v4708 = vpack.c.b16 %v4228, %v4224
    %v4709 = vpack.c.b16 %v4229, %v4225
    %v4710 = vpack.c.b16 %v4234, %v4230
    %v4711 = vpack.c.b16 %v4235, %v4231
    %v4712 = vpack.c.b16 %v4236, %v4232
    %v4713 = vpack.c.b16 %v4237, %v4233
    %v4714 = vpack.c.b16 %v4242, %v4238
    %v4715 = vpack.c.b16 %v4243, %v4239
    %v4716 = vpack.c.b16 %v4244, %v4240
    %v4717 = vpack.c.b16 %v4245, %v4241
    %v4718 = vpack.c.b16 %v4250, %v4246
    %v4719 = vpack.c.b16 %v4251, %v4247
    %v4720 = vpack.c.b16 %v4252, %v4248
    %v4721 = vpack.c.b16 %v4253, %v4249
    %v4722 = vpack.c.b16 %v4258, %v4254
    %v4723 = vpack.c.b16 %v4259, %v4255
    %v4724 = vpack.c.b16 %v4260, %v4256
    %v4725 = vpack.c.b16 %v4261, %v4257
    %v4726 = vpack.c.b16 %v4266, %v4262
    %v4727 = vpack.c.b16 %v4267, %v4263
    %v4728 = vpack.c.b16 %v4268, %v4264
    %v4729 = vpack.c.b16 %v4269, %v4265
    %v4730 = vpack.c.b16 %v4274, %v4270
    %v4731 = vpack.c.b16 %v4275, %v4271
    %v4732 = vpack.c.b16 %v4276, %v4272
    %v4733 = vpack.c.b16 %v4277, %v4273
    %v4734 = vpack.c.b16 %v4282, %v4278
    %v4735 = vpack.c.b16 %v4283, %v4279
    %v4736 = vpack.c.b16 %v4284, %v4280
    %v4737 = vpack.c.b16 %v4285, %v4281
    %v4738 = vpack.c.b16 %v4290, %v4286
    %v4739 = vpack.c.b16 %v4291, %v4287
    %v4740 = vpack.c.b16 %v4292, %v4288
    %v4741 = vpack.c.b16 %v4293, %v4289
    %v4742 = vpack.c.b16 %v4298, %v4294
    %v4743 = vpack.c.b16 %v4299, %v4295
    %v4744 = vpack.c.b16 %v4300, %v4296
    %v4745 = vpack.c.b16 %v4301, %v4297
    %v4746 = vpack.c.b16 %v4306, %v4302
    %v4747 = vpack.c.b16 %v4307, %v4303
    %v4748 = vpack.c.b16 %v4308, %v4304
    %v4749 = vpack.c.b16 %v4309, %v4305
    %v4750 = vpack.c.b16 %v4314, %v4310
    %v4751 = vpack.c.b16 %v4315, %v4311
    %v4752 = vpack.c.b16 %v4316, %v4312
    %v4753 = vpack.c.b16 %v4317, %v4313
    %v4754 = vpack.c.b16 %v4322, %v4318
    %v4755 = vpack.c.b16 %v4323, %v4319
    %v4756 = vpack.c.b16 %v4324, %v4320
    %v4757 = vpack.c.b16 %v4325, %v4321
    %v4758 = vpack.c.b16 %v4330, %v4326
    %v4759 = vpack.c.b16 %v4331, %v4327
    %v4760 = vpack.c.b16 %v4332, %v4328
    %v4761 = vpack.c.b16 %v4333, %v4329
    %v4762 = vpack.c.b16 %v4338, %v4334
    %v4763 = vpack.c.b16 %v4339, %v4335
    %v4764 = vpack.c.b16 %v4340, %v4336
    %v4765 = vpack.c.b16 %v4341, %v4337
    %v4766 = vpack.c.b16 %v4346, %v4342
    %v4767 = vpack.c.b16 %v4347, %v4343
    %v4768 = vpack.c.b16 %v4348, %v4344
    %v4769 = vpack.c.b16 %v4349, %v4345
    %v4770 = vpack.c.b16 %v4354, %v4350
    %v4771 = vpack.c.b16 %v4355, %v4351
    %v4772 = vpack.c.b16 %v4356, %v4352
    %v4773 = vpack.c.b16 %v4357, %v4353
    %v4774 = vpack.c.b16 %v4362, %v4358
    %v4775 = vpack.c.b16 %v4363, %v4359
    %v4776 = vpack.c.b16 %v4364, %v4360
    %v4777 = vpack.c.b16 %v4365, %v4361
    %v4778 = vpack.c.b16 %v4370, %v4366
    %v4779 = vpack.c.b16 %v4371, %v4367
    %v4780 = vpack.c.b16 %v4372, %v4368
    %v4781 = vpack.c.b16 %v4373, %v4369
    %v4782 = vpack.c.b16 %v4378, %v4374
    %v4783 = vpack.c.b16 %v4379, %v4375
    %v4784 = vpack.c.b16 %v4380, %v4376
    %v4785 = vpack.c.b16 %v4381, %v4377
    %v4786 = vpack.c.b16 %v4386, %v4382
    %v4787 = vpack.c.b16 %v4387, %v4383
    %v4788 = vpack.c.b16 %v4388, %v4384
    %v4789 = vpack.c.b16 %v4389, %v4385
    %v4790 = vpack.c.b16 %v4394, %v4390
    %v4791 = vpack.c.b16 %v4395, %v4391
    %v4792 = vpack.c.b16 %v4396, %v4392
    %v4793 = vpack.c.b16 %v4397, %v4393
    %v4794 = vpack.c.b16 %v4402, %v4398
    %v4795 = vpack.c.b16 %v4403, %v4399
    %v4796 = vpack.c.b16 %v4404, %v4400
    %v4797 = vpack.c.b16 %v4405, %v4401
    %v4798 = vpack.c.b16 %v4410, %v4406
    %v4799 = vpack.c.b16 %v4411, %v4407
    %v4800 = vpack.c.b16 %v4412, %v4408
    %v4801 = vpack.c.b16 %v4413, %v4409
    %v4802 = vpack.c.b16 %v4418, %v4414
    %v4803 = vpack.c.b16 %v4419, %v4415
    %v4804 = vpack.c.b16 %v4420, %v4416
    %v4805 = vpack.c.b16 %v4421, %v4417
    %v4806 = vpack.c.b16 %v4426, %v4422
    %v4807 = vpack.c.b16 %v4427, %v4423
    %v4808 = vpack.c.b16 %v4428, %v4424
    %v4809 = vpack.c.b16 %v4429, %v4425
    %v4810 = vpack.c.b16 %v4434, %v4430
    %v4811 = vpack.c.b16 %v4435, %v4431
    %v4812 = vpack.c.b16 %v4436, %v4432
    %v4813 = vpack.c.b16 %v4437, %v4433
    %v4814 = vpack.c.b16 %v4442, %v4438
    %v4815 = vpack.c.b16 %v4443, %v4439
    %v4816 = vpack.c.b16 %v4444, %v4440
    %v4817 = vpack.c.b16 %v4445, %v4441
    %v4818 = vpack.c.b16 %v4450, %v4446
    %v4819 = vpack.c.b16 %v4451, %v4447
    %v4820 = vpack.c.b16 %v4452, %v4448
    %v4821 = vpack.c.b16 %v4453, %v4449
    %v4822 = vpack.c.b16 %v4458, %v4454
    %v4823 = vpack.c.b16 %v4459, %v4455
    %v4824 = vpack.c.b16 %v4460, %v4456
    %v4825 = vpack.c.b16 %v4461, %v4457
    %v4826 = vpack.c.b16 %v4466, %v4462
    %v4827 = vpack.c.b16 %v4467, %v4463
    %v4828 = vpack.c.b16 %v4468, %v4464
    %v4829 = vpack.c.b16 %v4469, %v4465
    %v4830 = vpack.c.b16 %v4474, %v4470
    %v4831 = vpack.c.b16 %v4475, %v4471
    %v4832 = vpack.c.b16 %v4476, %v4472
    %v4833 = vpack.c.b16 %v4477, %v4473
    %v4834 = vpack.c.b16 %v4482, %v4478
    %v4835 = vpack.c.b16 %v4483, %v4479
    %v4836 = vpack.c.b16 %v4484, %v4480
    %v4837 = vpack.c.b16 %v4485, %v4481
    %v4838 = vpack.c.b16 %v4490, %v4486
    %v4839 = vpack.c.b16 %v4491, %v4487
    %v4840 = vpack.c.b16 %v4492, %v4488
    %v4841 = vpack.c.b16 %v4493, %v4489
    %v4842 = vpack.c.b16 %v4498, %v4494
    %v4843 = vpack.c.b16 %v4499, %v4495
    %v4844 = vpack.c.b16 %v4500, %v4496
    %v4845 = vpack.c.b16 %v4501, %v4497
    %v4846 = vpack.c.b16 %v4506, %v4502
    %v4847 = vpack.c.b16 %v4507, %v4503
    %v4848 = vpack.c.b16 %v4508, %v4504
    %v4849 = vpack.c.b16 %v4509, %v4505
    %v4850 = vpack.c.b16 %v4514, %v4510
    %v4851 = vpack.c.b16 %v4515, %v4511
    %v4852 = vpack.c.b16 %v4516, %v4512
    %v4853 = vpack.c.b16 %v4517, %v4513
    %v4854 = vpack.c.b16 %v4522, %v4518
    %v4855 = vpack.c.b16 %v4523, %v4519
    %v4856 = vpack.c.b16 %v4524, %v4520
    %v4857 = vpack.c.b16 %v4525, %v4521
    %v4858 = vpack.c.b16 %v4530, %v4526
    %v4859 = vpack.c.b16 %v4531, %v4527
    %v4860 = vpack.c.b16 %v4532, %v4528
    %v4861 = vpack.c.b16 %v4533, %v4529
    %v4862 = vpack.c.b16 %v4538, %v4534
    %v4863 = vpack.c.b16 %v4539, %v4535
    %v4864 = vpack.c.b16 %v4540, %v4536
    %v4865 = vpack.c.b16 %v4541, %v4537
    %v4866 = vpack.c.b16 %v4546, %v4542
    %v4867 = vpack.c.b16 %v4547, %v4543
    %v4868 = vpack.c.b16 %v4548, %v4544
    %v4869 = vpack.c.b16 %v4549, %v4545
    %v4870 = vpack.c.b16 %v4554, %v4550
    %v4871 = vpack.c.b16 %v4555, %v4551
    %v4872 = vpack.c.b16 %v4556, %v4552
    %v4873 = vpack.c.b16 %v4557, %v4553
    %v4874 = vpack.c.b16 %v4562, %v4558
    %v4875 = vpack.c.b16 %v4563, %v4559
    %v4876 = vpack.c.b16 %v4564, %v4560
    %v4877 = vpack.c.b16 %v4565, %v4561
    %v4878 = vpack.c.b16 %v4570, %v4566
    %v4879 = vpack.c.b16 %v4571, %v4567
    %v4880 = vpack.c.b16 %v4572, %v4568
    %v4881 = vpack.c.b16 %v4573, %v4569
    %v4882 = vpack.c.b16 %v4578, %v4574
    %v4883 = vpack.c.b16 %v4579, %v4575
    %v4884 = vpack.c.b16 %v4580, %v4576
    %v4885 = vpack.c.b16 %v4581, %v4577
    %v4886 = vpack.c.b16 %v4586, %v4582
    %v4887 = vpack.c.b16 %v4587, %v4583
    %v4888 = vpack.c.b16 %v4588, %v4584
    %v4889 = vpack.c.b16 %v4589, %v4585
    %v4890 = vpack.c.b16 %v4594, %v4590
    %v4891 = vpack.c.b16 %v4595, %v4591
    %v4892 = vpack.c.b16 %v4596, %v4592
    %v4893 = vpack.c.b16 %v4597, %v4593
    %v4894 = vpack.c.b16 %v4602, %v4598
    %v4895 = vpack.c.b16 %v4603, %v4599
    %v4896 = vpack.c.b16 %v4604, %v4600
    %v4897 = vpack.c.b16 %v4605, %v4601
    %v4898 = vpack.c.b16 %v4610, %v4606
    %v4899 = vpack.c.b16 %v4611, %v4607
    %v4900 = vpack.c.b16 %v4612, %v4608
    %v4901 = vpack.c.b16 %v4613, %v4609
    %v4902 = vpack.c.b16 %v4618, %v4614
    %v4903 = vpack.c.b16 %v4619, %v4615
    %v4904 = vpack.c.b16 %v4620, %v4616
    %v4905 = vpack.c.b16 %v4621, %v4617
    %v4906 = vpack.c.b16 %v4626, %v4622
    %v4907 = vpack.c.b16 %v4627, %v4623
    %v4908 = vpack.c.b16 %v4628, %v4624
    %v4909 = vpack.c.b16 %v4629, %v4625
    %v4910 = vpack.c.b16 %v4634, %v4630
    %v4911 = vpack.c.b16 %v4635, %v4631
    %v4912 = vpack.c.b16 %v4636, %v4632
    %v4913 = vpack.c.b16 %v4637, %v4633
    %v4914 = vpack.c.b16 %v4642, %v4638
    %v4915 = vpack.c.b16 %v4643, %v4639
    %v4916 = vpack.c.b16 %v4644, %v4640
    %v4917 = vpack.c.b16 %v4645, %v4641
    %v4918 = vpack.c.b16 %v4650, %v4646
    %v4919 = vpack.c.b16 %v4651, %v4647
    %v4920 = vpack.c.b16 %v4652, %v4648
    %v4921 = vpack.c.b16 %v4653, %v4649
    %v4922 = vpack.c.b16 %v4658, %v4654
    %v4923 = vpack.c.b16 %v4659, %v4655
    %v4924 = vpack.c.b16 %v4660, %v4656
    %v4925 = vpack.c.b16 %v4661, %v4657
    %v4926 = vpack.c.b16 %v4666, %v4662
    %v4927 = vpack.c.b16 %v4667, %v4663
    %v4928 = vpack.c.b16 %v4668, %v4664
    %v4929 = vpack.c.b16 %v4669, %v4665
    %v4930 = vpack.c.b16 %v4674, %v4670
    %v4931 = vpack.c.b16 %v4675, %v4671
    %v4932 = vpack.c.b16 %v4676, %v4672
    %v4933 = vpack.c.b16 %v4677, %v4673
    %5190 = vmatpush.bf16.msra.mxu0 %v4706
    %5191 = vmatpush.bf16.msra.mxu0 %v4702
    %5192 = vmatpush.bf16.msra.mxu0 %v4698
    %5193 = vmatpush.bf16.msra.mxu0 %v4694
    %5194 = vmatpush.bf16.msra.mxu0 %v4690
    %5195 = vmatpush.bf16.msra.mxu0 %v4686
    %5196 = vmatpush.bf16.msra.mxu0 %v4682
    %5197 = vmatpush.bf16.msra.mxu0 %v4678
    %5198 = vmatmul.bf16.gmra.mxu0 %v3636
    %v5199 = vpop.f32.mrf.mxu0
    %v5200 = vadd.f32 %v3902, %v5199
    %v5201 = vpop.f32.mrf.mxu0
    %5202 = vdwg.mxu0
    %5203 = vmatpush.bf16.msra.mxu0 %v4738
    %5204 = vmatpush.bf16.msra.mxu0 %v4734
    %5205 = vmatpush.bf16.msra.mxu0 %v4730
    %5206 = vmatpush.bf16.msra.mxu0 %v4726
    %5207 = vmatpush.bf16.msra.mxu0 %v4722
    %5208 = vmatpush.bf16.msra.mxu0 %v4718
    %5209 = vmatpush.bf16.msra.mxu0 %v4714
    %5210 = vmatpush.bf16.msra.mxu0 %v4710
    %5211 = vmatmul.bf16.gmra.mxu0 %v3637
    %v5212 = vpop.f32.mrf.mxu0
    %v5213 = vadd.f32 %v5200, %v5212
    %v5214 = vpop.f32.mrf.mxu0
    %5215 = vdwg.mxu0
    %5216 = vmatpush.bf16.msra.mxu0 %v4770
    %5217 = vmatpush.bf16.msra.mxu0 %v4766
    %5218 = vmatpush.bf16.msra.mxu0 %v4762
    %5219 = vmatpush.bf16.msra.mxu0 %v4758
    %5220 = vmatpush.bf16.msra.mxu0 %v4754
    %5221 = vmatpush.bf16.msra.mxu0 %v4750
    %5222 = vmatpush.bf16.msra.mxu0 %v4746
    %5223 = vmatpush.bf16.msra.mxu0 %v4742
    %5224 = vmatmul.bf16.gmra.mxu0 %v3638
    %v5225 = vpop.f32.mrf.mxu0
    %v5226 = vadd.f32 %v5213, %v5225
    %v5227 = vpop.f32.mrf.mxu0
    %5228 = vdwg.mxu0
    %5229 = vmatpush.bf16.msra.mxu0 %v4802
    %5230 = vmatpush.bf16.msra.mxu0 %v4798
    %5231 = vmatpush.bf16.msra.mxu0 %v4794
    %5232 = vmatpush.bf16.msra.mxu0 %v4790
    %5233 = vmatpush.bf16.msra.mxu0 %v4786
    %5234 = vmatpush.bf16.msra.mxu0 %v4782
    %5235 = vmatpush.bf16.msra.mxu0 %v4778
    %5236 = vmatpush.bf16.msra.mxu0 %v4774
    %5237 = vmatmul.bf16.gmra.mxu0 %v3639
    %v5238 = vpop.f32.mrf.mxu0
    %v5239 = vadd.f32 %v5226, %v5238
    %v5240 = vpop.f32.mrf.mxu0
    %5241 = vdwg.mxu0
    %5242 = vmatpush.bf16.msra.mxu0 %v4834
    %5243 = vmatpush.bf16.msra.mxu0 %v4830
    %5244 = vmatpush.bf16.msra.mxu0 %v4826
    %5245 = vmatpush.bf16.msra.mxu0 %v4822
    %5246 = vmatpush.bf16.msra.mxu0 %v4818
    %5247 = vmatpush.bf16.msra.mxu0 %v4814
    %5248 = vmatpush.bf16.msra.mxu0 %v4810
    %5249 = vmatpush.bf16.msra.mxu0 %v4806
    %5250 = vmatmul.bf16.gmra.mxu0 %v3640
    %v5251 = vpop.f32.mrf.mxu0
    %v5252 = vadd.f32 %v5239, %v5251
    %v5253 = vpop.f32.mrf.mxu0
    %5254 = vdwg.mxu0
    %5255 = vmatpush.bf16.msra.mxu0 %v4866
    %5256 = vmatpush.bf16.msra.mxu0 %v4862
    %5257 = vmatpush.bf16.msra.mxu0 %v4858
    %5258 = vmatpush.bf16.msra.mxu0 %v4854
    %5259 = vmatpush.bf16.msra.mxu0 %v4850
    %5260 = vmatpush.bf16.msra.mxu0 %v4846
    %5261 = vmatpush.bf16.msra.mxu0 %v4842
    %5262 = vmatpush.bf16.msra.mxu0 %v4838
    %5263 = vmatmul.bf16.gmra.mxu0 %v3641
    %v5264 = vpop.f32.mrf.mxu0
    %v5265 = vadd.f32 %v5252, %v5264
    %v5266 = vpop.f32.mrf.mxu0
    %5267 = vdwg.mxu0
    %5268 = vmatpush.bf16.msra.mxu0 %v4898
    %5269 = vmatpush.bf16.msra.mxu0 %v4894
    %5270 = vmatpush.bf16.msra.mxu0 %v4890
    %5271 = vmatpush.bf16.msra.mxu0 %v4886
    %5272 = vmatpush.bf16.msra.mxu0 %v4882
    %5273 = vmatpush.bf16.msra.mxu0 %v4878
    %5274 = vmatpush.bf16.msra.mxu0 %v4874
    %5275 = vmatpush.bf16.msra.mxu0 %v4870
    %5276 = vmatmul.bf16.gmra.mxu0 %v3642
    %v5277 = vpop.f32.mrf.mxu0
    %v5278 = vadd.f32 %v5265, %v5277
    %v5279 = vpop.f32.mrf.mxu0
    %5280 = vdwg.mxu0
    %5281 = vmatpush.bf16.msra.mxu0 %v4930
    %5282 = vmatpush.bf16.msra.mxu0 %v4926
    %5283 = vmatpush.bf16.msra.mxu0 %v4922
    %5284 = vmatpush.bf16.msra.mxu0 %v4918
    %5285 = vmatpush.bf16.msra.mxu0 %v4914
    %5286 = vmatpush.bf16.msra.mxu0 %v4910
    %5287 = vmatpush.bf16.msra.mxu0 %v4906
    %5288 = vmatpush.bf16.msra.mxu0 %v4902
    %5289 = vmatmul.bf16.gmra.mxu0 %v3643
    %v5290 = vpop.f32.mrf.mxu0
    %v5291 = vadd.f32 %v5278, %v5290
    %v5292 = vpop.f32.mrf.mxu0
    %5293 = vdwg.mxu0
    %5294 = vmatpush.bf16.msra.mxu0 %v4707
    %5295 = vmatpush.bf16.msra.mxu0 %v4703
    %5296 = vmatpush.bf16.msra.mxu0 %v4699
    %5297 = vmatpush.bf16.msra.mxu0 %v4695
    %5298 = vmatpush.bf16.msra.mxu0 %v4691
    %5299 = vmatpush.bf16.msra.mxu0 %v4687
    %5300 = vmatpush.bf16.msra.mxu0 %v4683
    %5301 = vmatpush.bf16.msra.mxu0 %v4679
    %5302 = vmatmul.bf16.gmra.mxu0 %v3636
    %v5303 = vpop.f32.mrf.mxu0
    %v5304 = vadd.f32 %v3903, %v5303
    %v5305 = vpop.f32.mrf.mxu0
    %5306 = vdwg.mxu0
    %5307 = vmatpush.bf16.msra.mxu0 %v4739
    %5308 = vmatpush.bf16.msra.mxu0 %v4735
    %5309 = vmatpush.bf16.msra.mxu0 %v4731
    %5310 = vmatpush.bf16.msra.mxu0 %v4727
    %5311 = vmatpush.bf16.msra.mxu0 %v4723
    %5312 = vmatpush.bf16.msra.mxu0 %v4719
    %5313 = vmatpush.bf16.msra.mxu0 %v4715
    %5314 = vmatpush.bf16.msra.mxu0 %v4711
    %5315 = vmatmul.bf16.gmra.mxu0 %v3637
    %v5316 = vpop.f32.mrf.mxu0
    %v5317 = vadd.f32 %v5304, %v5316
    %v5318 = vpop.f32.mrf.mxu0
    %5319 = vdwg.mxu0
    %5320 = vmatpush.bf16.msra.mxu0 %v4771
    %5321 = vmatpush.bf16.msra.mxu0 %v4767
    %5322 = vmatpush.bf16.msra.mxu0 %v4763
    %5323 = vmatpush.bf16.msra.mxu0 %v4759
    %5324 = vmatpush.bf16.msra.mxu0 %v4755
    %5325 = vmatpush.bf16.msra.mxu0 %v4751
    %5326 = vmatpush.bf16.msra.mxu0 %v4747
    %5327 = vmatpush.bf16.msra.mxu0 %v4743
    %5328 = vmatmul.bf16.gmra.mxu0 %v3638
    %v5329 = vpop.f32.mrf.mxu0
    %v5330 = vadd.f32 %v5317, %v5329
    %v5331 = vpop.f32.mrf.mxu0
    %5332 = vdwg.mxu0
    %5333 = vmatpush.bf16.msra.mxu0 %v4803
    %5334 = vmatpush.bf16.msra.mxu0 %v4799
    %5335 = vmatpush.bf16.msra.mxu0 %v4795
    %5336 = vmatpush.bf16.msra.mxu0 %v4791
    %5337 = vmatpush.bf16.msra.mxu0 %v4787
    %5338 = vmatpush.bf16.msra.mxu0 %v4783
    %5339 = vmatpush.bf16.msra.mxu0 %v4779
    %5340 = vmatpush.bf16.msra.mxu0 %v4775
    %5341 = vmatmul.bf16.gmra.mxu0 %v3639
    %v5342 = vpop.f32.mrf.mxu0
    %v5343 = vadd.f32 %v5330, %v5342
    %v5344 = vpop.f32.mrf.mxu0
    %5345 = vdwg.mxu0
    %5346 = vmatpush.bf16.msra.mxu0 %v4835
    %5347 = vmatpush.bf16.msra.mxu0 %v4831
    %5348 = vmatpush.bf16.msra.mxu0 %v4827
    %5349 = vmatpush.bf16.msra.mxu0 %v4823
    %5350 = vmatpush.bf16.msra.mxu0 %v4819
    %5351 = vmatpush.bf16.msra.mxu0 %v4815
    %5352 = vmatpush.bf16.msra.mxu0 %v4811
    %5353 = vmatpush.bf16.msra.mxu0 %v4807
    %5354 = vmatmul.bf16.gmra.mxu0 %v3640
    %v5355 = vpop.f32.mrf.mxu0
    %v5356 = vadd.f32 %v5343, %v5355
    %v5357 = vpop.f32.mrf.mxu0
    %5358 = vdwg.mxu0
    %5359 = vmatpush.bf16.msra.mxu0 %v4867
    %5360 = vmatpush.bf16.msra.mxu0 %v4863
    %5361 = vmatpush.bf16.msra.mxu0 %v4859
    %5362 = vmatpush.bf16.msra.mxu0 %v4855
    %5363 = vmatpush.bf16.msra.mxu0 %v4851
    %5364 = vmatpush.bf16.msra.mxu0 %v4847
    %5365 = vmatpush.bf16.msra.mxu0 %v4843
    %5366 = vmatpush.bf16.msra.mxu0 %v4839
    %5367 = vmatmul.bf16.gmra.mxu0 %v3641
    %v5368 = vpop.f32.mrf.mxu0
    %v5369 = vadd.f32 %v5356, %v5368
    %v5370 = vpop.f32.mrf.mxu0
    %5371 = vdwg.mxu0
    %5372 = vmatpush.bf16.msra.mxu0 %v4899
    %5373 = vmatpush.bf16.msra.mxu0 %v4895
    %5374 = vmatpush.bf16.msra.mxu0 %v4891
    %5375 = vmatpush.bf16.msra.mxu0 %v4887
    %5376 = vmatpush.bf16.msra.mxu0 %v4883
    %5377 = vmatpush.bf16.msra.mxu0 %v4879
    %5378 = vmatpush.bf16.msra.mxu0 %v4875
    %5379 = vmatpush.bf16.msra.mxu0 %v4871
    %5380 = vmatmul.bf16.gmra.mxu0 %v3642
    %v5381 = vpop.f32.mrf.mxu0
    %v5382 = vadd.f32 %v5369, %v5381
    %v5383 = vpop.f32.mrf.mxu0
    %5384 = vdwg.mxu0
    %5385 = vmatpush.bf16.msra.mxu0 %v4931
    %5386 = vmatpush.bf16.msra.mxu0 %v4927
    %5387 = vmatpush.bf16.msra.mxu0 %v4923
    %5388 = vmatpush.bf16.msra.mxu0 %v4919
    %5389 = vmatpush.bf16.msra.mxu0 %v4915
    %5390 = vmatpush.bf16.msra.mxu0 %v4911
    %5391 = vmatpush.bf16.msra.mxu0 %v4907
    %5392 = vmatpush.bf16.msra.mxu0 %v4903
    %5393 = vmatmul.bf16.gmra.mxu0 %v3643
    %v5394 = vpop.f32.mrf.mxu0
    %v5395 = vadd.f32 %v5382, %v5394
    %v5396 = vpop.f32.mrf.mxu0
    %5397 = vdwg.mxu0
    %5398 = vmatpush.bf16.msra.mxu0 %v4708
    %5399 = vmatpush.bf16.msra.mxu0 %v4704
    %5400 = vmatpush.bf16.msra.mxu0 %v4700
    %5401 = vmatpush.bf16.msra.mxu0 %v4696
    %5402 = vmatpush.bf16.msra.mxu0 %v4692
    %5403 = vmatpush.bf16.msra.mxu0 %v4688
    %5404 = vmatpush.bf16.msra.mxu0 %v4684
    %5405 = vmatpush.bf16.msra.mxu0 %v4680
    %5406 = vmatmul.bf16.gmra.mxu0 %v3636
    %v5407 = vpop.f32.mrf.mxu0
    %v5408 = vadd.f32 %v3904, %v5407
    %v5409 = vpop.f32.mrf.mxu0
    %5410 = vdwg.mxu0
    %5411 = vmatpush.bf16.msra.mxu0 %v4740
    %5412 = vmatpush.bf16.msra.mxu0 %v4736
    %5413 = vmatpush.bf16.msra.mxu0 %v4732
    %5414 = vmatpush.bf16.msra.mxu0 %v4728
    %5415 = vmatpush.bf16.msra.mxu0 %v4724
    %5416 = vmatpush.bf16.msra.mxu0 %v4720
    %5417 = vmatpush.bf16.msra.mxu0 %v4716
    %5418 = vmatpush.bf16.msra.mxu0 %v4712
    %5419 = vmatmul.bf16.gmra.mxu0 %v3637
    %v5420 = vpop.f32.mrf.mxu0
    %v5421 = vadd.f32 %v5408, %v5420
    %v5422 = vpop.f32.mrf.mxu0
    %5423 = vdwg.mxu0
    %5424 = vmatpush.bf16.msra.mxu0 %v4772
    %5425 = vmatpush.bf16.msra.mxu0 %v4768
    %5426 = vmatpush.bf16.msra.mxu0 %v4764
    %5427 = vmatpush.bf16.msra.mxu0 %v4760
    %5428 = vmatpush.bf16.msra.mxu0 %v4756
    %5429 = vmatpush.bf16.msra.mxu0 %v4752
    %5430 = vmatpush.bf16.msra.mxu0 %v4748
    %5431 = vmatpush.bf16.msra.mxu0 %v4744
    %5432 = vmatmul.bf16.gmra.mxu0 %v3638
    %v5433 = vpop.f32.mrf.mxu0
    %v5434 = vadd.f32 %v5421, %v5433
    %v5435 = vpop.f32.mrf.mxu0
    %5436 = vdwg.mxu0
    %5437 = vmatpush.bf16.msra.mxu0 %v4804
    %5438 = vmatpush.bf16.msra.mxu0 %v4800
    %5439 = vmatpush.bf16.msra.mxu0 %v4796
    %5440 = vmatpush.bf16.msra.mxu0 %v4792
    %5441 = vmatpush.bf16.msra.mxu0 %v4788
    %5442 = vmatpush.bf16.msra.mxu0 %v4784
    %5443 = vmatpush.bf16.msra.mxu0 %v4780
    %5444 = vmatpush.bf16.msra.mxu0 %v4776
    %5445 = vmatmul.bf16.gmra.mxu0 %v3639
    %v5446 = vpop.f32.mrf.mxu0
    %v5447 = vadd.f32 %v5434, %v5446
    %v5448 = vpop.f32.mrf.mxu0
    %5449 = vdwg.mxu0
    %5450 = vmatpush.bf16.msra.mxu0 %v4836
    %5451 = vmatpush.bf16.msra.mxu0 %v4832
    %5452 = vmatpush.bf16.msra.mxu0 %v4828
    %5453 = vmatpush.bf16.msra.mxu0 %v4824
    %5454 = vmatpush.bf16.msra.mxu0 %v4820
    %5455 = vmatpush.bf16.msra.mxu0 %v4816
    %5456 = vmatpush.bf16.msra.mxu0 %v4812
    %5457 = vmatpush.bf16.msra.mxu0 %v4808
    %5458 = vmatmul.bf16.gmra.mxu0 %v3640
    %v5459 = vpop.f32.mrf.mxu0
    %v5460 = vadd.f32 %v5447, %v5459
    %v5461 = vpop.f32.mrf.mxu0
    %5462 = vdwg.mxu0
    %5463 = vmatpush.bf16.msra.mxu0 %v4868
    %5464 = vmatpush.bf16.msra.mxu0 %v4864
    %5465 = vmatpush.bf16.msra.mxu0 %v4860
    %5466 = vmatpush.bf16.msra.mxu0 %v4856
    %5467 = vmatpush.bf16.msra.mxu0 %v4852
    %5468 = vmatpush.bf16.msra.mxu0 %v4848
    %5469 = vmatpush.bf16.msra.mxu0 %v4844
    %5470 = vmatpush.bf16.msra.mxu0 %v4840
    %5471 = vmatmul.bf16.gmra.mxu0 %v3641
    %v5472 = vpop.f32.mrf.mxu0
    %v5473 = vadd.f32 %v5460, %v5472
    %v5474 = vpop.f32.mrf.mxu0
    %5475 = vdwg.mxu0
    %5476 = vmatpush.bf16.msra.mxu0 %v4900
    %5477 = vmatpush.bf16.msra.mxu0 %v4896
    %5478 = vmatpush.bf16.msra.mxu0 %v4892
    %5479 = vmatpush.bf16.msra.mxu0 %v4888
    %5480 = vmatpush.bf16.msra.mxu0 %v4884
    %5481 = vmatpush.bf16.msra.mxu0 %v4880
    %5482 = vmatpush.bf16.msra.mxu0 %v4876
    %5483 = vmatpush.bf16.msra.mxu0 %v4872
    %5484 = vmatmul.bf16.gmra.mxu0 %v3642
    %v5485 = vpop.f32.mrf.mxu0
    %v5486 = vadd.f32 %v5473, %v5485
    %v5487 = vpop.f32.mrf.mxu0
    %5488 = vdwg.mxu0
    %5489 = vmatpush.bf16.msra.mxu0 %v4932
    %5490 = vmatpush.bf16.msra.mxu0 %v4928
    %5491 = vmatpush.bf16.msra.mxu0 %v4924
    %5492 = vmatpush.bf16.msra.mxu0 %v4920
    %5493 = vmatpush.bf16.msra.mxu0 %v4916
    %5494 = vmatpush.bf16.msra.mxu0 %v4912
    %5495 = vmatpush.bf16.msra.mxu0 %v4908
    %5496 = vmatpush.bf16.msra.mxu0 %v4904
    %5497 = vmatmul.bf16.gmra.mxu0 %v3643
    %v5498 = vpop.f32.mrf.mxu0
    %v5499 = vadd.f32 %v5486, %v5498
    %v5500 = vpop.f32.mrf.mxu0
    %5501 = vdwg.mxu0
    %5502 = vmatpush.bf16.msra.mxu0 %v4709
    %5503 = vmatpush.bf16.msra.mxu0 %v4705
    %5504 = vmatpush.bf16.msra.mxu0 %v4701
    %5505 = vmatpush.bf16.msra.mxu0 %v4697
    %5506 = vmatpush.bf16.msra.mxu0 %v4693
    %5507 = vmatpush.bf16.msra.mxu0 %v4689
    %5508 = vmatpush.bf16.msra.mxu0 %v4685
    %5509 = vmatpush.bf16.msra.mxu0 %v4681
    %5510 = vmatmul.bf16.gmra.mxu0 %v3636
    %v5511 = vpop.f32.mrf.mxu0
    %v5512 = vadd.f32 %v3905, %v5511
    %v5513 = vpop.f32.mrf.mxu0
    %5514 = vdwg.mxu0
    %5515 = vmatpush.bf16.msra.mxu0 %v4741
    %5516 = vmatpush.bf16.msra.mxu0 %v4737
    %5517 = vmatpush.bf16.msra.mxu0 %v4733
    %5518 = vmatpush.bf16.msra.mxu0 %v4729
    %5519 = vmatpush.bf16.msra.mxu0 %v4725
    %5520 = vmatpush.bf16.msra.mxu0 %v4721
    %5521 = vmatpush.bf16.msra.mxu0 %v4717
    %5522 = vmatpush.bf16.msra.mxu0 %v4713
    %5523 = vmatmul.bf16.gmra.mxu0 %v3637
    %v5524 = vpop.f32.mrf.mxu0
    %v5525 = vadd.f32 %v5512, %v5524
    %v5526 = vpop.f32.mrf.mxu0
    %5527 = vdwg.mxu0
    %5528 = vmatpush.bf16.msra.mxu0 %v4773
    %5529 = vmatpush.bf16.msra.mxu0 %v4769
    %5530 = vmatpush.bf16.msra.mxu0 %v4765
    %5531 = vmatpush.bf16.msra.mxu0 %v4761
    %5532 = vmatpush.bf16.msra.mxu0 %v4757
    %5533 = vmatpush.bf16.msra.mxu0 %v4753
    %5534 = vmatpush.bf16.msra.mxu0 %v4749
    %5535 = vmatpush.bf16.msra.mxu0 %v4745
    %5536 = vmatmul.bf16.gmra.mxu0 %v3638
    %v5537 = vpop.f32.mrf.mxu0
    %v5538 = vadd.f32 %v5525, %v5537
    %v5539 = vpop.f32.mrf.mxu0
    %5540 = vdwg.mxu0
    %5541 = vmatpush.bf16.msra.mxu0 %v4805
    %5542 = vmatpush.bf16.msra.mxu0 %v4801
    %5543 = vmatpush.bf16.msra.mxu0 %v4797
    %5544 = vmatpush.bf16.msra.mxu0 %v4793
    %5545 = vmatpush.bf16.msra.mxu0 %v4789
    %5546 = vmatpush.bf16.msra.mxu0 %v4785
    %5547 = vmatpush.bf16.msra.mxu0 %v4781
    %5548 = vmatpush.bf16.msra.mxu0 %v4777
    %5549 = vmatmul.bf16.gmra.mxu0 %v3639
    %v5550 = vpop.f32.mrf.mxu0
    %v5551 = vadd.f32 %v5538, %v5550
    %v5552 = vpop.f32.mrf.mxu0
    %5553 = vdwg.mxu0
    %5554 = vmatpush.bf16.msra.mxu0 %v4837
    %5555 = vmatpush.bf16.msra.mxu0 %v4833
    %5556 = vmatpush.bf16.msra.mxu0 %v4829
    %5557 = vmatpush.bf16.msra.mxu0 %v4825
    %5558 = vmatpush.bf16.msra.mxu0 %v4821
    %5559 = vmatpush.bf16.msra.mxu0 %v4817
    %5560 = vmatpush.bf16.msra.mxu0 %v4813
    %5561 = vmatpush.bf16.msra.mxu0 %v4809
    %5562 = vmatmul.bf16.gmra.mxu0 %v3640
    %v5563 = vpop.f32.mrf.mxu0
    %v5564 = vadd.f32 %v5551, %v5563
    %v5565 = vpop.f32.mrf.mxu0
    %5566 = vdwg.mxu0
    %5567 = vmatpush.bf16.msra.mxu0 %v4869
    %5568 = vmatpush.bf16.msra.mxu0 %v4865
    %5569 = vmatpush.bf16.msra.mxu0 %v4861
    %5570 = vmatpush.bf16.msra.mxu0 %v4857
    %5571 = vmatpush.bf16.msra.mxu0 %v4853
    %5572 = vmatpush.bf16.msra.mxu0 %v4849
    %5573 = vmatpush.bf16.msra.mxu0 %v4845
    %5574 = vmatpush.bf16.msra.mxu0 %v4841
    %5575 = vmatmul.bf16.gmra.mxu0 %v3641
    %v5576 = vpop.f32.mrf.mxu0
    %v5577 = vadd.f32 %v5564, %v5576
    %v5578 = vpop.f32.mrf.mxu0
    %5579 = vdwg.mxu0
    %5580 = vmatpush.bf16.msra.mxu0 %v4901
    %5581 = vmatpush.bf16.msra.mxu0 %v4897
    %5582 = vmatpush.bf16.msra.mxu0 %v4893
    %5583 = vmatpush.bf16.msra.mxu0 %v4889
    %5584 = vmatpush.bf16.msra.mxu0 %v4885
    %5585 = vmatpush.bf16.msra.mxu0 %v4881
    %5586 = vmatpush.bf16.msra.mxu0 %v4877
    %5587 = vmatpush.bf16.msra.mxu0 %v4873
    %5588 = vmatmul.bf16.gmra.mxu0 %v3642
    %v5589 = vpop.f32.mrf.mxu0
    %v5590 = vadd.f32 %v5577, %v5589
    %v5591 = vpop.f32.mrf.mxu0
    %5592 = vdwg.mxu0
    %5593 = vmatpush.bf16.msra.mxu0 %v4933
    %5594 = vmatpush.bf16.msra.mxu0 %v4929
    %5595 = vmatpush.bf16.msra.mxu0 %v4925
    %5596 = vmatpush.bf16.msra.mxu0 %v4921
    %5597 = vmatpush.bf16.msra.mxu0 %v4917
    %5598 = vmatpush.bf16.msra.mxu0 %v4913
    %5599 = vmatpush.bf16.msra.mxu0 %v4909
    %5600 = vmatpush.bf16.msra.mxu0 %v4905
    %5601 = vmatmul.bf16.gmra.mxu0 %v3643
    %v5602 = vpop.f32.mrf.mxu0
    %v5603 = vadd.f32 %v5590, %v5602
    %v5604 = vpop.f32.mrf.mxu0
    %5605 = vdwg.mxu0
    %vm5606 = vcmp.gt.f32.partialorder %v5291, 0.0
    %vm5607 = vcmp.gt.f32.partialorder %v5395, 0.0
    %vm5608 = vcmp.gt.f32.partialorder %v5499, 0.0
    %vm5609 = vcmp.gt.f32.partialorder %v5603, 0.0
    %v5610 = vmul.f32 %v5291, 0.2
    %v5611 = vmul.f32 %v5395, 0.2
    %v5612 = vmul.f32 %v5499, 0.2
    %v5613 = vmul.f32 %v5603, 0.2
    %v5614 = vsel %vm5606, %v5291, %v5610
    %v5615 = vsel %vm5607, %v5395, %v5611
    %v5616 = vsel %vm5608, %v5499, %v5612
    %v5617 = vsel %vm5609, %v5603, %v5613
    %v5618 = vpack.c.bf16 %v5614, %v5614
    %v5619 = vpack.c.bf16 %v5615, %v5615
    %v5620 = vpack.c.bf16 %v5616, %v5616
    %v5621 = vpack.c.bf16 %v5617, %v5617
    %v5622 = vld [vmem:[#allocation11] sm:$0xff]
    %v5623 = vld [vmem:[#allocation11 + $0x8] sm:$0xff]
    %v5624 = vld [vmem:[#allocation11 + $0x10] sm:$0xff]
    %v5625 = vld [vmem:[#allocation11 + $0x18] sm:$0xff]
    %v5626 = vld [vmem:[#allocation11 + $0x20] sm:$0xff]
    %v5627 = vld [vmem:[#allocation11 + $0x28] sm:$0xff]
    %v5628 = vld [vmem:[#allocation11 + $0x30] sm:$0xff]
    %v5629 = vld [vmem:[#allocation11 + $0x38] sm:$0xff]
    %v5630 = vld [vmem:[#allocation11 + $0x40] sm:$0xff]
    %v5631 = vld [vmem:[#allocation11 + $0x48] sm:$0xff]
    %v5632 = vld [vmem:[#allocation11 + $0x50] sm:$0xff]
    %v5633 = vld [vmem:[#allocation11 + $0x58] sm:$0xff]
    %v5634 = vld [vmem:[#allocation11 + $0x60] sm:$0xff]
    %v5635 = vld [vmem:[#allocation11 + $0x68] sm:$0xff]
    %v5636 = vld [vmem:[#allocation11 + $0x70] sm:$0xff]
    %v5637 = vld [vmem:[#allocation11 + $0x78] sm:$0xff]
    %v5638 = vld [vmem:[#allocation11 + $0x80] sm:$0xff]
    %v5639 = vld [vmem:[#allocation11 + $0x88] sm:$0xff]
    %v5640 = vld [vmem:[#allocation11 + $0x90] sm:$0xff]
    %v5641 = vld [vmem:[#allocation11 + $0x98] sm:$0xff]
    %v5642 = vld [vmem:[#allocation11 + $0xa0] sm:$0xff]
    %v5643 = vld [vmem:[#allocation11 + $0xa8] sm:$0xff]
    %v5644 = vld [vmem:[#allocation11 + $0xb0] sm:$0xff]
    %v5645 = vld [vmem:[#allocation11 + $0xb8] sm:$0xff]
    %v5646 = vld [vmem:[#allocation11 + $0xc0] sm:$0xff]
    %v5647 = vld [vmem:[#allocation11 + $0xc8] sm:$0xff]
    %v5648 = vld [vmem:[#allocation11 + $0xd0] sm:$0xff]
    %v5649 = vld [vmem:[#allocation11 + $0xd8] sm:$0xff]
    %v5650 = vld [vmem:[#allocation11 + $0xe0] sm:$0xff]
    %v5651 = vld [vmem:[#allocation11 + $0xe8] sm:$0xff]
    %v5652 = vld [vmem:[#allocation11 + $0xf0] sm:$0xff]
    %v5653 = vld [vmem:[#allocation11 + $0xf8] sm:$0xff]
    %v5654 = vld [vmem:[#allocation11 + $0x100] sm:$0xff]
    %v5655 = vld [vmem:[#allocation11 + $0x108] sm:$0xff]
    %v5656 = vld [vmem:[#allocation11 + $0x110] sm:$0xff]
    %v5657 = vld [vmem:[#allocation11 + $0x118] sm:$0xff]
    %v5658 = vld [vmem:[#allocation11 + $0x120] sm:$0xff]
    %v5659 = vld [vmem:[#allocation11 + $0x128] sm:$0xff]
    %v5660 = vld [vmem:[#allocation11 + $0x130] sm:$0xff]
    %v5661 = vld [vmem:[#allocation11 + $0x138] sm:$0xff]
    %v5662 = vld [vmem:[#allocation11 + $0x140] sm:$0xff]
    %v5663 = vld [vmem:[#allocation11 + $0x148] sm:$0xff]
    %v5664 = vld [vmem:[#allocation11 + $0x150] sm:$0xff]
    %v5665 = vld [vmem:[#allocation11 + $0x158] sm:$0xff]
    %v5666 = vld [vmem:[#allocation11 + $0x160] sm:$0xff]
    %v5667 = vld [vmem:[#allocation11 + $0x168] sm:$0xff]
    %v5668 = vld [vmem:[#allocation11 + $0x170] sm:$0xff]
    %v5669 = vld [vmem:[#allocation11 + $0x178] sm:$0xff]
    %v5670 = vld [vmem:[#allocation11 + $0x180] sm:$0xff]
    %v5671 = vld [vmem:[#allocation11 + $0x188] sm:$0xff]
    %v5672 = vld [vmem:[#allocation11 + $0x190] sm:$0xff]
    %v5673 = vld [vmem:[#allocation11 + $0x198] sm:$0xff]
    %v5674 = vld [vmem:[#allocation11 + $0x1a0] sm:$0xff]
    %v5675 = vld [vmem:[#allocation11 + $0x1a8] sm:$0xff]
    %v5676 = vld [vmem:[#allocation11 + $0x1b0] sm:$0xff]
    %v5677 = vld [vmem:[#allocation11 + $0x1b8] sm:$0xff]
    %v5678 = vld [vmem:[#allocation11 + $0x1c0] sm:$0xff]
    %v5679 = vld [vmem:[#allocation11 + $0x1c8] sm:$0xff]
    %v5680 = vld [vmem:[#allocation11 + $0x1d0] sm:$0xff]
    %v5681 = vld [vmem:[#allocation11 + $0x1d8] sm:$0xff]
    %v5682 = vld [vmem:[#allocation11 + $0x1e0] sm:$0xff]
    %v5683 = vld [vmem:[#allocation11 + $0x1e8] sm:$0xff]
    %v5684 = vld [vmem:[#allocation11 + $0x1f0] sm:$0xff]
    %v5685 = vld [vmem:[#allocation11 + $0x1f8] sm:$0xff]
    %v5686 = vld [vmem:[#allocation13] sm:$0x3]
    %v5688 = vperm.slane %v5686, 0
    %v5689 = vperm.slane %v5686, 1
    %v5756 = vunpack.c.l.b16 %v5622
    %v5757 = vunpack.c.h.b16 %v5622
    %v5758 = vunpack.c.l.b16 %v5623
    %v5759 = vunpack.c.h.b16 %v5623
    %v5760 = vunpack.c.l.b16 %v5624
    %v5761 = vunpack.c.h.b16 %v5624
    %v5762 = vunpack.c.l.b16 %v5625
    %v5763 = vunpack.c.h.b16 %v5625
    %v5764 = vunpack.c.l.b16 %v5626
    %v5765 = vunpack.c.h.b16 %v5626
    %v5766 = vunpack.c.l.b16 %v5627
    %v5767 = vunpack.c.h.b16 %v5627
    %v5768 = vunpack.c.l.b16 %v5628
    %v5769 = vunpack.c.h.b16 %v5628
    %v5770 = vunpack.c.l.b16 %v5629
    %v5771 = vunpack.c.h.b16 %v5629
    %v5772 = vunpack.c.l.b16 %v5630
    %v5773 = vunpack.c.h.b16 %v5630
    %v5774 = vunpack.c.l.b16 %v5631
    %v5775 = vunpack.c.h.b16 %v5631
    %v5776 = vunpack.c.l.b16 %v5632
    %v5777 = vunpack.c.h.b16 %v5632
    %v5778 = vunpack.c.l.b16 %v5633
    %v5779 = vunpack.c.h.b16 %v5633
    %v5780 = vunpack.c.l.b16 %v5634
    %v5781 = vunpack.c.h.b16 %v5634
    %v5782 = vunpack.c.l.b16 %v5635
    %v5783 = vunpack.c.h.b16 %v5635
    %v5784 = vunpack.c.l.b16 %v5636
    %v5785 = vunpack.c.h.b16 %v5636
    %v5786 = vunpack.c.l.b16 %v5637
    %v5787 = vunpack.c.h.b16 %v5637
    %v5788 = vunpack.c.l.b16 %v5638
    %v5789 = vunpack.c.h.b16 %v5638
    %v5790 = vunpack.c.l.b16 %v5639
    %v5791 = vunpack.c.h.b16 %v5639
    %v5792 = vunpack.c.l.b16 %v5640
    %v5793 = vunpack.c.h.b16 %v5640
    %v5794 = vunpack.c.l.b16 %v5641
    %v5795 = vunpack.c.h.b16 %v5641
    %v5796 = vunpack.c.l.b16 %v5642
    %v5797 = vunpack.c.h.b16 %v5642
    %v5798 = vunpack.c.l.b16 %v5643
    %v5799 = vunpack.c.h.b16 %v5643
    %v5800 = vunpack.c.l.b16 %v5644
    %v5801 = vunpack.c.h.b16 %v5644
    %v5802 = vunpack.c.l.b16 %v5645
    %v5803 = vunpack.c.h.b16 %v5645
    %v5804 = vunpack.c.l.b16 %v5646
    %v5805 = vunpack.c.h.b16 %v5646
    %v5806 = vunpack.c.l.b16 %v5647
    %v5807 = vunpack.c.h.b16 %v5647
    %v5808 = vunpack.c.l.b16 %v5648
    %v5809 = vunpack.c.h.b16 %v5648
    %v5810 = vunpack.c.l.b16 %v5649
    %v5811 = vunpack.c.h.b16 %v5649
    %v5812 = vunpack.c.l.b16 %v5650
    %v5813 = vunpack.c.h.b16 %v5650
    %v5814 = vunpack.c.l.b16 %v5651
    %v5815 = vunpack.c.h.b16 %v5651
    %v5816 = vunpack.c.l.b16 %v5652
    %v5817 = vunpack.c.h.b16 %v5652
    %v5818 = vunpack.c.l.b16 %v5653
    %v5819 = vunpack.c.h.b16 %v5653
    %v5820 = vunpack.c.l.b16 %v5654
    %v5821 = vunpack.c.h.b16 %v5654
    %v5822 = vunpack.c.l.b16 %v5655
    %v5823 = vunpack.c.h.b16 %v5655
    %v5824 = vunpack.c.l.b16 %v5656
    %v5825 = vunpack.c.h.b16 %v5656
    %v5826 = vunpack.c.l.b16 %v5657
    %v5827 = vunpack.c.h.b16 %v5657
    %v5828 = vunpack.c.l.b16 %v5658
    %v5829 = vunpack.c.h.b16 %v5658
    %v5830 = vunpack.c.l.b16 %v5659
    %v5831 = vunpack.c.h.b16 %v5659
    %v5832 = vunpack.c.l.b16 %v5660
    %v5833 = vunpack.c.h.b16 %v5660
    %v5834 = vunpack.c.l.b16 %v5661
    %v5835 = vunpack.c.h.b16 %v5661
    %v5836 = vunpack.c.l.b16 %v5662
    %v5837 = vunpack.c.h.b16 %v5662
    %v5838 = vunpack.c.l.b16 %v5663
    %v5839 = vunpack.c.h.b16 %v5663
    %v5840 = vunpack.c.l.b16 %v5664
    %v5841 = vunpack.c.h.b16 %v5664
    %v5842 = vunpack.c.l.b16 %v5665
    %v5843 = vunpack.c.h.b16 %v5665
    %v5844 = vunpack.c.l.b16 %v5666
    %v5845 = vunpack.c.h.b16 %v5666
    %v5846 = vunpack.c.l.b16 %v5667
    %v5847 = vunpack.c.h.b16 %v5667
    %v5848 = vunpack.c.l.b16 %v5668
    %v5849 = vunpack.c.h.b16 %v5668
    %v5850 = vunpack.c.l.b16 %v5669
    %v5851 = vunpack.c.h.b16 %v5669
    %v5852 = vunpack.c.l.b16 %v5670
    %v5853 = vunpack.c.h.b16 %v5670
    %v5854 = vunpack.c.l.b16 %v5671
    %v5855 = vunpack.c.h.b16 %v5671
    %v5856 = vunpack.c.l.b16 %v5672
    %v5857 = vunpack.c.h.b16 %v5672
    %v5858 = vunpack.c.l.b16 %v5673
    %v5859 = vunpack.c.h.b16 %v5673
    %v5860 = vunpack.c.l.b16 %v5674
    %v5861 = vunpack.c.h.b16 %v5674
    %v5862 = vunpack.c.l.b16 %v5675
    %v5863 = vunpack.c.h.b16 %v5675
    %v5864 = vunpack.c.l.b16 %v5676
    %v5865 = vunpack.c.h.b16 %v5676
    %v5866 = vunpack.c.l.b16 %v5677
    %v5867 = vunpack.c.h.b16 %v5677
    %v5868 = vunpack.c.l.b16 %v5678
    %v5869 = vunpack.c.h.b16 %v5678
    %v5870 = vunpack.c.l.b16 %v5679
    %v5871 = vunpack.c.h.b16 %v5679
    %v5872 = vunpack.c.l.b16 %v5680
    %v5873 = vunpack.c.h.b16 %v5680
    %v5874 = vunpack.c.l.b16 %v5681
    %v5875 = vunpack.c.h.b16 %v5681
    %v5876 = vunpack.c.l.b16 %v5682
    %v5877 = vunpack.c.h.b16 %v5682
    %v5878 = vunpack.c.l.b16 %v5683
    %v5879 = vunpack.c.h.b16 %v5683
    %v5880 = vunpack.c.l.b16 %v5684
    %v5881 = vunpack.c.h.b16 %v5684
    %v5882 = vunpack.c.l.b16 %v5685
    %v5883 = vunpack.c.h.b16 %v5685
    %v5884 = vpack.c.b16 %v5758, %v5756
    %v5885 = vpack.c.b16 %v5759, %v5757
    %v5886 = vpack.c.b16 %v5762, %v5760
    %v5887 = vpack.c.b16 %v5763, %v5761
    %v5888 = vpack.c.b16 %v5766, %v5764
    %v5889 = vpack.c.b16 %v5767, %v5765
    %v5890 = vpack.c.b16 %v5770, %v5768
    %v5891 = vpack.c.b16 %v5771, %v5769
    %v5892 = vpack.c.b16 %v5774, %v5772
    %v5893 = vpack.c.b16 %v5775, %v5773
    %v5894 = vpack.c.b16 %v5778, %v5776
    %v5895 = vpack.c.b16 %v5779, %v5777
    %v5896 = vpack.c.b16 %v5782, %v5780
    %v5897 = vpack.c.b16 %v5783, %v5781
    %v5898 = vpack.c.b16 %v5786, %v5784
    %v5899 = vpack.c.b16 %v5787, %v5785
    %v5900 = vpack.c.b16 %v5790, %v5788
    %v5901 = vpack.c.b16 %v5791, %v5789
    %v5902 = vpack.c.b16 %v5794, %v5792
    %v5903 = vpack.c.b16 %v5795, %v5793
    %v5904 = vpack.c.b16 %v5798, %v5796
    %v5905 = vpack.c.b16 %v5799, %v5797
    %v5906 = vpack.c.b16 %v5802, %v5800
    %v5907 = vpack.c.b16 %v5803, %v5801
    %v5908 = vpack.c.b16 %v5806, %v5804
    %v5909 = vpack.c.b16 %v5807, %v5805
    %v5910 = vpack.c.b16 %v5810, %v5808
    %v5911 = vpack.c.b16 %v5811, %v5809
    %v5912 = vpack.c.b16 %v5814, %v5812
    %v5913 = vpack.c.b16 %v5815, %v5813
    %v5914 = vpack.c.b16 %v5818, %v5816
    %v5915 = vpack.c.b16 %v5819, %v5817
    %v5916 = vpack.c.b16 %v5822, %v5820
    %v5917 = vpack.c.b16 %v5823, %v5821
    %v5918 = vpack.c.b16 %v5826, %v5824
    %v5919 = vpack.c.b16 %v5827, %v5825
    %v5920 = vpack.c.b16 %v5830, %v5828
    %v5921 = vpack.c.b16 %v5831, %v5829
    %v5922 = vpack.c.b16 %v5834, %v5832
    %v5923 = vpack.c.b16 %v5835, %v5833
    %v5924 = vpack.c.b16 %v5838, %v5836
    %v5925 = vpack.c.b16 %v5839, %v5837
    %v5926 = vpack.c.b16 %v5842, %v5840
    %v5927 = vpack.c.b16 %v5843, %v5841
    %v5928 = vpack.c.b16 %v5846, %v5844
    %v5929 = vpack.c.b16 %v5847, %v5845
    %v5930 = vpack.c.b16 %v5850, %v5848
    %v5931 = vpack.c.b16 %v5851, %v5849
    %v5932 = vpack.c.b16 %v5854, %v5852
    %v5933 = vpack.c.b16 %v5855, %v5853
    %v5934 = vpack.c.b16 %v5858, %v5856
    %v5935 = vpack.c.b16 %v5859, %v5857
    %v5936 = vpack.c.b16 %v5862, %v5860
    %v5937 = vpack.c.b16 %v5863, %v5861
    %v5938 = vpack.c.b16 %v5866, %v5864
    %v5939 = vpack.c.b16 %v5867, %v5865
    %v5940 = vpack.c.b16 %v5870, %v5868
    %v5941 = vpack.c.b16 %v5871, %v5869
    %v5942 = vpack.c.b16 %v5874, %v5872
    %v5943 = vpack.c.b16 %v5875, %v5873
    %v5944 = vpack.c.b16 %v5878, %v5876
    %v5945 = vpack.c.b16 %v5879, %v5877
    %v5946 = vpack.c.b16 %v5882, %v5880
    %v5947 = vpack.c.b16 %v5883, %v5881
    %6012 = vmatpush.bf16.msra.mxu0 %v5898
    %6013 = vmatpush.bf16.msra.mxu0 %v5896
    %6014 = vmatpush.bf16.msra.mxu0 %v5894
    %6015 = vmatpush.bf16.msra.mxu0 %v5892
    %6016 = vmatpush.bf16.msra.mxu0 %v5890
    %6017 = vmatpush.bf16.msra.mxu0 %v5888
    %6018 = vmatpush.bf16.msra.mxu0 %v5886
    %6019 = vmatpush.bf16.msra.mxu0 %v5884
    %6020 = vmatmul.bf16.gmra.mxu0 %v5618
    %v6021 = vpop.f32.mrf.mxu0
    %v6022 = vadd.f32 %v5688, %v6021
    %v6023 = vpop.f32.mrf.mxu0
    %6024 = vdwg.mxu0
    %6025 = vmatpush.bf16.msra.mxu0 %v5914
    %6026 = vmatpush.bf16.msra.mxu0 %v5912
    %6027 = vmatpush.bf16.msra.mxu0 %v5910
    %6028 = vmatpush.bf16.msra.mxu0 %v5908
    %6029 = vmatpush.bf16.msra.mxu0 %v5906
    %6030 = vmatpush.bf16.msra.mxu0 %v5904
    %6031 = vmatpush.bf16.msra.mxu0 %v5902
    %6032 = vmatpush.bf16.msra.mxu0 %v5900
    %6033 = vmatmul.bf16.gmra.mxu0 %v5619
    %v6034 = vpop.f32.mrf.mxu0
    %v6035 = vadd.f32 %v6022, %v6034
    %v6036 = vpop.f32.mrf.mxu0
    %6037 = vdwg.mxu0
    %6038 = vmatpush.bf16.msra.mxu0 %v5930
    %6039 = vmatpush.bf16.msra.mxu0 %v5928
    %6040 = vmatpush.bf16.msra.mxu0 %v5926
    %6041 = vmatpush.bf16.msra.mxu0 %v5924
    %6042 = vmatpush.bf16.msra.mxu0 %v5922
    %6043 = vmatpush.bf16.msra.mxu0 %v5920
    %6044 = vmatpush.bf16.msra.mxu0 %v5918
    %6045 = vmatpush.bf16.msra.mxu0 %v5916
    %6046 = vmatmul.bf16.gmra.mxu0 %v5620
    %v6047 = vpop.f32.mrf.mxu0
    %v6048 = vadd.f32 %v6035, %v6047
    %v6049 = vpop.f32.mrf.mxu0
    %6050 = vdwg.mxu0
    %6051 = vmatpush.bf16.msra.mxu0 %v5946
    %6052 = vmatpush.bf16.msra.mxu0 %v5944
    %6053 = vmatpush.bf16.msra.mxu0 %v5942
    %6054 = vmatpush.bf16.msra.mxu0 %v5940
    %6055 = vmatpush.bf16.msra.mxu0 %v5938
    %6056 = vmatpush.bf16.msra.mxu0 %v5936
    %6057 = vmatpush.bf16.msra.mxu0 %v5934
    %6058 = vmatpush.bf16.msra.mxu0 %v5932
    %6059 = vmatmul.bf16.gmra.mxu0 %v5621
    %v6060 = vpop.f32.mrf.mxu0
    %v6061 = vadd.f32 %v6048, %v6060
    %v6062 = vpop.f32.mrf.mxu0
    %6063 = vdwg.mxu0
    %6064 = vmatpush.bf16.msra.mxu0 %v5899
    %6065 = vmatpush.bf16.msra.mxu0 %v5897
    %6066 = vmatpush.bf16.msra.mxu0 %v5895
    %6067 = vmatpush.bf16.msra.mxu0 %v5893
    %6068 = vmatpush.bf16.msra.mxu0 %v5891
    %6069 = vmatpush.bf16.msra.mxu0 %v5889
    %6070 = vmatpush.bf16.msra.mxu0 %v5887
    %6071 = vmatpush.bf16.msra.mxu0 %v5885
    %6072 = vmatmul.bf16.gmra.mxu0 %v5618
    %v6073 = vpop.f32.mrf.mxu0
    %v6074 = vadd.f32 %v5689, %v6073
    %v6075 = vpop.f32.mrf.mxu0
    %6076 = vdwg.mxu0
    %6077 = vmatpush.bf16.msra.mxu0 %v5915
    %6078 = vmatpush.bf16.msra.mxu0 %v5913
    %6079 = vmatpush.bf16.msra.mxu0 %v5911
    %6080 = vmatpush.bf16.msra.mxu0 %v5909
    %6081 = vmatpush.bf16.msra.mxu0 %v5907
    %6082 = vmatpush.bf16.msra.mxu0 %v5905
    %6083 = vmatpush.bf16.msra.mxu0 %v5903
    %6084 = vmatpush.bf16.msra.mxu0 %v5901
    %6085 = vmatmul.bf16.gmra.mxu0 %v5619
    %v6086 = vpop.f32.mrf.mxu0
    %v6087 = vadd.f32 %v6074, %v6086
    %v6088 = vpop.f32.mrf.mxu0
    %6089 = vdwg.mxu0
    %6090 = vmatpush.bf16.msra.mxu0 %v5931
    %6091 = vmatpush.bf16.msra.mxu0 %v5929
    %6092 = vmatpush.bf16.msra.mxu0 %v5927
    %6093 = vmatpush.bf16.msra.mxu0 %v5925
    %6094 = vmatpush.bf16.msra.mxu0 %v5923
    %6095 = vmatpush.bf16.msra.mxu0 %v5921
    %6096 = vmatpush.bf16.msra.mxu0 %v5919
    %6097 = vmatpush.bf16.msra.mxu0 %v5917
    %6098 = vmatmul.bf16.gmra.mxu0 %v5620
    %v6099 = vpop.f32.mrf.mxu0
    %v6100 = vadd.f32 %v6087, %v6099
    %v6101 = vpop.f32.mrf.mxu0
    %6102 = vdwg.mxu0
    %6103 = vmatpush.bf16.msra.mxu0 %v5947
    %6104 = vmatpush.bf16.msra.mxu0 %v5945
    %6105 = vmatpush.bf16.msra.mxu0 %v5943
    %6106 = vmatpush.bf16.msra.mxu0 %v5941
    %6107 = vmatpush.bf16.msra.mxu0 %v5939
    %6108 = vmatpush.bf16.msra.mxu0 %v5937
    %6109 = vmatpush.bf16.msra.mxu0 %v5935
    %6110 = vmatpush.bf16.msra.mxu0 %v5933
    %6111 = vmatmul.bf16.gmra.mxu0 %v5621
    %v6112 = vpop.f32.mrf.mxu0
    %v6113 = vadd.f32 %v6100, %v6112
    %v6114 = vpop.f32.mrf.mxu0
    %6115 = vdwg.mxu0
    %vm6116 = vcmp.gt.f32.partialorder %v6061, 0.0
    %vm6117 = vcmp.gt.f32.partialorder %v6113, 0.0
    %v6118 = vmul.f32 %v6061, 0.2
    %v6119 = vmul.f32 %v6113, 0.2
    %v6120 = vsel %vm6116, %v6061, %v6118
    %v6121 = vsel %vm6117, %v6113, %v6119
    %v6122 = vld [vmem:[#allocation14] sm:$0x3]
    %v6124 = vperm.slane %v6122, 0
    %v6125 = vperm.slane %v6122, 1
    %v6128 = vmul.f32 %v6120, %v6124
    %v6129 = vmul.f32 %v6121, %v6125
    %v6130 = vadd.f32 %v6128, %v6129
    %6131 = vadd.xlane.f32.xlu0 %v6130
    %v6132 = vpop.xlane.xlu0 %6131
    %v6133 = vld [vmem:[#allocation2] sm:$0x1]
    %v6135 = vperm.slane %v6133, 0
    %v6137 = vadd.f32 %v6132, %v6135
    %v6138 = vxor.u32 %v6137, 2147483648
    %v6139 = vmul.f32 %v6138, 1.442695
    %v6140 = vpow.pop %v6139
    %v6141 = vadd.f32 %v6140, 1.0
    %v6142 = vrcp.pop %v6141
    %v6143 = vmul.f32 %v6141, %v6142
    %v6144 = vsub.f32 1.0, %v6143
    %v6145 = vmul.f32 %v6142, %v6144
    %v6146 = vadd.f32 %v6142, %v6145
    %vm6147 = vweird.f32 %v6141
    %vm6148 = vweird.f32 %v6142
    %vm6149 = vmor %vm6147, %vm6148
    %v6150 = vsel %vm6149, %v6142, %v6146
    %v6151 = vand.u32 2147483647, %v6141
    %vm6152 = vcmp.eq.f32.partialorder %v6151, 8.507059e+37
    %v6153 = vand.u32 %v6141, 2147483648
    %v6154 = vor.u32 1.1754944e-38, %v6153
    %v6155 = vsel %vm6152, %v6154, %v6150
    %v6156 = vmul.f32 1.0, %v6155
    %vm6157 = vcmask 7168
    %6158 = vst.msk [vmem:[%s9] sm:$0xff] %vm6157, %v6156
    // Predicated region
    $region70: #{tpu_custom_call.1} parent=1 // pred_check
      _
    $region71: #{tpu_custom_call.1} parent=1 // pred_check_branch
      %6160 = sbr.rel (0) target = $region73
    $region72: #{tpu_custom_call.1} parent=1 // pred_region
      _
    $region73: #{tpu_custom_call.1} parent=1 // pred_fallthru
      _
    // Predicated region
    $region74: #{tpu_custom_call.1} parent=1 // pred_check
      _
    $region75: #{tpu_custom_call.1} parent=1 // pred_check_branch
      %6162 = sbr.rel (0) target = $region77
    $region76: #{tpu_custom_call.1} parent=1 // pred_region
      _
    $region77: #{tpu_custom_call.1} parent=1 // pred_fallthru
      _
    %6163 = vsyncpa [#allocation4], 1
    %6164 = vsyncpa [#allocation6], 1
    %6165 = vsyncpa [#allocation9], 1
    %6166 = vsyncpa [#allocation12], 1
    %6167 = vsyncpa [#allocation15], 1

</llo_original>
